<compile_context>
chip_gen: v6e
topology: v6e:2x2x1
jax: 0.10.0
libtpu: 0.0.40
codegen_flags: <defaults>
</compile_context>

<pallas_src>
import functools

import jax
import jax.numpy as jnp
from jax import lax
from jax.experimental import pallas as pl
from jax.experimental.pallas import tpu as pltpu

EPS = 1e-5


# --------------------------------------------------------------------------
# Small helpers.
# --------------------------------------------------------------------------
def _vmem_limit_bytes():
    """Per-generation scoped-VMEM budget (review: raise on v6e, cap on v5e/v7x)."""
    try:
        kind = jax.devices()[0].device_kind.lower()
    except Exception:
        return 32 * 1024 * 1024
    if "v2" in kind or "v3" in kind:
        return 16 * 1024 * 1024
    if "v6" in kind:                       # v6e: 128 MiB physical
        return 96 * 1024 * 1024
    if "v5 lite" in kind or "v5e" in kind:
        return 32 * 1024 * 1024
    return 48 * 1024 * 1024                # v7x (64 MiB physical) / others: conservative


def _pick_th(hout, wout, cmax, row_cap=None):
    """Rows per tile: divides Hout; th*Wout is a multiple of 128 (lane-dense store)
    unless a single block covers the whole image; bounded by a ~2 MiB budget."""
    budget = max(1, (2 * 1024 * 1024) // (4 * wout * max(cmax, 1)))
    if row_cap:
        budget = min(budget, row_cap)
    valid = [t for t in range(1, hout + 1)
             if hout % t == 0 and ((t * wout) % 128 == 0 or t == hout)]
    fitting = [t for t in valid if t <= budget]
    return max(fitting) if fitting else min(valid)


def _pick_tl(length, nch):
    budget = max(128, (8 * 1024 * 1024) // (12 * max(nch, 1)))
    valid = [t for t in range(1, length + 1)
             if length % t == 0 and (t % 128 == 0 or t == length)]
    fitting = [t for t in valid if t <= budget]
    return max(fitting) if fitting else min(valid)


# --------------------------------------------------------------------------
# K1 / K2: (optional bn+relu of input) -> 3x3 conv (stride in-kernel)
#          [+ fused 1x1 projection shortcut] + per-batch channel stats.
# Planar (N, C, H*W) in / out; lane-dense stores; stats written once per image.
# --------------------------------------------------------------------------
def _conv3x3_kernel(*refs, stride, th, H, W, prenorm, shortcut):
    it = iter(refs)
    x_ref = next(it)                              # (1, Cin, H*W)   resident per n
    scale_ref = next(it) if prenorm else None     # (1, Cin)
    shift_ref = next(it) if prenorm else None     # (1, Cin)
    w_ref = next(it)                              # (9*Cin, Cout)   packed HWIO
    wsc_ref = next(it) if shortcut else None      # (Cin, Cout)     1x1 projection
    o_ref = next(it)                              # (1, Cout, th*Wout)
    osc_ref = next(it) if shortcut else None      # (1, Cout, th*Wout)
    stats_ref = next(it)                          # (1, 2 or 4, Cout) resident per n
    pad_ref = next(it)                            # (H+2, W+2, Cin) scratch

    i = pl.program_id(1)
    Cin = x_ref.shape[1]
    Wout = (W - 1) // stride + 1
    Hp, Wp = H + 2, W + 2

    # ---- build the padded (and, for conv2, bn1+relu'd) image once per image ----
    @pl.when(i == 0)
    def _():
        xv = jnp.transpose(x_ref[0].astype(jnp.float32))        # (H*W, Cin)
        if prenorm:          # fold bn1 + relu into conv2's input path
            xv = jnp.maximum(xv * scale_ref[...] + shift_ref[...], 0.0)
        pad_ref[1:H + 1, 1:W + 1, :] = xv.reshape(H, W, Cin)
        # zero only the 1-pixel halo border
        zrow = jnp.zeros((1, Wp, Cin), jnp.float32)
        zcol = jnp.zeros((Hp, 1, Cin), jnp.float32)
        pad_ref[0:1, :, :] = zrow
        pad_ref[H + 1:H + 2, :, :] = zrow
        pad_ref[:, 0:1, :] = zcol
        pad_ref[:, W + 1:W + 2, :] = zcol

    # ---- row tile: one MXU matmul with K = 9*Cin on an im2col patch ----
    rows_in = (th - 1) * stride + 3
    r0 = pl.multiple_of(i * th * stride, th * stride)
    tile_in = pad_ref[pl.ds(r0, rows_in), :, :]                  # (rows_in, Wp, Cin)

    taps = []
    for kh in range(3):
        for kw in range(3):
            taps.append(lax.slice(
                tile_in, (kh, kw, 0),
                (kh + (th - 1) * stride + 1, kw + (Wout - 1) * stride + 1, Cin),
                (stride, stride, 1)))                            # (th, Wout, Cin)
    patch = jnp.concatenate(taps, axis=-1).reshape(th * Wout, 9 * Cin)
    y = jnp.dot(patch.astype(w_ref.dtype), w_ref[...],
                preferred_element_type=jnp.float32)              # (th*Wout, Cout) f32
    # Planar lane-dense store: minor dim = th*Wout (multiple of 128 / full image).
    o_ref[0] = jnp.transpose(y).astype(o_ref.dtype)

    s_lo = jnp.sum(y, axis=0, keepdims=True)
    s_hi = jnp.sum(y * y, axis=0, keepdims=True)
    if shortcut:
        ctr = taps[4].reshape(th * Wout, Cin)     # centre tap == x[r*stride, c*stride]
        ysc = jnp.dot(ctr.astype(wsc_ref.dtype), wsc_ref[...],
                      preferred_element_type=jnp.float32)
        osc_ref[0] = jnp.transpose(ysc).astype(osc_ref.dtype)
        new = jnp.concatenate(
            [s_lo, s_hi,
             jnp.sum(ysc, axis=0, keepdims=True),
             jnp.sum(ysc * ysc, axis=0, keepdims=True)], axis=0)  # (4, Cout)
    else:
        new = jnp.concatenate([s_lo, s_hi], axis=0)               # (2, Cout)

    @pl.when(i == 0)
    def _():
        stats_ref[0] = new

    @pl.when(i != 0)
    def _():
        stats_ref[0] = stats_ref[0] + new


def conv3x3_block(x_pl, w_pk, *, H, W, stride, scale=None, shift=None, wsc=None,
                  act_dtype=jnp.float32, row_cap=None):
    """3x3 'same' conv (stride handled in-kernel), optionally preceded by a fused
    BN+ReLU of the input, optionally fused with the 1x1 projection shortcut."""
    N, Cin, HW = x_pl.shape
    assert HW == H * W
    KC, Cout = w_pk.shape
    assert KC == 9 * Cin
    prenorm = scale is not None
    shortcut = wsc is not None
    assert not (prenorm and shortcut)
    Hout = (H - 1) // stride + 1
    Wout = (W - 1) // stride + 1
    HWout = Hout * Wout
    th = _pick_th(Hout, Wout, max(Cin, Cout), row_cap)
    n_h = Hout // th
    TOUT = th * Wout
    nst = 4 if shortcut else 2

    kernel = functools.partial(_conv3x3_kernel, stride=stride, th=th, H=H, W=W,
                               prenorm=prenorm, shortcut=shortcut)

    in_specs = [pl.BlockSpec((1, Cin, HW), lambda n, i: (n, 0, 0))]
    args = [x_pl]
    if prenorm:
        in_specs += [pl.BlockSpec((1, Cin), lambda n, i: (0, 0)),
                     pl.BlockSpec((1, Cin), lambda n, i: (0, 0))]
        args += [scale.reshape(1, Cin).astype(jnp.float32),
                 shift.reshape(1, Cin).astype(jnp.float32)]
    in_specs.append(pl.BlockSpec((KC, Cout), lambda n, i: (0, 0)))
    args.append(w_pk)
    if shortcut:
        in_specs.append(pl.BlockSpec((Cin, Cout), lambda n, i: (0, 0)))
        args.append(wsc)

    out_shape = [jax.ShapeDtypeStruct((N, Cout, HWout), act_dtype)]
    out_specs = [pl.BlockSpec((1, Cout, TOUT), lambda n, i: (n, 0, i))]
    if shortcut:
        out_shape.append(jax.ShapeDtypeStruct((N, Cout, HWout), act_dtype))
        out_specs.append(pl.BlockSpec((1, Cout, TOUT), lambda n, i: (n, 0, i)))
    out_shape.append(jax.ShapeDtypeStruct((N, nst, Cout), jnp.float32))
    out_specs.append(pl.BlockSpec((1, nst, Cout), lambda n, i: (n, 0, 0)))

    flops = 2 * N * HWout * KC * Cout + (2 * N * HWout * Cin * Cout if shortcut else 0)
    bytes_acc = (4 * N * Cin * HW + 2 * KC * Cout
                 + 2 * N * HWout * Cout * (2 if shortcut else 1) + 4 * N * nst * Cout)

    outs = pl.pallas_call(
        kernel,
        out_shape=tuple(out_shape),
        grid=(N, n_h),
        in_specs=in_specs,
        out_specs=tuple(out_specs),
        scratch_shapes=[pltpu.VMEM((H + 2, W + 2, Cin), jnp.float32)],
        compiler_params=pltpu.CompilerParams(
            dimension_semantics=("parallel", "arbitrary"),
            vmem_limit_bytes=_vmem_limit_bytes()),
        cost_estimate=pl.CostEstimate(flops=flops, transcendentals=0,
                                      bytes_accessed=bytes_acc),
    )(*args)

    if shortcut:
        return outs[0], outs[1], outs[2]
    return outs[0], None, outs[1]


# --------------------------------------------------------------------------
# K3: bn2(h2) + bn_sc(shortcut) + residual add + relu on planar slabs.
# --------------------------------------------------------------------------
def _bn_add_relu_kernel(h_ref, sc_ref, s2_ref, b2_ref, ssc_ref, bsc_ref, o_ref):
    y = (h_ref[0].astype(jnp.float32) * s2_ref[...] + b2_ref[...]
         + sc_ref[0].astype(jnp.float32) * ssc_ref[...] + bsc_ref[...])
    o_ref[0] = jnp.maximum(y, 0.0)


def bn_add_relu(h2, sc, scale2, shift2, scale_sc, shift_sc):
    N, C, L = h2.shape
    assert sc.shape == (N, C, L)
    tl = _pick_tl(L, C)
    vecs = [v.reshape(C, 1).astype(jnp.float32)
            for v in (scale2, shift2, scale_sc, shift_sc)]
    return pl.pallas_call(
        _bn_add_relu_kernel,
        out_shape=jax.ShapeDtypeStruct((N, C, L), jnp.float32),
        grid=(N, L // tl),
        in_specs=[pl.BlockSpec((1, C, tl), lambda n, j: (n, 0, j)),
                  pl.BlockSpec((1, C, tl), lambda n, j: (n, 0, j)),
                  pl.BlockSpec((C, 1), lambda n, j: (0, 0)),
                  pl.BlockSpec((C, 1), lambda n, j: (0, 0)),
                  pl.BlockSpec((C, 1), lambda n, j: (0, 0)),
                  pl.BlockSpec((C, 1), lambda n, j: (0, 0))],
        out_specs=pl.BlockSpec((1, C, tl), lambda n, j: (n, 0, j)),
        compiler_params=pltpu.CompilerParams(
            dimension_semantics=("parallel", "parallel"),
            vmem_limit_bytes=_vmem_limit_bytes()),
        cost_estimate=pl.CostEstimate(flops=6 * N * C * L, transcendentals=0,
                                      bytes_accessed=4 * 3 * N * C * L),
    )(h2, sc, *vecs)


# --------------------------------------------------------------------------
# Finalize BN affine (scale/shift) from the tiny per-image partial stats.
# --------------------------------------------------------------------------
def _bn_affine(stats, gamma, beta, count):
    s = jnp.sum(stats[:, 0, :], axis=0)
    ss = jnp.sum(stats[:, 1, :], axis=0)
    mean = s / count
    var = ss / count - mean * mean            # biased variance (train-mode BN)
    scale = gamma * lax.rsqrt(var + EPS)
    shift = beta - mean * scale
    return scale, shift


# --------------------------------------------------------------------------
# Params + full forward.
# --------------------------------------------------------------------------
def init_resnet_block_params(key, in_channels, out_channels, stride, kernel_size=3):
    assert kernel_size == 3, "ResNetBlock kernels implemented for kernelSize=3 (module default)"
    ks = jax.random.split(key, 9)
    p = {
        "conv1_w": 0.1 * jax.random.normal(ks[0], (3, 3, in_channels, out_channels), jnp.float32),
        "bn1_gamma": 1.0 + 0.1 * jax.random.normal(ks[1], (out_channels,), jnp.float32),
        "bn1_beta": 0.1 * jax.random.normal(ks[2], (out_channels,), jnp.float32),
        "conv2_w": 0.1 * jax.random.normal(ks[3], (3, 3, out_channels, out_channels), jnp.float32),
        "bn2_gamma": 1.0 + 0.1 * jax.random.normal(ks[4], (out_channels,), jnp.float32),
        "bn2_beta": 0.1 * jax.random.normal(ks[5], (out_channels,), jnp.float32),
    }
    if stride != 1 or in_channels != out_channels:
        p["sc_w"] = 0.1 * jax.random.normal(ks[6], (in_channels, out_channels), jnp.float32)
        p["sc_gamma"] = 1.0 + 0.1 * jax.random.normal(ks[7], (out_channels,), jnp.float32)
        p["sc_beta"] = 0.1 * jax.random.normal(ks[8], (out_channels,), jnp.float32)
    return p


def resnet_block_forward(params, x_nchw, *, stride, use_bf16=True, row_cap=None):
    """out = relu(bn2(conv2(relu(bn1(conv1(x))))) + shortcut(x)); NCHW in/out."""
    N, Cin, H, W = x_nchw.shape
    Cout = params["conv1_w"].shape[-1]
    act_dtype = jnp.bfloat16 if use_bf16 else jnp.float32
    mxu_dtype = jnp.bfloat16 if use_bf16 else jnp.float32

    # Planar (N, C, H*W): a free reshape of NCHW -- no layout transpose in XLA.
    xp = x_nchw.astype(jnp.float32).reshape(N, Cin, H * W)

    has_proj = "sc_w" in params
    w1 = params["conv1_w"].reshape(9 * Cin, Cout).astype(mxu_dtype)
    wsc = params["sc_w"].astype(mxu_dtype) if has_proj else None

    # --- K1: conv1 (+ fused 1x1 projection shortcut) + per-batch channel stats ---
    h1, sraw, st1 = conv3x3_block(xp, w1, H=H, W=W, stride=stride, wsc=wsc,
                                  act_dtype=act_dtype, row_cap=row_cap)
    Hout = (H - 1) // stride + 1
    Wout = (W - 1) // stride + 1
    cnt = float(N * Hout * Wout)
    sc1, sh1 = _bn_affine(st1[:, 0:2], params["bn1_gamma"], params["bn1_beta"], cnt)

    # --- K2: relu(bn1(.)) folded into conv2's input; conv2 + stats ---
    w2 = params["conv2_w"].reshape(9 * Cout, Cout).astype(mxu_dtype)
    h2, _, st2 = conv3x3_block(h1, w2, H=Hout, W=Wout, stride=1,
                               scale=sc1, shift=sh1,
                               act_dtype=act_dtype, row_cap=row_cap)
    sc2, sh2 = _bn_affine(st2, params["bn2_gamma"], params["bn2_beta"], cnt)

    # --- shortcut affine ---
    if has_proj:
        scsc, shsc = _bn_affine(st1[:, 2:4], params["sc_gamma"], params["sc_beta"], cnt)
    else:
        assert stride == 1 and Cin == Cout, "identity shortcut needs stride=1, Cin==Cout"
        sraw = xp
        scsc = jnp.ones((Cout,), jnp.float32)
        shsc = jnp.zeros((Cout,), jnp.float32)

    # --- K3: bn2 + shortcut-bn + residual add + relu, lane-dense planar ---
    out = bn_add_relu(h2, sraw, sc2, sh2, scsc, shsc)          # (N, Cout, Hout*Wout) f32
    return out.reshape(N, Cout, Hout, Wout)                    # free reshape to NCHW


# --------------------------------------------------------------------------
# Pure-JAX reference (matches the PyTorch module in train mode).
# --------------------------------------------------------------------------
def ref_forward(params, x_nchw, stride):
    x = x_nchw.astype(jnp.float32)

    def conv(a, w_hwio, s, pad):
        return lax.conv_general_dilated(
            a, w_hwio, window_strides=(s, s), padding=pad,
            dimension_numbers=("NCHW", "HWIO", "NCHW"))

    def bn(a, g, b):
        mean = jnp.mean(a, axis=(0, 2, 3), keepdims=True)
        var = jnp.mean(jnp.square(a - mean), axis=(0, 2, 3), keepdims=True)
        return (a - mean) * lax.rsqrt(var + EPS) * g.reshape(1, -1, 1, 1) + b.reshape(1, -1, 1, 1)

    h = jax.nn.relu(bn(conv(x, params["conv1_w"], stride, [(1, 1), (1, 1)]),
                       params["bn1_gamma"], params["bn1_beta"]))
    h = bn(conv(h, params["conv2_w"], 1, [(1, 1), (1, 1)]),
           params["bn2_gamma"], params["bn2_beta"])
    if "sc_w" in params:
        w = params["sc_w"].reshape(1, 1, *params["sc_w"].shape)
        sc = bn(conv(x, w, stride, [(0, 0), (0, 0)]),
                params["sc_gamma"], params["sc_beta"])
    else:
        sc = x
    return jax.nn.relu(h + sc)


if __name__ == "__main__":
    key = jax.random.PRNGKey(0)

    # (name, Cin, Cout, H=W, stride, use_bf16, row_cap, tolerance)
    # bf16 mode stores intermediates / MXU operands in bf16 -> O(1e-2) expected
    # deviation from the f32 reference; the f32 configs verify exactness.
    configs = [
        ("proj_s1_bf16", 4, 8, 16, 1, True, 8, 5e-2),
        ("proj_s1_f32", 4, 8, 16, 1, False, 8, 2e-3),
        ("proj_s2_f32", 4, 8, 16, 2, False, None, 2e-3),
        ("ident_s1_f32", 8, 8, 16, 1, False, None, 2e-3),
    ]
    for name, cin, cout, hw, stride, use_bf16, row_cap, tol in configs:
        k_x, k_p, key = jax.random.split(key, 3)
        x = jax.random.normal(k_x, (2, cin, hw, hw), jnp.float32)     # NCHW
        params = init_resnet_block_params(k_p, cin, cout, stride)

        fwd = jax.jit(functools.partial(resnet_block_forward, stride=stride,
                                        use_bf16=use_bf16, row_cap=row_cap))
        out = fwd(params, x)
        jax.block_until_ready(out)

        ref = ref_forward(params, x, stride)
        assert out.shape == ref.shape, (name, out.shape, ref.shape)
        max_err = float(jnp.max(jnp.abs(out.astype(jnp.float32) - ref)))
        assert max_err < tol, (name, max_err, tol)

    print("KERNEL_OK")
</pallas_src>

<mosaic_0001>
module attributes {stable_mosaic.version = 11 : i64} {
  func.func @_bn_add_relu_kernel(%arg0: i32, %arg1: i32, %arg2: memref<1x8x256xbf16, #tpu.memory_space<vmem>>, %arg3: memref<1x8x256xbf16, #tpu.memory_space<vmem>>, %arg4: memref<8x1xf32, #tpu.memory_space<vmem>>, %arg5: memref<8x1xf32, #tpu.memory_space<vmem>>, %arg6: memref<8x1xf32, #tpu.memory_space<vmem>>, %arg7: memref<8x1xf32, #tpu.memory_space<vmem>>, %arg8: memref<1x8x256xf32, #tpu.memory_space<vmem>>) attributes {dimension_semantics = [#tpu.dimension_semantics<parallel>, #tpu.dimension_semantics<parallel>], iteration_bounds = array<i64: 2, 1>, scalar_prefetch = 0 : i64, scratch_operands = 0 : i64, tpu.core_type = #tpu.core_type<tc>, window_params = [{transform_indices = @transform_0, window_bounds = array<i64: 1, 8, 256>}, {transform_indices = @transform_1, window_bounds = array<i64: 1, 8, 256>}, {pipeline_mode = #tpu.pipeline_mode<synchronous>, transform_indices = @transform_2, window_bounds = array<i64: 8, 1>}, {pipeline_mode = #tpu.pipeline_mode<synchronous>, transform_indices = @transform_3, window_bounds = array<i64: 8, 1>}, {pipeline_mode = #tpu.pipeline_mode<synchronous>, transform_indices = @transform_4, window_bounds = array<i64: 8, 1>}, {pipeline_mode = #tpu.pipeline_mode<synchronous>, transform_indices = @transform_5, window_bounds = array<i64: 8, 1>}, {transform_indices = @transform_6, window_bounds = array<i64: 1, 8, 256>}]} {
    %c0 = arith.constant 0 : index
    %c0_0 = arith.constant 0 : index
    %c0_1 = arith.constant 0 : index
    %0 = vector.load %arg2[%c0, %c0_0, %c0_1] : memref<1x8x256xbf16, #tpu.memory_space<vmem>>, vector<1x8x256xbf16>
    %1 = vector.shape_cast %0 : vector<1x8x256xbf16> to vector<8x256xbf16>
    %2 = arith.extf %1 : vector<8x256xbf16> to vector<8x256xf32>
    %c0_2 = arith.constant 0 : index
    %c0_3 = arith.constant 0 : index
    %3 = vector.load %arg4[%c0_2, %c0_3] : memref<8x1xf32, #tpu.memory_space<vmem>>, vector<8x1xf32>
    %4 = vector.broadcast %3 : vector<8x1xf32> to vector<8x256xf32>
    %5 = arith.mulf %2, %4 : vector<8x256xf32>
    %c0_4 = arith.constant 0 : index
    %c0_5 = arith.constant 0 : index
    %6 = vector.load %arg5[%c0_4, %c0_5] : memref<8x1xf32, #tpu.memory_space<vmem>>, vector<8x1xf32>
    %7 = vector.broadcast %6 : vector<8x1xf32> to vector<8x256xf32>
    %8 = arith.addf %5, %7 : vector<8x256xf32>
    %c0_6 = arith.constant 0 : index
    %c0_7 = arith.constant 0 : index
    %c0_8 = arith.constant 0 : index
    %9 = vector.load %arg3[%c0_6, %c0_7, %c0_8] : memref<1x8x256xbf16, #tpu.memory_space<vmem>>, vector<1x8x256xbf16>
    %10 = vector.shape_cast %9 : vector<1x8x256xbf16> to vector<8x256xbf16>
    %11 = arith.extf %10 : vector<8x256xbf16> to vector<8x256xf32>
    %c0_9 = arith.constant 0 : index
    %c0_10 = arith.constant 0 : index
    %12 = vector.load %arg6[%c0_9, %c0_10] : memref<8x1xf32, #tpu.memory_space<vmem>>, vector<8x1xf32>
    %13 = vector.broadcast %12 : vector<8x1xf32> to vector<8x256xf32>
    %14 = arith.mulf %11, %13 : vector<8x256xf32>
    %15 = arith.addf %8, %14 : vector<8x256xf32>
    %c0_11 = arith.constant 0 : index
    %c0_12 = arith.constant 0 : index
    %16 = vector.load %arg7[%c0_11, %c0_12] : memref<8x1xf32, #tpu.memory_space<vmem>>, vector<8x1xf32>
    %17 = vector.broadcast %16 : vector<8x1xf32> to vector<8x256xf32>
    %18 = arith.addf %15, %17 : vector<8x256xf32>
    %cst = arith.constant 0.000000e+00 : f32
    %19 = vector.broadcast %cst : f32 to vector<8x256xf32>
    %20 = arith.maximumf %18, %19 : vector<8x256xf32>
    %c0_13 = arith.constant 0 : index
    %c0_14 = arith.constant 0 : index
    %c0_15 = arith.constant 0 : index
    %21 = vector.load %arg8[%c0_13, %c0_14, %c0_15] : memref<1x8x256xf32, #tpu.memory_space<vmem>>, vector<1x8x256xf32>
    %22 = vector.shape_cast %21 : vector<1x8x256xf32> to vector<8x256xf32>
    %23 = vector.shape_cast %20 : vector<8x256xf32> to vector<1x8x256xf32>
    tpu.vector_store %arg8[%c0_13, %c0_14, %c0_15], %23 {strides = array<i32>} : memref<1x8x256xf32, #tpu.memory_space<vmem>>, vector<1x8x256xf32>,
    return
  }
  func.func @transform_0(%arg0: i32, %arg1: i32) -> (i32, i32, i32) {
    %c0_i32 = arith.constant 0 : i32
    %c0_i32_0 = arith.constant 0 : i32
    return %arg0, %c0_i32, %arg1 : i32, i32, i32
  }
  func.func @transform_1(%arg0: i32, %arg1: i32) -> (i32, i32, i32) {
    %c0_i32 = arith.constant 0 : i32
    %c0_i32_0 = arith.constant 0 : i32
    return %arg0, %c0_i32, %arg1 : i32, i32, i32
  }
  func.func @transform_2(%arg0: i32, %arg1: i32) -> (i32, i32) {
    %c0_i32 = arith.constant 0 : i32
    %c0_i32_0 = arith.constant 0 : i32
    %c0_i32_1 = arith.constant 0 : i32
    return %c0_i32, %c0_i32_0 : i32, i32
  }
  func.func @transform_3(%arg0: i32, %arg1: i32) -> (i32, i32) {
    %c0_i32 = arith.constant 0 : i32
    %c0_i32_0 = arith.constant 0 : i32
    %c0_i32_1 = arith.constant 0 : i32
    return %c0_i32, %c0_i32_0 : i32, i32
  }
  func.func @transform_4(%arg0: i32, %arg1: i32) -> (i32, i32) {
    %c0_i32 = arith.constant 0 : i32
    %c0_i32_0 = arith.constant 0 : i32
    %c0_i32_1 = arith.constant 0 : i32
    return %c0_i32, %c0_i32_0 : i32, i32
  }
  func.func @transform_5(%arg0: i32, %arg1: i32) -> (i32, i32) {
    %c0_i32 = arith.constant 0 : i32
    %c0_i32_0 = arith.constant 0 : i32
    %c0_i32_1 = arith.constant 0 : i32
    return %c0_i32, %c0_i32_0 : i32, i32
  }
  func.func @transform_6(%arg0: i32, %arg1: i32) -> (i32, i32, i32) {
    %c0_i32 = arith.constant 0 : i32
    %c0_i32_0 = arith.constant 0 : i32
    return %arg0, %c0_i32, %arg1 : i32, i32, i32
  }
}

module attributes {stable_mosaic.version = 11 : i64} {
  func.func @_conv3x3_kernel(%arg0: i32, %arg1: i32, %arg2: memref<1x4x256xf32, #tpu.memory_space<vmem>>, %arg3: memref<36x8xbf16, #tpu.memory_space<vmem>>, %arg4: memref<4x8xbf16, #tpu.memory_space<vmem>>, %arg5: memref<1x8x128xbf16, #tpu.memory_space<vmem>>, %arg6: memref<1x8x128xbf16, #tpu.memory_space<vmem>>, %arg7: memref<1x4x8xf32, #tpu.memory_space<vmem>>, %arg8: memref<18x18x4xf32, #tpu.memory_space<vmem>>) attributes {dimension_semantics = [#tpu.dimension_semantics<parallel>, #tpu.dimension_semantics<arbitrary>], iteration_bounds = array<i64: 2, 2>, scalar_prefetch = 0 : i64, scratch_operands = 1 : i64, tpu.core_type = #tpu.core_type<tc>, window_params = [{transform_indices = @transform_0, window_bounds = array<i64: 1, 4, 256>}, {pipeline_mode = #tpu.pipeline_mode<synchronous>, transform_indices = @transform_1, window_bounds = array<i64: 36, 8>}, {pipeline_mode = #tpu.pipeline_mode<synchronous>, transform_indices = @transform_2, window_bounds = array<i64: 4, 8>}, {transform_indices = @transform_3, window_bounds = array<i64: 1, 8, 128>}, {transform_indices = @transform_4, window_bounds = array<i64: 1, 8, 128>}, {transform_indices = @transform_5, window_bounds = array<i64: 1, 4, 8>}]} {
    %c0_i32 = arith.constant 0 : i32
    %0 = arith.cmpi eq, %arg1, %c0_i32 : i32
    %1 = arith.extui %0 : i1 to i32
    %c0_i32_0 = arith.constant 0 : i32
    %2 = arith.cmpi ne, %1, %c0_i32_0 : i32
    scf.if %2 {
      %c0_21 = arith.constant 0 : index
      %c0_22 = arith.constant 0 : index
      %c0_23 = arith.constant 0 : index
      %53 = vector.load %arg2[%c0_21, %c0_22, %c0_23] : memref<1x4x256xf32, #tpu.memory_space<vmem>>, vector<1x4x256xf32>
      %54 = vector.shape_cast %53 : vector<1x4x256xf32> to vector<4x256xf32>
      %55 = tpu.transpose %54, [1, 0] : vector<4x256xf32> -> vector<256x4xf32>
      %56 = vector.shape_cast %55 : vector<256x4xf32> to vector<16x16x4xf32>
      %c1 = arith.constant 1 : index
      %c1_24 = arith.constant 1 : index
      %c0_25 = arith.constant 0 : index
      %57 = vector.load %arg8[%c1, %c1_24, %c0_25] : memref<18x18x4xf32, #tpu.memory_space<vmem>>, vector<16x16x4xf32>
      tpu.vector_store %arg8[%c1, %c1_24, %c0_25], %56 {strides = array<i32>} : memref<18x18x4xf32, #tpu.memory_space<vmem>>, vector<16x16x4xf32>,
      %cst_26 = arith.constant 0.000000e+00 : f32
      %58 = vector.broadcast %cst_26 : f32 to vector<1x18x4xf32>
      %cst_27 = arith.constant 0.000000e+00 : f32
      %59 = vector.broadcast %cst_27 : f32 to vector<18x1x4xf32>
      %c0_28 = arith.constant 0 : index
      %c0_29 = arith.constant 0 : index
      %c0_30 = arith.constant 0 : index
      %60 = vector.load %arg8[%c0_28, %c0_29, %c0_30] : memref<18x18x4xf32, #tpu.memory_space<vmem>>, vector<1x18x4xf32>
      tpu.vector_store %arg8[%c0_28, %c0_29, %c0_30], %58 {strides = array<i32>} : memref<18x18x4xf32, #tpu.memory_space<vmem>>, vector<1x18x4xf32>,
      %c17 = arith.constant 17 : index
      %c0_31 = arith.constant 0 : index
      %c0_32 = arith.constant 0 : index
      %61 = vector.load %arg8[%c17, %c0_31, %c0_32] : memref<18x18x4xf32, #tpu.memory_space<vmem>>, vector<1x18x4xf32>
      tpu.vector_store %arg8[%c17, %c0_31, %c0_32], %58 {strides = array<i32>} : memref<18x18x4xf32, #tpu.memory_space<vmem>>, vector<1x18x4xf32>,
      %c0_33 = arith.constant 0 : index
      %c0_34 = arith.constant 0 : index
      %c0_35 = arith.constant 0 : index
      %62 = vector.load %arg8[%c0_33, %c0_34, %c0_35] : memref<18x18x4xf32, #tpu.memory_space<vmem>>, vector<18x1x4xf32>
      tpu.vector_store %arg8[%c0_33, %c0_34, %c0_35], %59 {strides = array<i32>} : memref<18x18x4xf32, #tpu.memory_space<vmem>>, vector<18x1x4xf32>,
      %c0_36 = arith.constant 0 : index
      %c17_37 = arith.constant 17 : index
      %c0_38 = arith.constant 0 : index
      %63 = vector.load %arg8[%c0_36, %c17_37, %c0_38] : memref<18x18x4xf32, #tpu.memory_space<vmem>>, vector<18x1x4xf32>
      tpu.vector_store %arg8[%c0_36, %c17_37, %c0_38], %59 {strides = array<i32>} : memref<18x18x4xf32, #tpu.memory_space<vmem>>, vector<18x1x4xf32>,
    } else {
    }
    %c8_i32 = arith.constant 8 : i32
    %3 = arith.muli %arg1, %c8_i32 : i32
    %c1_i32 = arith.constant 1 : i32
    %4 = arith.muli %3, %c1_i32 : i32
    %5 = tpu.assume_multiple %4, 8 : i32
    %6 = arith.index_cast %5 : i32 to index
    %c0 = arith.constant 0 : index
    %c0_1 = arith.constant 0 : index
    %7 = vector.load %arg8[%6, %c0, %c0_1] : memref<18x18x4xf32, #tpu.memory_space<vmem>>, vector<10x18x4xf32>
    %8 = vector.extract_strided_slice %7 {offsets = [0, 0, 0], sizes = [8, 16, 4], strides = [1, 1, 1]} : vector<10x18x4xf32> to vector<8x16x4xf32>
    %9 = vector.extract_strided_slice %7 {offsets = [0, 1, 0], sizes = [8, 16, 4], strides = [1, 1, 1]} : vector<10x18x4xf32> to vector<8x16x4xf32>
    %10 = vector.extract_strided_slice %7 {offsets = [0, 2, 0], sizes = [8, 16, 4], strides = [1, 1, 1]} : vector<10x18x4xf32> to vector<8x16x4xf32>
    %11 = vector.extract_strided_slice %7 {offsets = [1, 0, 0], sizes = [8, 16, 4], strides = [1, 1, 1]} : vector<10x18x4xf32> to vector<8x16x4xf32>
    %12 = vector.extract_strided_slice %7 {offsets = [1, 1, 0], sizes = [8, 16, 4], strides = [1, 1, 1]} : vector<10x18x4xf32> to vector<8x16x4xf32>
    %13 = vector.extract_strided_slice %7 {offsets = [1, 2, 0], sizes = [8, 16, 4], strides = [1, 1, 1]} : vector<10x18x4xf32> to vector<8x16x4xf32>
    %14 = vector.extract_strided_slice %7 {offsets = [2, 0, 0], sizes = [8, 16, 4], strides = [1, 1, 1]} : vector<10x18x4xf32> to vector<8x16x4xf32>
    %15 = vector.extract_strided_slice %7 {offsets = [2, 1, 0], sizes = [8, 16, 4], strides = [1, 1, 1]} : vector<10x18x4xf32> to vector<8x16x4xf32>
    %16 = vector.extract_strided_slice %7 {offsets = [2, 2, 0], sizes = [8, 16, 4], strides = [1, 1, 1]} : vector<10x18x4xf32> to vector<8x16x4xf32>
    %17 = tpu.concatenate %8, %9, %10, %11, %12, %13, %14, %15, %16 in 2 : vector<8x16x4xf32>, vector<8x16x4xf32>, vector<8x16x4xf32>, vector<8x16x4xf32>, vector<8x16x4xf32>, vector<8x16x4xf32>, vector<8x16x4xf32>, vector<8x16x4xf32>, vector<8x16x4xf32> -> vector<8x16x36xf32>
    %18 = vector.shape_cast %17 : vector<8x16x36xf32> to vector<128x36xf32>
    %19 = arith.truncf %18 : vector<128x36xf32> to vector<128x36xbf16>
    %c0_2 = arith.constant 0 : index
    %c0_3 = arith.constant 0 : index
    %20 = vector.load %arg3[%c0_2, %c0_3] : memref<36x8xbf16, #tpu.memory_space<vmem>>, vector<36x8xbf16>
    %cst = arith.constant dense<0.000000e+00> : vector<128x8xf32>
    %21 = tpu.matmul %19, %20, %cst {dimension_numbers = #tpu.dot_dimension_numbers<[1], [0], [0], [1], [0, 0, 1, 1], [], []>} : vector<128x36xbf16>, vector<36x8xbf16>, vector<128x8xf32> -> vector<128x8xf32>
    %22 = tpu.transpose %21, [1, 0] : vector<128x8xf32> -> vector<8x128xf32>
    %23 = arith.truncf %22 : vector<8x128xf32> to vector<8x128xbf16>
    %c0_4 = arith.constant 0 : index
    %c0_5 = arith.constant 0 : index
    %c0_6 = arith.constant 0 : index
    %24 = vector.load %arg5[%c0_4, %c0_5, %c0_6] : memref<1x8x128xbf16, #tpu.memory_space<vmem>>, vector<1x8x128xbf16>
    %25 = vector.shape_cast %24 : vector<1x8x128xbf16> to vector<8x128xbf16>
    %26 = vector.shape_cast %23 : vector<8x128xbf16> to vector<1x8x128xbf16>
    tpu.vector_store %arg5[%c0_4, %c0_5, %c0_6], %26 {strides = array<i32>} : memref<1x8x128xbf16, #tpu.memory_space<vmem>>, vector<1x8x128xbf16>,
    %cst_7 = arith.constant dense<0.000000e+00> : vector<8xf32>
    %27 = vector.multi_reduction <add>, %21, %cst_7 [0] : vector<128x8xf32> to vector<8xf32>
    %28 = vector.shape_cast %27 : vector<8xf32> to vector<1x8xf32>
    %29 = arith.mulf %21, %21 : vector<128x8xf32>
    %cst_8 = arith.constant dense<0.000000e+00> : vector<8xf32>
    %30 = vector.multi_reduction <add>, %29, %cst_8 [0] : vector<128x8xf32> to vector<8xf32>
    %31 = vector.shape_cast %30 : vector<8xf32> to vector<1x8xf32>
    %32 = vector.shape_cast %12 : vector<8x16x4xf32> to vector<128x4xf32>
    %33 = arith.truncf %32 : vector<128x4xf32> to vector<128x4xbf16>
    %c0_9 = arith.constant 0 : index
    %c0_10 = arith.constant 0 : index
    %34 = vector.load %arg4[%c0_9, %c0_10] : memref<4x8xbf16, #tpu.memory_space<vmem>>, vector<4x8xbf16>
    %cst_11 = arith.constant dense<0.000000e+00> : vector<128x8xf32>
    %35 = tpu.matmul %33, %34, %cst_11 {dimension_numbers = #tpu.dot_dimension_numbers<[1], [0], [0], [1], [0, 0, 1, 1], [], []>} : vector<128x4xbf16>, vector<4x8xbf16>, vector<128x8xf32> -> vector<128x8xf32>
    %36 = tpu.transpose %35, [1, 0] : vector<128x8xf32> -> vector<8x128xf32>
    %37 = arith.truncf %36 : vector<8x128xf32> to vector<8x128xbf16>
    %c0_12 = arith.constant 0 : index
    %c0_13 = arith.constant 0 : index
    %c0_14 = arith.constant 0 : index
    %38 = vector.load %arg6[%c0_12, %c0_13, %c0_14] : memref<1x8x128xbf16, #tpu.memory_space<vmem>>, vector<1x8x128xbf16>
    %39 = vector.shape_cast %38 : vector<1x8x128xbf16> to vector<8x128xbf16>
    %40 = vector.shape_cast %37 : vector<8x128xbf16> to vector<1x8x128xbf16>
    tpu.vector_store %arg6[%c0_12, %c0_13, %c0_14], %40 {strides = array<i32>} : memref<1x8x128xbf16, #tpu.memory_space<vmem>>, vector<1x8x128xbf16>,
    %cst_15 = arith.constant dense<0.000000e+00> : vector<8xf32>
    %41 = vector.multi_reduction <add>, %35, %cst_15 [0] : vector<128x8xf32> to vector<8xf32>
    %42 = vector.shape_cast %41 : vector<8xf32> to vector<1x8xf32>
    %43 = arith.mulf %35, %35 : vector<128x8xf32>
    %cst_16 = arith.constant dense<0.000000e+00> : vector<8xf32>
    %44 = vector.multi_reduction <add>, %43, %cst_16 [0] : vector<128x8xf32> to vector<8xf32>
    %45 = vector.shape_cast %44 : vector<8xf32> to vector<1x8xf32>
    %46 = tpu.concatenate %28, %31, %42, %45 in 0 : vector<1x8xf32>, vector<1x8xf32>, vector<1x8xf32>, vector<1x8xf32> -> vector<4x8xf32>
    %c0_i32_17 = arith.constant 0 : i32
    %47 = arith.cmpi eq, %arg1, %c0_i32_17 : i32
    %48 = arith.extui %47 : i1 to i32
    %c0_i32_18 = arith.constant 0 : i32
    %49 = arith.cmpi ne, %48, %c0_i32_18 : i32
    scf.if %49 {
      %c0_21 = arith.constant 0 : index
      %c0_22 = arith.constant 0 : index
      %c0_23 = arith.constant 0 : index
      %53 = vector.load %arg7[%c0_21, %c0_22, %c0_23] : memref<1x4x8xf32, #tpu.memory_space<vmem>>, vector<1x4x8xf32>
      %54 = vector.shape_cast %53 : vector<1x4x8xf32> to vector<4x8xf32>
      %55 = vector.shape_cast %46 : vector<4x8xf32> to vector<1x4x8xf32>
      tpu.vector_store %arg7[%c0_21, %c0_22, %c0_23], %55 {strides = array<i32>} : memref<1x4x8xf32, #tpu.memory_space<vmem>>, vector<1x4x8xf32>,
    } else {
    }
    %c0_i32_19 = arith.constant 0 : i32
    %50 = arith.cmpi ne, %arg1, %c0_i32_19 : i32
    %51 = arith.extui %50 : i1 to i32
    %c0_i32_20 = arith.constant 0 : i32
    %52 = arith.cmpi ne, %51, %c0_i32_20 : i32
    scf.if %52 {
      %c0_21 = arith.constant 0 : index
      %c0_22 = arith.constant 0 : index
      %c0_23 = arith.constant 0 : index
      %53 = vector.load %arg7[%c0_21, %c0_22, %c0_23] : memref<1x4x8xf32, #tpu.memory_space<vmem>>, vector<1x4x8xf32>
      %54 = vector.shape_cast %53 : vector<1x4x8xf32> to vector<4x8xf32>
      %55 = arith.addf %54, %46 : vector<4x8xf32>
      %c0_24 = arith.constant 0 : index
      %c0_25 = arith.constant 0 : index
      %c0_26 = arith.constant 0 : index
      %56 = vector.load %arg7[%c0_24, %c0_25, %c0_26] : memref<1x4x8xf32, #tpu.memory_space<vmem>>, vector<1x4x8xf32>
      %57 = vector.shape_cast %56 : vector<1x4x8xf32> to vector<4x8xf32>
      %58 = vector.shape_cast %55 : vector<4x8xf32> to vector<1x4x8xf32>
      tpu.vector_store %arg7[%c0_24, %c0_25, %c0_26], %58 {strides = array<i32>} : memref<1x4x8xf32, #tpu.memory_space<vmem>>, vector<1x4x8xf32>,
    } else {
    }
    return
  }
  func.func @transform_0(%arg0: i32, %arg1: i32) -> (i32, i32, i32) {
    %c0_i32 = arith.constant 0 : i32
    %c0_i32_0 = arith.constant 0 : i32
    %c0_i32_1 = arith.constant 0 : i32
    return %arg0, %c0_i32, %c0_i32_0 : i32, i32, i32
  }
  func.func @transform_1(%arg0: i32, %arg1: i32) -> (i32, i32) {
    %c0_i32 = arith.constant 0 : i32
    %c0_i32_0 = arith.constant 0 : i32
    %c0_i32_1 = arith.constant 0 : i32
    return %c0_i32, %c0_i32_0 : i32, i32
  }
  func.func @transform_2(%arg0: i32, %arg1: i32) -> (i32, i32) {
    %c0_i32 = arith.constant 0 : i32
    %c0_i32_0 = arith.constant 0 : i32
    %c0_i32_1 = arith.constant 0 : i32
    return %c0_i32, %c0_i32_0 : i32, i32
  }
  func.func @transform_3(%arg0: i32, %arg1: i32) -> (i32, i32, i32) {
    %c0_i32 = arith.constant 0 : i32
    %c0_i32_0 = arith.constant 0 : i32
    return %arg0, %c0_i32, %arg1 : i32, i32, i32
  }
  func.func @transform_4(%arg0: i32, %arg1: i32) -> (i32, i32, i32) {
    %c0_i32 = arith.constant 0 : i32
    %c0_i32_0 = arith.constant 0 : i32
    return %arg0, %c0_i32, %arg1 : i32, i32, i32
  }
  func.func @transform_5(%arg0: i32, %arg1: i32) -> (i32, i32, i32) {
    %c0_i32 = arith.constant 0 : i32
    %c0_i32_0 = arith.constant 0 : i32
    %c0_i32_1 = arith.constant 0 : i32
    return %arg0, %c0_i32, %c0_i32_0 : i32, i32, i32
  }
}

module attributes {stable_mosaic.version = 11 : i64} {
  func.func @_conv3x3_kernel(%arg0: i32, %arg1: i32, %arg2: memref<1x8x256xbf16, #tpu.memory_space<vmem>>, %arg3: memref<1x8xf32, #tpu.memory_space<vmem>>, %arg4: memref<1x8xf32, #tpu.memory_space<vmem>>, %arg5: memref<72x8xbf16, #tpu.memory_space<vmem>>, %arg6: memref<1x8x128xbf16, #tpu.memory_space<vmem>>, %arg7: memref<1x2x8xf32, #tpu.memory_space<vmem>>, %arg8: memref<18x18x8xf32, #tpu.memory_space<vmem>>) attributes {dimension_semantics = [#tpu.dimension_semantics<parallel>, #tpu.dimension_semantics<arbitrary>], iteration_bounds = array<i64: 2, 2>, scalar_prefetch = 0 : i64, scratch_operands = 1 : i64, tpu.core_type = #tpu.core_type<tc>, window_params = [{transform_indices = @transform_0, window_bounds = array<i64: 1, 8, 256>}, {pipeline_mode = #tpu.pipeline_mode<synchronous>, transform_indices = @transform_1, window_bounds = array<i64: 1, 8>}, {pipeline_mode = #tpu.pipeline_mode<synchronous>, transform_indices = @transform_2, window_bounds = array<i64: 1, 8>}, {pipeline_mode = #tpu.pipeline_mode<synchronous>, transform_indices = @transform_3, window_bounds = array<i64: 72, 8>}, {transform_indices = @transform_4, window_bounds = array<i64: 1, 8, 128>}, {transform_indices = @transform_5, window_bounds = array<i64: 1, 2, 8>}]} {
    %c0_i32 = arith.constant 0 : i32
    %0 = arith.cmpi eq, %arg1, %c0_i32 : i32
    %1 = arith.extui %0 : i1 to i32
    %c0_i32_0 = arith.constant 0 : i32
    %2 = arith.cmpi ne, %1, %c0_i32_0 : i32
    scf.if %2 {
      %c0_13 = arith.constant 0 : index
      %c0_14 = arith.constant 0 : index
      %c0_15 = arith.constant 0 : index
      %39 = vector.load %arg2[%c0_13, %c0_14, %c0_15] : memref<1x8x256xbf16, #tpu.memory_space<vmem>>, vector<1x8x256xbf16>
      %40 = vector.shape_cast %39 : vector<1x8x256xbf16> to vector<8x256xbf16>
      %41 = arith.extf %40 : vector<8x256xbf16> to vector<8x256xf32>
      %42 = tpu.transpose %41, [1, 0] : vector<8x256xf32> -> vector<256x8xf32>
      %c0_16 = arith.constant 0 : index
      %c0_17 = arith.constant 0 : index
      %43 = vector.load %arg3[%c0_16, %c0_17] : memref<1x8xf32, #tpu.memory_space<vmem>>, vector<1x8xf32>
      %44 = vector.broadcast %43 : vector<1x8xf32> to vector<256x8xf32>
      %45 = arith.mulf %42, %44 : vector<256x8xf32>
      %c0_18 = arith.constant 0 : index
      %c0_19 = arith.constant 0 : index
      %46 = vector.load %arg4[%c0_18, %c0_19] : memref<1x8xf32, #tpu.memory_space<vmem>>, vector<1x8xf32>
      %47 = vector.broadcast %46 : vector<1x8xf32> to vector<256x8xf32>
      %48 = arith.addf %45, %47 : vector<256x8xf32>
      %cst_20 = arith.constant 0.000000e+00 : f32
      %49 = vector.broadcast %cst_20 : f32 to vector<256x8xf32>
      %50 = arith.maximumf %48, %49 : vector<256x8xf32>
      %51 = vector.shape_cast %50 : vector<256x8xf32> to vector<16x16x8xf32>
      %c1 = arith.constant 1 : index
      %c1_21 = arith.constant 1 : index
      %c0_22 = arith.constant 0 : index
      %52 = vector.load %arg8[%c1, %c1_21, %c0_22] : memref<18x18x8xf32, #tpu.memory_space<vmem>>, vector<16x16x8xf32>
      tpu.vector_store %arg8[%c1, %c1_21, %c0_22], %51 {strides = array<i32>} : memref<18x18x8xf32, #tpu.memory_space<vmem>>, vector<16x16x8xf32>,
      %cst_23 = arith.constant 0.000000e+00 : f32
      %53 = vector.broadcast %cst_23 : f32 to vector<1x18x8xf32>
      %cst_24 = arith.constant 0.000000e+00 : f32
      %54 = vector.broadcast %cst_24 : f32 to vector<18x1x8xf32>
      %c0_25 = arith.constant 0 : index
      %c0_26 = arith.constant 0 : index
      %c0_27 = arith.constant 0 : index
      %55 = vector.load %arg8[%c0_25, %c0_26, %c0_27] : memref<18x18x8xf32, #tpu.memory_space<vmem>>, vector<1x18x8xf32>
      tpu.vector_store %arg8[%c0_25, %c0_26, %c0_27], %53 {strides = array<i32>} : memref<18x18x8xf32, #tpu.memory_space<vmem>>, vector<1x18x8xf32>,
      %c17 = arith.constant 17 : index
      %c0_28 = arith.constant 0 : index
      %c0_29 = arith.constant 0 : index
      %56 = vector.load %arg8[%c17, %c0_28, %c0_29] : memref<18x18x8xf32, #tpu.memory_space<vmem>>, vector<1x18x8xf32>
      tpu.vector_store %arg8[%c17, %c0_28, %c0_29], %53 {strides = array<i32>} : memref<18x18x8xf32, #tpu.memory_space<vmem>>, vector<1x18x8xf32>,
      %c0_30 = arith.constant 0 : index
      %c0_31 = arith.constant 0 : index
      %c0_32 = arith.constant 0 : index
      %57 = vector.load %arg8[%c0_30, %c0_31, %c0_32] : memref<18x18x8xf32, #tpu.memory_space<vmem>>, vector<18x1x8xf32>
      tpu.vector_store %arg8[%c0_30, %c0_31, %c0_32], %54 {strides = array<i32>} : memref<18x18x8xf32, #tpu.memory_space<vmem>>, vector<18x1x8xf32>,
      %c0_33 = arith.constant 0 : index
      %c17_34 = arith.constant 17 : index
      %c0_35 = arith.constant 0 : index
      %58 = vector.load %arg8[%c0_33, %c17_34, %c0_35] : memref<18x18x8xf32, #tpu.memory_space<vmem>>, vector<18x1x8xf32>
      tpu.vector_store %arg8[%c0_33, %c17_34, %c0_35], %54 {strides = array<i32>} : memref<18x18x8xf32, #tpu.memory_space<vmem>>, vector<18x1x8xf32>,
    } else {
    }
    %c8_i32 = arith.constant 8 : i32
    %3 = arith.muli %arg1, %c8_i32 : i32
    %c1_i32 = arith.constant 1 : i32
    %4 = arith.muli %3, %c1_i32 : i32
    %5 = tpu.assume_multiple %4, 8 : i32
    %6 = arith.index_cast %5 : i32 to index
    %c0 = arith.constant 0 : index
    %c0_1 = arith.constant 0 : index
    %7 = vector.load %arg8[%6, %c0, %c0_1] : memref<18x18x8xf32, #tpu.memory_space<vmem>>, vector<10x18x8xf32>
    %8 = vector.extract_strided_slice %7 {offsets = [0, 0, 0], sizes = [8, 16, 8], strides = [1, 1, 1]} : vector<10x18x8xf32> to vector<8x16x8xf32>
    %9 = vector.extract_strided_slice %7 {offsets = [0, 1, 0], sizes = [8, 16, 8], strides = [1, 1, 1]} : vector<10x18x8xf32> to vector<8x16x8xf32>
    %10 = vector.extract_strided_slice %7 {offsets = [0, 2, 0], sizes = [8, 16, 8], strides = [1, 1, 1]} : vector<10x18x8xf32> to vector<8x16x8xf32>
    %11 = vector.extract_strided_slice %7 {offsets = [1, 0, 0], sizes = [8, 16, 8], strides = [1, 1, 1]} : vector<10x18x8xf32> to vector<8x16x8xf32>
    %12 = vector.extract_strided_slice %7 {offsets = [1, 1, 0], sizes = [8, 16, 8], strides = [1, 1, 1]} : vector<10x18x8xf32> to vector<8x16x8xf32>
    %13 = vector.extract_strided_slice %7 {offsets = [1, 2, 0], sizes = [8, 16, 8], strides = [1, 1, 1]} : vector<10x18x8xf32> to vector<8x16x8xf32>
    %14 = vector.extract_strided_slice %7 {offsets = [2, 0, 0], sizes = [8, 16, 8], strides = [1, 1, 1]} : vector<10x18x8xf32> to vector<8x16x8xf32>
    %15 = vector.extract_strided_slice %7 {offsets = [2, 1, 0], sizes = [8, 16, 8], strides = [1, 1, 1]} : vector<10x18x8xf32> to vector<8x16x8xf32>
    %16 = vector.extract_strided_slice %7 {offsets = [2, 2, 0], sizes = [8, 16, 8], strides = [1, 1, 1]} : vector<10x18x8xf32> to vector<8x16x8xf32>
    %17 = tpu.concatenate %8, %9, %10, %11, %12, %13, %14, %15, %16 in 2 : vector<8x16x8xf32>, vector<8x16x8xf32>, vector<8x16x8xf32>, vector<8x16x8xf32>, vector<8x16x8xf32>, vector<8x16x8xf32>, vector<8x16x8xf32>, vector<8x16x8xf32>, vector<8x16x8xf32> -> vector<8x16x72xf32>
    %18 = vector.shape_cast %17 : vector<8x16x72xf32> to vector<128x72xf32>
    %19 = arith.truncf %18 : vector<128x72xf32> to vector<128x72xbf16>
    %c0_2 = arith.constant 0 : index
    %c0_3 = arith.constant 0 : index
    %20 = vector.load %arg5[%c0_2, %c0_3] : memref<72x8xbf16, #tpu.memory_space<vmem>>, vector<72x8xbf16>
    %cst = arith.constant dense<0.000000e+00> : vector<128x8xf32>
    %21 = tpu.matmul %19, %20, %cst {dimension_numbers = #tpu.dot_dimension_numbers<[1], [0], [0], [1], [0, 0, 1, 1], [], []>} : vector<128x72xbf16>, vector<72x8xbf16>, vector<128x8xf32> -> vector<128x8xf32>
    %22 = tpu.transpose %21, [1, 0] : vector<128x8xf32> -> vector<8x128xf32>
    %23 = arith.truncf %22 : vector<8x128xf32> to vector<8x128xbf16>
    %c0_4 = arith.constant 0 : index
    %c0_5 = arith.constant 0 : index
    %c0_6 = arith.constant 0 : index
    %24 = vector.load %arg6[%c0_4, %c0_5, %c0_6] : memref<1x8x128xbf16, #tpu.memory_space<vmem>>, vector<1x8x128xbf16>
    %25 = vector.shape_cast %24 : vector<1x8x128xbf16> to vector<8x128xbf16>
    %26 = vector.shape_cast %23 : vector<8x128xbf16> to vector<1x8x128xbf16>
    tpu.vector_store %arg6[%c0_4, %c0_5, %c0_6], %26 {strides = array<i32>} : memref<1x8x128xbf16, #tpu.memory_space<vmem>>, vector<1x8x128xbf16>,
    %cst_7 = arith.constant dense<0.000000e+00> : vector<8xf32>
    %27 = vector.multi_reduction <add>, %21, %cst_7 [0] : vector<128x8xf32> to vector<8xf32>
    %28 = vector.shape_cast %27 : vector<8xf32> to vector<1x8xf32>
    %29 = arith.mulf %21, %21 : vector<128x8xf32>
    %cst_8 = arith.constant dense<0.000000e+00> : vector<8xf32>
    %30 = vector.multi_reduction <add>, %29, %cst_8 [0] : vector<128x8xf32> to vector<8xf32>
    %31 = vector.shape_cast %30 : vector<8xf32> to vector<1x8xf32>
    %32 = tpu.concatenate %28, %31 in 0 : vector<1x8xf32>, vector<1x8xf32> -> vector<2x8xf32>
    %c0_i32_9 = arith.constant 0 : i32
    %33 = arith.cmpi eq, %arg1, %c0_i32_9 : i32
    %34 = arith.extui %33 : i1 to i32
    %c0_i32_10 = arith.constant 0 : i32
    %35 = arith.cmpi ne, %34, %c0_i32_10 : i32
    scf.if %35 {
      %c0_13 = arith.constant 0 : index
      %c0_14 = arith.constant 0 : index
      %c0_15 = arith.constant 0 : index
      %39 = vector.load %arg7[%c0_13, %c0_14, %c0_15] : memref<1x2x8xf32, #tpu.memory_space<vmem>>, vector<1x2x8xf32>
      %40 = vector.shape_cast %39 : vector<1x2x8xf32> to vector<2x8xf32>
      %41 = vector.shape_cast %32 : vector<2x8xf32> to vector<1x2x8xf32>
      tpu.vector_store %arg7[%c0_13, %c0_14, %c0_15], %41 {strides = array<i32>} : memref<1x2x8xf32, #tpu.memory_space<vmem>>, vector<1x2x8xf32>,
    } else {
    }
    %c0_i32_11 = arith.constant 0 : i32
    %36 = arith.cmpi ne, %arg1, %c0_i32_11 : i32
    %37 = arith.extui %36 : i1 to i32
    %c0_i32_12 = arith.constant 0 : i32
    %38 = arith.cmpi ne, %37, %c0_i32_12 : i32
    scf.if %38 {
      %c0_13 = arith.constant 0 : index
      %c0_14 = arith.constant 0 : index
      %c0_15 = arith.constant 0 : index
      %39 = vector.load %arg7[%c0_13, %c0_14, %c0_15] : memref<1x2x8xf32, #tpu.memory_space<vmem>>, vector<1x2x8xf32>
      %40 = vector.shape_cast %39 : vector<1x2x8xf32> to vector<2x8xf32>
      %41 = arith.addf %40, %32 : vector<2x8xf32>
      %c0_16 = arith.constant 0 : index
      %c0_17 = arith.constant 0 : index
      %c0_18 = arith.constant 0 : index
      %42 = vector.load %arg7[%c0_16, %c0_17, %c0_18] : memref<1x2x8xf32, #tpu.memory_space<vmem>>, vector<1x2x8xf32>
      %43 = vector.shape_cast %42 : vector<1x2x8xf32> to vector<2x8xf32>
      %44 = vector.shape_cast %41 : vector<2x8xf32> to vector<1x2x8xf32>
      tpu.vector_store %arg7[%c0_16, %c0_17, %c0_18], %44 {strides = array<i32>} : memref<1x2x8xf32, #tpu.memory_space<vmem>>, vector<1x2x8xf32>,
    } else {
    }
    return
  }
  func.func @transform_0(%arg0: i32, %arg1: i32) -> (i32, i32, i32) {
    %c0_i32 = arith.constant 0 : i32
    %c0_i32_0 = arith.constant 0 : i32
    %c0_i32_1 = arith.constant 0 : i32
    return %arg0, %c0_i32, %c0_i32_0 : i32, i32, i32
  }
  func.func @transform_1(%arg0: i32, %arg1: i32) -> (i32, i32) {
    %c0_i32 = arith.constant 0 : i32
    %c0_i32_0 = arith.constant 0 : i32
    %c0_i32_1 = arith.constant 0 : i32
    return %c0_i32, %c0_i32_0 : i32, i32
  }
  func.func @transform_2(%arg0: i32, %arg1: i32) -> (i32, i32) {
    %c0_i32 = arith.constant 0 : i32
    %c0_i32_0 = arith.constant 0 : i32
    %c0_i32_1 = arith.constant 0 : i32
    return %c0_i32, %c0_i32_0 : i32, i32
  }
  func.func @transform_3(%arg0: i32, %arg1: i32) -> (i32, i32) {
    %c0_i32 = arith.constant 0 : i32
    %c0_i32_0 = arith.constant 0 : i32
    %c0_i32_1 = arith.constant 0 : i32
    return %c0_i32, %c0_i32_0 : i32, i32
  }
  func.func @transform_4(%arg0: i32, %arg1: i32) -> (i32, i32, i32) {
    %c0_i32 = arith.constant 0 : i32
    %c0_i32_0 = arith.constant 0 : i32
    return %arg0, %c0_i32, %arg1 : i32, i32, i32
  }
  func.func @transform_5(%arg0: i32, %arg1: i32) -> (i32, i32, i32) {
    %c0_i32 = arith.constant 0 : i32
    %c0_i32_0 = arith.constant 0 : i32
    %c0_i32_1 = arith.constant 0 : i32
    return %arg0, %c0_i32, %c0_i32_0 : i32, i32, i32
  }
}

</mosaic_0001>

<llo_original>
// kernel: resnet_block_forward.5
$region0: #{resnet_block_forward.5}
  #allocation0 [shape = 'u32[]', space=smem, size = 0x4, offset = 0x4, fixed_abs, tag = 'smem constant byte address 0x4 - core index']
  #allocation1 [shape = 'u32[144,128]{1,0:T(1,128)}', space=vmem, size = 0x12000, scoped, tag = 'internal scratch']
  %s0 = inlined_call_operand.vmem [shape: bf16[2,8,256], index: 0, kind: input, shape index: {}]
  %s1 = inlined_call_operand.vmem [shape: bf16[2,8,256], index: 1, kind: input, shape index: {}]
  %s2 = inlined_call_operand.vmem [shape: f32[8,1], index: 2, kind: input, shape index: {}]
  %s3 = inlined_call_operand.vmem [shape: f32[8,1], index: 3, kind: input, shape index: {}]
  %s4 = inlined_call_operand.vmem [shape: f32[8,1], index: 4, kind: input, shape index: {}]
  %s5 = inlined_call_operand.vmem [shape: f32[8,1], index: 5, kind: input, shape index: {}]
  %s6 = inlined_call_operand.vmem [shape: f32[2,8,256], index: 6, kind: output, shape index: {}]
  %s7 = sld [smem:[#allocation0]]
  $region57: #{resnet_block_forward.5} parent=0
    _
  %s9 = ssub.s32 1, %s7
  %s10 = scalar_select 0, %s9, %s7
  loop: start=0, step=1, limit=4
  $region2: #{resnet_block_forward.5} parent=0 // loop_pre_header
    _
  $region3: #{resnet_block_forward.5} parent=0 // loop_header
    %s12 = sphi 0, %s16
    %p13 = scmp.ge.s32.totalorder %s12, 4
    %s19 = sphi 0, %s31
    %s20 = sphi 0, %s27
    %s21 = sphi 0, %s19
    %s22 = sphi 0, %s20
    %s23 = sphi 0, %s21
    %s24 = sphi 0, %s22
    %s36 = sphi 0, %s38
    %s39 = sphi 0, %s36
    %s40 = sphi 0, %s39
    %s56 = sphi 0, %s40
    %s64 = sphi 0, %s66
    %s67 = sphi 0, %s64
    %s68 = sphi 0, %s67
    %s84 = sphi 0, %s68
    %s88 = sphi 0, %s88
    %s90 = sphi 0, %s88
    %s91 = sphi 0, %s90
    %s105 = sphi 0, %s91
    %s109 = sphi 0, %s109
    %s111 = sphi 0, %s109
    %s112 = sphi 0, %s111
    %s126 = sphi 0, %s112
    %s130 = sphi 0, %s130
    %s132 = sphi 0, %s130
    %s133 = sphi 0, %s132
    %s147 = sphi 0, %s133
    %s151 = sphi 0, %s151
    %s153 = sphi 0, %s151
    %s154 = sphi 0, %s153
    %s168 = sphi 0, %s154
    %s176 = sphi 0, %s178
    %s179 = sphi 0, %s176
    %s180 = sphi 0, %s179
    %s196 = sphi 0, %s180
  $region4: #{resnet_block_forward.5} parent=0 // loop_header_branch
    %15 = sbr.rel (%p13) target = $region8
  $region5: #{resnet_block_forward.5} parent=0 // loop_body
    %s17 = ssub.s32 %s12, 1
    %s18 = ssub.s32 %s12, 2
    %s25 = sadd.s32 1, %s20
    %p26 = scmp.ge.s32.totalorder %s25, 1
    %s27 = scalar_select %p26, 0, %s25
    %s28 = sadd.s32 1, %s19
    %s29 = scalar_select %p26, %s28, %s19
    %p30 = scmp.ge.s32.totalorder %s29, 2
    %s31 = scalar_select %p30, 0, %s29
    %s32 = ssub.s32 %s19, %s31
    %s33 = ssub.s32 %s20, %s27
    %s34 = sor.u32 %s32, %s33
    %p35 = scmp.eq.s32.totalorder %s34, 0
    %s37 = sadd.s32 %s36, 1
    %s38 = scalar_select %p35, %s36, %s37
    %p41 = pneg %p35
    %p42 = scmp.eq.s32.totalorder %s12, 1
    %p43 = por %p41, %p42
    %p44 = scmp.ne.s32.totalorder %s36, %s39
    %p45 = scmp.eq.s32.totalorder %s12, 0
    %p46 = por %p44, %p45
    %p47 = scmp.ne.s32.totalorder %s36, %s39
    %p48 = scmp.eq.s32.totalorder %s17, 1
    %p49 = por %p47, %p48
    %p50 = scmp.ne.s32.totalorder %s39, %s40
    %p51 = scmp.eq.s32.totalorder %s17, 0
    %p52 = por %p50, %p51
    %p53 = scmp.ne.s32.totalorder %s39, %s40
    %p54 = scmp.eq.s32.totalorder %s18, 1
    %p55 = por %p53, %p54
    %p57 = scmp.ne.s32.totalorder %s40, %s56
    %p58 = scmp.eq.s32.totalorder %s18, 0
    %p59 = por %p57, %p58
    %s60 = ssub.s32 %s19, %s31
    %s61 = ssub.s32 %s20, %s27
    %s62 = sor.u32 %s60, %s61
    %p63 = scmp.eq.s32.totalorder %s62, 0
    %s65 = sadd.s32 %s64, 1
    %s66 = scalar_select %p63, %s64, %s65
    %p69 = pneg %p63
    %p70 = scmp.eq.s32.totalorder %s12, 1
    %p71 = por %p69, %p70
    %p72 = scmp.ne.s32.totalorder %s64, %s67
    %p73 = scmp.eq.s32.totalorder %s12, 0
    %p74 = por %p72, %p73
    %p75 = scmp.ne.s32.totalorder %s64, %s67
    %p76 = scmp.eq.s32.totalorder %s17, 1
    %p77 = por %p75, %p76
    %p78 = scmp.ne.s32.totalorder %s67, %s68
    %p79 = scmp.eq.s32.totalorder %s17, 0
    %p80 = por %p78, %p79
    %p81 = scmp.ne.s32.totalorder %s67, %s68
    %p82 = scmp.eq.s32.totalorder %s18, 1
    %p83 = por %p81, %p82
    %p85 = scmp.ne.s32.totalorder %s68, %s84
    %p86 = scmp.eq.s32.totalorder %s18, 0
    %p87 = por %p85, %p86
    %s89 = sadd.s32 %s88, 1
    %p92 = scmp.eq.s32.totalorder %s12, 1
    %p93 = scmp.ne.s32.totalorder %s88, %s90
    %p94 = scmp.eq.s32.totalorder %s12, 0
    %p95 = por %p93, %p94
    %p96 = scmp.ne.s32.totalorder %s88, %s90
    %p97 = scmp.eq.s32.totalorder %s17, 1
    %p98 = por %p96, %p97
    %p99 = scmp.ne.s32.totalorder %s90, %s91
    %p100 = scmp.eq.s32.totalorder %s17, 0
    %p101 = por %p99, %p100
    %p102 = scmp.ne.s32.totalorder %s90, %s91
    %p103 = scmp.eq.s32.totalorder %s18, 1
    %p104 = por %p102, %p103
    %p106 = scmp.ne.s32.totalorder %s91, %s105
    %p107 = scmp.eq.s32.totalorder %s18, 0
    %p108 = por %p106, %p107
    %s110 = sadd.s32 %s109, 1
    %p113 = scmp.eq.s32.totalorder %s12, 1
    %p114 = scmp.ne.s32.totalorder %s109, %s111
    %p115 = scmp.eq.s32.totalorder %s12, 0
    %p116 = por %p114, %p115
    %p117 = scmp.ne.s32.totalorder %s109, %s111
    %p118 = scmp.eq.s32.totalorder %s17, 1
    %p119 = por %p117, %p118
    %p120 = scmp.ne.s32.totalorder %s111, %s112
    %p121 = scmp.eq.s32.totalorder %s17, 0
    %p122 = por %p120, %p121
    %p123 = scmp.ne.s32.totalorder %s111, %s112
    %p124 = scmp.eq.s32.totalorder %s18, 1
    %p125 = por %p123, %p124
    %p127 = scmp.ne.s32.totalorder %s112, %s126
    %p128 = scmp.eq.s32.totalorder %s18, 0
    %p129 = por %p127, %p128
    %s131 = sadd.s32 %s130, 1
    %p134 = scmp.eq.s32.totalorder %s12, 1
    %p135 = scmp.ne.s32.totalorder %s130, %s132
    %p136 = scmp.eq.s32.totalorder %s12, 0
    %p137 = por %p135, %p136
    %p138 = scmp.ne.s32.totalorder %s130, %s132
    %p139 = scmp.eq.s32.totalorder %s17, 1
    %p140 = por %p138, %p139
    %p141 = scmp.ne.s32.totalorder %s132, %s133
    %p142 = scmp.eq.s32.totalorder %s17, 0
    %p143 = por %p141, %p142
    %p144 = scmp.ne.s32.totalorder %s132, %s133
    %p145 = scmp.eq.s32.totalorder %s18, 1
    %p146 = por %p144, %p145
    %p148 = scmp.ne.s32.totalorder %s133, %s147
    %p149 = scmp.eq.s32.totalorder %s18, 0
    %p150 = por %p148, %p149
    %s152 = sadd.s32 %s151, 1
    %p155 = scmp.eq.s32.totalorder %s12, 1
    %p156 = scmp.ne.s32.totalorder %s151, %s153
    %p157 = scmp.eq.s32.totalorder %s12, 0
    %p158 = por %p156, %p157
    %p159 = scmp.ne.s32.totalorder %s151, %s153
    %p160 = scmp.eq.s32.totalorder %s17, 1
    %p161 = por %p159, %p160
    %p162 = scmp.ne.s32.totalorder %s153, %s154
    %p163 = scmp.eq.s32.totalorder %s17, 0
    %p164 = por %p162, %p163
    %p165 = scmp.ne.s32.totalorder %s153, %s154
    %p166 = scmp.eq.s32.totalorder %s18, 1
    %p167 = por %p165, %p166
    %p169 = scmp.ne.s32.totalorder %s154, %s168
    %p170 = scmp.eq.s32.totalorder %s18, 0
    %p171 = por %p169, %p170
    %s172 = ssub.s32 %s19, %s31
    %s173 = ssub.s32 %s20, %s27
    %s174 = sor.u32 %s172, %s173
    %p175 = scmp.eq.s32.totalorder %s174, 0
    %s177 = sadd.s32 %s176, 1
    %s178 = scalar_select %p175, %s176, %s177
    %p181 = pneg %p175
    %p182 = scmp.eq.s32.totalorder %s12, 1
    %p183 = por %p181, %p182
    %p184 = scmp.ne.s32.totalorder %s176, %s179
    %p185 = scmp.eq.s32.totalorder %s12, 0
    %p186 = por %p184, %p185
    %p187 = scmp.ne.s32.totalorder %s176, %s179
    %p188 = scmp.eq.s32.totalorder %s17, 1
    %p189 = por %p187, %p188
    %p190 = scmp.ne.s32.totalorder %s179, %s180
    %p191 = scmp.eq.s32.totalorder %s17, 0
    %p192 = por %p190, %p191
    %p193 = scmp.ne.s32.totalorder %s179, %s180
    %p194 = scmp.eq.s32.totalorder %s18, 1
    %p195 = por %p193, %p194
    %p197 = scmp.ne.s32.totalorder %s180, %s196
    %p198 = scmp.eq.s32.totalorder %s18, 0
    %p199 = por %p197, %p198
    %p200 = scmp.le.s32.totalorder 1, %s12
    %p201 = scmp.lt.s32.totalorder %s12, 3
    %p202 = pnand %p200, %p201
    %p203 = pneg %p202
    // Predicated region
    $region9: #{resnet_block_forward.5} parent=5 // pred_check
      _
    $region10: #{resnet_block_forward.5} parent=5 // pred_check_branch
      %205 = sbr.rel (%p202) target = $region12
    $region11: #{resnet_block_forward.5} parent=5 // pred_region
      %s206 = ssub.s32 %s12, 1
      // Predicated region
      $region13: #{resnet_block_forward.5} parent=11 // pred_check
        %p207 = pneg %p101
      $region14: #{resnet_block_forward.5} parent=11 // pred_check_branch
        %209 = sbr.rel (%p207) target = $region16
      $region15: #{resnet_block_forward.5} parent=11 // pred_region
        _
      $region16: #{resnet_block_forward.5} parent=11 // pred_fallthru
        _
      // Predicated region
      $region17: #{resnet_block_forward.5} parent=11 // pred_check
        %p210 = pneg %p122
      $region18: #{resnet_block_forward.5} parent=11 // pred_check_branch
        %212 = sbr.rel (%p210) target = $region20
      $region19: #{resnet_block_forward.5} parent=11 // pred_region
        _
      $region20: #{resnet_block_forward.5} parent=11 // pred_fallthru
        _
      // Predicated region
      $region21: #{resnet_block_forward.5} parent=11 // pred_check
        %p213 = pneg %p143
      $region22: #{resnet_block_forward.5} parent=11 // pred_check_branch
        %215 = sbr.rel (%p213) target = $region24
      $region23: #{resnet_block_forward.5} parent=11 // pred_region
        _
      $region24: #{resnet_block_forward.5} parent=11 // pred_fallthru
        _
      // Predicated region
      $region25: #{resnet_block_forward.5} parent=11 // pred_check
        %p216 = pneg %p164
      $region26: #{resnet_block_forward.5} parent=11 // pred_check_branch
        %218 = sbr.rel (%p216) target = $region28
      $region27: #{resnet_block_forward.5} parent=11 // pred_region
        _
      $region28: #{resnet_block_forward.5} parent=11 // pred_fallthru
        _
    $region12: #{resnet_block_forward.5} parent=5 // pred_fallthru
      _
    %p219 = scmp.lt.s32.totalorder %s12, 2
    // Predicated region
    $region29: #{resnet_block_forward.5} parent=5 // pred_check
      %p220 = pneg %p219
    $region30: #{resnet_block_forward.5} parent=5 // pred_check_branch
      %222 = sbr.rel (%p220) target = $region32
    $region31: #{resnet_block_forward.5} parent=5 // pred_region
      // Predicated region
      $region33: #{resnet_block_forward.5} parent=31 // pred_check
        %p223 = pneg %p46
      $region34: #{resnet_block_forward.5} parent=31 // pred_check_branch
        %225 = sbr.rel (%p223) target = $region36
      $region35: #{resnet_block_forward.5} parent=31 // pred_region
        %s226 = smul.u32 2, %s20
        %p227 = scmp.lt.s32.totalorder %s19, 1
        %s228 = scalar_select %p227, %s19, 1
        %p229 = scmp.lt.s32.totalorder %s226, 1
        %s230 = scalar_select %p229, %s226, 1
        %s231 = smul.addr %s228, 2
        %s232 = sadd.s32 %s230, %s231
        %s233 = smul.addr %s232, 4
        %s234 = scalar_lea.vmem %s0, %s233
        %s235 = smul.u32 2, %s20
      $region36: #{resnet_block_forward.5} parent=31 // pred_fallthru
        _
      // Predicated region
      $region37: #{resnet_block_forward.5} parent=31 // pred_check
        %p236 = pneg %p74
      $region38: #{resnet_block_forward.5} parent=31 // pred_check_branch
        %238 = sbr.rel (%p236) target = $region40
      $region39: #{resnet_block_forward.5} parent=31 // pred_region
        %s239 = smul.u32 2, %s20
        %p240 = scmp.lt.s32.totalorder %s19, 1
        %s241 = scalar_select %p240, %s19, 1
        %p242 = scmp.lt.s32.totalorder %s239, 1
        %s243 = scalar_select %p242, %s239, 1
        %s244 = smul.addr %s241, 2
        %s245 = sadd.s32 %s243, %s244
        %s246 = smul.addr %s245, 4
        %s247 = scalar_lea.vmem %s1, %s246
        %s248 = smul.u32 2, %s20
      $region40: #{resnet_block_forward.5} parent=31 // pred_fallthru
        _
    $region32: #{resnet_block_forward.5} parent=5 // pred_fallthru
      _
    %p249 = scmp.le.s32.totalorder 1, %s12
    %p250 = scmp.lt.s32.totalorder %s12, 3
    %p251 = pnand %p249, %p250
    %p252 = pneg %p251
    // Predicated region
    $region41: #{resnet_block_forward.5} parent=5 // pred_check
      _
    $region42: #{resnet_block_forward.5} parent=5 // pred_check_branch
      %254 = sbr.rel (%p251) target = $region44
    $region43: #{resnet_block_forward.5} parent=5 // pred_region
      %s255 = ssub.s32 %s12, 1
      %s256 = smul.u32 2, %s22
      %p257 = scmp.lt.s32.totalorder %s21, 1
      %s258 = scalar_select %p257, %s21, 1
      %p259 = scmp.lt.s32.totalorder %s256, 1
      %s260 = scalar_select %p259, %s256, 1
      %s261 = smul.addr %s258, 2
      %s262 = sadd.s32 %s260, %s261
      %s263 = smul.addr %s262, 4
      %s264 = scalar_lea.vmem %s0, %s263
      %p265 = pneg %p52
      %p266 = pneg %p49
      %s267 = smul.u32 2, %s22
      %p268 = scmp.lt.s32.totalorder %s21, 1
      %s269 = scalar_select %p268, %s21, 1
      %p270 = scmp.lt.s32.totalorder %s267, 1
      %s271 = scalar_select %p270, %s267, 1
      %s272 = smul.addr %s269, 2
      %s273 = sadd.s32 %s271, %s272
      %s274 = smul.addr %s273, 4
      %s275 = scalar_lea.vmem %s1, %s274
      %p276 = pneg %p80
      %p277 = pneg %p77
      %p278 = pneg %p101
      %p279 = pneg %p98
      %p280 = pneg %p122
      %p281 = pneg %p119
      %p282 = pneg %p143
      %p283 = pneg %p140
      %p284 = pneg %p164
      %p285 = pneg %p161
      %p286 = pneg %p192
      %p287 = pneg %p189
      %s288 = smul.u32 2, %s22
      %p289 = scmp.lt.s32.totalorder %s21, 1
      %s290 = scalar_select %p289, %s21, 1
      %p291 = scmp.lt.s32.totalorder %s288, 1
      %s292 = scalar_select %p291, %s288, 1
      %s293 = smul.addr %s290, 2
      %s294 = sadd.s32 %s292, %s293
      %s295 = smul.addr %s294, 8
      %s296 = scalar_lea.vmem %s6, %s295
      %s297 = smul.u32 2, %s22
      %p298 = scmp.lt.s32.totalorder %s21, 1
      %s299 = scalar_select %p298, %s21, 1
      %p300 = scmp.lt.s32.totalorder %s297, 1
      %s301 = scalar_select %p300, %s297, 1
      %s302 = smul.addr %s299, 2
      %s303 = sadd.s32 %s301, %s302
      %s304 = smul.addr %s303, 4
      %s305 = scalar_lea.vmem %s0, %s304
      %s306 = smul.u32 2, %s22
      %s307 = smul.u32 2, %s22
      %p308 = scmp.lt.s32.totalorder %s21, 1
      %s309 = scalar_select %p308, %s21, 1
      %p310 = scmp.lt.s32.totalorder %s307, 1
      %s311 = scalar_select %p310, %s307, 1
      %s312 = smul.addr %s309, 2
      %s313 = sadd.s32 %s311, %s312
      %s314 = smul.addr %s313, 4
      %s315 = scalar_lea.vmem %s1, %s314
      %s316 = smul.u32 2, %s22
      %s317 = smul.u32 2, %s22
      %p318 = scmp.lt.s32.totalorder %s21, 1
      %s319 = scalar_select %p318, %s21, 1
      %p320 = scmp.lt.s32.totalorder %s317, 1
      %s321 = scalar_select %p320, %s317, 1
      %s322 = smul.addr %s319, 2
      %s323 = sadd.s32 %s321, %s322
      %s324 = smul.addr %s323, 8
      %s325 = scalar_lea.vmem %s6, %s324
      %s326 = smul.u32 2, %s22
      %v327 = vld [vmem:[%s305] sm:$0xff]
      %v328 = vunpack.c.l.bf16 %v327
      %v329 = vunpack.c.h.bf16 %v327
      %v330 = vld [vmem:[%s2] sm:$0xff]
      %332 = vset.pattern.permute.xlu0 0
      %333 = vperm.xlu0 %332, %v330
      %v334 = vpop.permute.xlu0 %333
      %v336 = vmul.f32 %v328, %v334
      %v337 = vmul.f32 %v329, %v334
      %v338 = vld [vmem:[%s3] sm:$0xff]
      %340 = vset.pattern.permute.xlu0 0
      %341 = vperm.xlu0 %340, %v338
      %v342 = vpop.permute.xlu0 %341
      %v344 = vadd.f32 %v336, %v342
      %v345 = vadd.f32 %v337, %v342
      %v346 = vld [vmem:[%s315] sm:$0xff]
      %v347 = vunpack.c.l.bf16 %v346
      %v348 = vunpack.c.h.bf16 %v346
      %v349 = vld [vmem:[%s4] sm:$0xff]
      %351 = vset.pattern.permute.xlu0 0
      %352 = vperm.xlu0 %351, %v349
      %v353 = vpop.permute.xlu0 %352
      %v355 = vmul.f32 %v347, %v353
      %v356 = vmul.f32 %v348, %v353
      %v357 = vadd.f32 %v344, %v355
      %v358 = vadd.f32 %v345, %v356
      %v359 = vld [vmem:[%s5] sm:$0xff]
      %361 = vset.pattern.permute.xlu0 0
      %362 = vperm.xlu0 %361, %v359
      %v363 = vpop.permute.xlu0 %362
      %v365 = vadd.f32 %v357, %v363
      %v366 = vadd.f32 %v358, %v363
      %v367 = vmax.f32 %v365, 0.0
      %v368 = vmax.f32 %v366, 0.0
      %369 = vst [vmem:[%s325] sm:$0xff] %v367
      %370 = vst [vmem:[%s325 + $0x8] sm:$0xff] %v368
      %s371 = smul.u32 2, %s22
      %p372 = scmp.lt.s32.totalorder %s21, 1
      %s373 = scalar_select %p372, %s21, 1
      %p374 = scmp.lt.s32.totalorder %s371, 1
      %s375 = scalar_select %p374, %s371, 1
      %s376 = smul.addr %s373, 2
      %s377 = sadd.s32 %s375, %s376
      %s378 = smul.addr %s377, 8
      %s379 = scalar_lea.vmem %s6, %s378
      // Predicated region
      $region45: #{resnet_block_forward.5} parent=43 // pred_check
        %p380 = pneg %p189
      $region46: #{resnet_block_forward.5} parent=43 // pred_check_branch
        %382 = sbr.rel (%p380) target = $region48
      $region47: #{resnet_block_forward.5} parent=43 // pred_region
        %s383 = smul.u32 2, %s22
      $region48: #{resnet_block_forward.5} parent=43 // pred_fallthru
        _
    $region44: #{resnet_block_forward.5} parent=5 // pred_fallthru
      _
    %p384 = scmp.le.s32.totalorder 2, %s12
    // Predicated region
    $region49: #{resnet_block_forward.5} parent=5 // pred_check
      %p385 = pneg %p384
    $region50: #{resnet_block_forward.5} parent=5 // pred_check_branch
      %387 = sbr.rel (%p385) target = $region52
    $region51: #{resnet_block_forward.5} parent=5 // pred_region
      %s388 = ssub.s32 %s12, 2
      // Predicated region
      $region53: #{resnet_block_forward.5} parent=51 // pred_check
        %p389 = pneg %p195
      $region54: #{resnet_block_forward.5} parent=51 // pred_check_branch
        %391 = sbr.rel (%p389) target = $region56
      $region55: #{resnet_block_forward.5} parent=51 // pred_region
        %s392 = smul.u32 2, %s24
        %p393 = scmp.lt.s32.totalorder %s23, 1
        %s394 = scalar_select %p393, %s23, 1
        %p395 = scmp.lt.s32.totalorder %s392, 1
        %s396 = scalar_select %p395, %s392, 1
        %s397 = smul.addr %s394, 2
        %s398 = sadd.s32 %s396, %s397
        %s399 = smul.addr %s398, 8
        %s400 = scalar_lea.vmem %s6, %s399
      $region56: #{resnet_block_forward.5} parent=51 // pred_fallthru
        _
    $region52: #{resnet_block_forward.5} parent=5 // pred_fallthru
      _
  $region6: #{resnet_block_forward.5} parent=0 // loop_footer
    %s16 = sadd.s32 1, %s12
  $region7: #{resnet_block_forward.5} parent=0 // loop_footer_branch
    %11 = sbr.rel target = $region3
  $region8: #{resnet_block_forward.5} parent=0 // loop_exit
    _

// kernel: resnet_block_forward.3
$region0: #{resnet_block_forward.3}
  #allocation0 [shape = 'u32[]', space=smem, size = 0x4, offset = 0x4, fixed_abs, tag = 'smem constant byte address 0x4 - core index']
  #allocation1 [shape = 'u32[144,128]{1,0:T(1,128)}', space=vmem, size = 0x12000, scoped, tag = 'internal scratch']
  #allocation2 [shape = 'f32[18,18,4]{2,1,0:T(8,128)}', space=vmem, size = 0x36000, scoped, tag = 'scratch operand']
  %s0 = inlined_call_operand.vmem [shape: f32[2,4,256], index: 0, kind: input, shape index: {}]
  %s1 = inlined_call_operand.vmem [shape: bf16[36,8], index: 1, kind: input, shape index: {}]
  %s2 = inlined_call_operand.vmem [shape: bf16[4,8], index: 2, kind: input, shape index: {}]
  %s3 = inlined_call_operand.vmem [shape: bf16[2,8,256], index: 3, kind: output, shape index: {0}]
  %s4 = inlined_call_operand.vmem [shape: bf16[2,8,256], index: 4, kind: output, shape index: {1}]
  %s5 = inlined_call_operand.vmem [shape: f32[2,4,8], index: 5, kind: output, shape index: {2}]
  %6 = xla_tuple %s3, %s4, %s5
  %s7 = sld [smem:[#allocation0]]
  $region73: #{resnet_block_forward.3} parent=0
    _
  %s9 = ssub.s32 1, %s7
  %s10 = scalar_select 0, %s9, %s7
  loop: start=0, step=1, limit=6
  $region2: #{resnet_block_forward.3} parent=0 // loop_pre_header
    _
  $region3: #{resnet_block_forward.3} parent=0 // loop_header
    %s12 = sphi 0, %s16
    %p13 = scmp.ge.s32.totalorder %s12, 6
    %s19 = sphi 0, %s31
    %s20 = sphi 0, %s27
    %s21 = sphi 0, %s19
    %s22 = sphi 0, %s20
    %s23 = sphi 0, %s21
    %s24 = sphi 0, %s22
    %s34 = sphi 0, %s36
    %s37 = sphi 0, %s34
    %s38 = sphi 0, %s37
    %s54 = sphi 0, %s38
    %s58 = sphi 0, %s58
    %s60 = sphi 0, %s58
    %s61 = sphi 0, %s60
    %s75 = sphi 0, %s61
    %s79 = sphi 0, %s79
    %s81 = sphi 0, %s79
    %s82 = sphi 0, %s81
    %s96 = sphi 0, %s82
    %s104 = sphi 0, %s106
    %s107 = sphi 0, %s104
    %s108 = sphi 0, %s107
    %s124 = sphi 0, %s108
    %s132 = sphi 0, %s134
    %s135 = sphi 0, %s132
    %s136 = sphi 0, %s135
    %s152 = sphi 0, %s136
    %s158 = sphi 0, %s160
    %s161 = sphi 0, %s158
    %s162 = sphi 0, %s161
    %s178 = sphi 0, %s162
  $region4: #{resnet_block_forward.3} parent=0 // loop_header_branch
    %15 = sbr.rel (%p13) target = $region8
  $region5: #{resnet_block_forward.3} parent=0 // loop_body
    %s17 = ssub.s32 %s12, 1
    %s18 = ssub.s32 %s12, 2
    %s25 = sadd.s32 1, %s20
    %p26 = scmp.ge.s32.totalorder %s25, 2
    %s27 = scalar_select %p26, 0, %s25
    %s28 = sadd.s32 1, %s19
    %s29 = scalar_select %p26, %s28, %s19
    %p30 = scmp.ge.s32.totalorder %s29, 2
    %s31 = scalar_select %p30, 0, %s29
    %s32 = ssub.s32 %s19, %s31
    %p33 = scmp.eq.s32.totalorder %s32, 0
    %s35 = sadd.s32 %s34, 1
    %s36 = scalar_select %p33, %s34, %s35
    %p39 = pneg %p33
    %p40 = scmp.eq.s32.totalorder %s12, 3
    %p41 = por %p39, %p40
    %p42 = scmp.ne.s32.totalorder %s34, %s37
    %p43 = scmp.eq.s32.totalorder %s12, 0
    %p44 = por %p42, %p43
    %p45 = scmp.ne.s32.totalorder %s34, %s37
    %p46 = scmp.eq.s32.totalorder %s17, 3
    %p47 = por %p45, %p46
    %p48 = scmp.ne.s32.totalorder %s37, %s38
    %p49 = scmp.eq.s32.totalorder %s17, 0
    %p50 = por %p48, %p49
    %p51 = scmp.ne.s32.totalorder %s37, %s38
    %p52 = scmp.eq.s32.totalorder %s18, 3
    %p53 = por %p51, %p52
    %p55 = scmp.ne.s32.totalorder %s38, %s54
    %p56 = scmp.eq.s32.totalorder %s18, 0
    %p57 = por %p55, %p56
    %s59 = sadd.s32 %s58, 1
    %p62 = scmp.eq.s32.totalorder %s12, 3
    %p63 = scmp.ne.s32.totalorder %s58, %s60
    %p64 = scmp.eq.s32.totalorder %s12, 0
    %p65 = por %p63, %p64
    %p66 = scmp.ne.s32.totalorder %s58, %s60
    %p67 = scmp.eq.s32.totalorder %s17, 3
    %p68 = por %p66, %p67
    %p69 = scmp.ne.s32.totalorder %s60, %s61
    %p70 = scmp.eq.s32.totalorder %s17, 0
    %p71 = por %p69, %p70
    %p72 = scmp.ne.s32.totalorder %s60, %s61
    %p73 = scmp.eq.s32.totalorder %s18, 3
    %p74 = por %p72, %p73
    %p76 = scmp.ne.s32.totalorder %s61, %s75
    %p77 = scmp.eq.s32.totalorder %s18, 0
    %p78 = por %p76, %p77
    %s80 = sadd.s32 %s79, 1
    %p83 = scmp.eq.s32.totalorder %s12, 3
    %p84 = scmp.ne.s32.totalorder %s79, %s81
    %p85 = scmp.eq.s32.totalorder %s12, 0
    %p86 = por %p84, %p85
    %p87 = scmp.ne.s32.totalorder %s79, %s81
    %p88 = scmp.eq.s32.totalorder %s17, 3
    %p89 = por %p87, %p88
    %p90 = scmp.ne.s32.totalorder %s81, %s82
    %p91 = scmp.eq.s32.totalorder %s17, 0
    %p92 = por %p90, %p91
    %p93 = scmp.ne.s32.totalorder %s81, %s82
    %p94 = scmp.eq.s32.totalorder %s18, 3
    %p95 = por %p93, %p94
    %p97 = scmp.ne.s32.totalorder %s82, %s96
    %p98 = scmp.eq.s32.totalorder %s18, 0
    %p99 = por %p97, %p98
    %s100 = ssub.s32 %s19, %s31
    %s101 = ssub.s32 %s20, %s27
    %s102 = sor.u32 %s100, %s101
    %p103 = scmp.eq.s32.totalorder %s102, 0
    %s105 = sadd.s32 %s104, 1
    %s106 = scalar_select %p103, %s104, %s105
    %p109 = pneg %p103
    %p110 = scmp.eq.s32.totalorder %s12, 3
    %p111 = por %p109, %p110
    %p112 = scmp.ne.s32.totalorder %s104, %s107
    %p113 = scmp.eq.s32.totalorder %s12, 0
    %p114 = por %p112, %p113
    %p115 = scmp.ne.s32.totalorder %s104, %s107
    %p116 = scmp.eq.s32.totalorder %s17, 3
    %p117 = por %p115, %p116
    %p118 = scmp.ne.s32.totalorder %s107, %s108
    %p119 = scmp.eq.s32.totalorder %s17, 0
    %p120 = por %p118, %p119
    %p121 = scmp.ne.s32.totalorder %s107, %s108
    %p122 = scmp.eq.s32.totalorder %s18, 3
    %p123 = por %p121, %p122
    %p125 = scmp.ne.s32.totalorder %s108, %s124
    %p126 = scmp.eq.s32.totalorder %s18, 0
    %p127 = por %p125, %p126
    %s128 = ssub.s32 %s19, %s31
    %s129 = ssub.s32 %s20, %s27
    %s130 = sor.u32 %s128, %s129
    %p131 = scmp.eq.s32.totalorder %s130, 0
    %s133 = sadd.s32 %s132, 1
    %s134 = scalar_select %p131, %s132, %s133
    %p137 = pneg %p131
    %p138 = scmp.eq.s32.totalorder %s12, 3
    %p139 = por %p137, %p138
    %p140 = scmp.ne.s32.totalorder %s132, %s135
    %p141 = scmp.eq.s32.totalorder %s12, 0
    %p142 = por %p140, %p141
    %p143 = scmp.ne.s32.totalorder %s132, %s135
    %p144 = scmp.eq.s32.totalorder %s17, 3
    %p145 = por %p143, %p144
    %p146 = scmp.ne.s32.totalorder %s135, %s136
    %p147 = scmp.eq.s32.totalorder %s17, 0
    %p148 = por %p146, %p147
    %p149 = scmp.ne.s32.totalorder %s135, %s136
    %p150 = scmp.eq.s32.totalorder %s18, 3
    %p151 = por %p149, %p150
    %p153 = scmp.ne.s32.totalorder %s136, %s152
    %p154 = scmp.eq.s32.totalorder %s18, 0
    %p155 = por %p153, %p154
    %s156 = ssub.s32 %s19, %s31
    %p157 = scmp.eq.s32.totalorder %s156, 0
    %s159 = sadd.s32 %s158, 1
    %s160 = scalar_select %p157, %s158, %s159
    %p163 = pneg %p157
    %p164 = scmp.eq.s32.totalorder %s12, 3
    %p165 = por %p163, %p164
    %p166 = scmp.ne.s32.totalorder %s158, %s161
    %p167 = scmp.eq.s32.totalorder %s12, 0
    %p168 = por %p166, %p167
    %p169 = scmp.ne.s32.totalorder %s158, %s161
    %p170 = scmp.eq.s32.totalorder %s17, 3
    %p171 = por %p169, %p170
    %p172 = scmp.ne.s32.totalorder %s161, %s162
    %p173 = scmp.eq.s32.totalorder %s17, 0
    %p174 = por %p172, %p173
    %p175 = scmp.ne.s32.totalorder %s161, %s162
    %p176 = scmp.eq.s32.totalorder %s18, 3
    %p177 = por %p175, %p176
    %p179 = scmp.ne.s32.totalorder %s162, %s178
    %p180 = scmp.eq.s32.totalorder %s18, 0
    %p181 = por %p179, %p180
    %p182 = scmp.le.s32.totalorder 1, %s12
    %p183 = scmp.lt.s32.totalorder %s12, 5
    %p184 = pnand %p182, %p183
    %p185 = pneg %p184
    // Predicated region
    $region9: #{resnet_block_forward.3} parent=5 // pred_check
      _
    $region10: #{resnet_block_forward.3} parent=5 // pred_check_branch
      %187 = sbr.rel (%p184) target = $region12
    $region11: #{resnet_block_forward.3} parent=5 // pred_region
      %s188 = ssub.s32 %s12, 1
      // Predicated region
      $region13: #{resnet_block_forward.3} parent=11 // pred_check
        %p189 = pneg %p71
      $region14: #{resnet_block_forward.3} parent=11 // pred_check_branch
        %191 = sbr.rel (%p189) target = $region16
      $region15: #{resnet_block_forward.3} parent=11 // pred_region
        _
      $region16: #{resnet_block_forward.3} parent=11 // pred_fallthru
        _
      // Predicated region
      $region17: #{resnet_block_forward.3} parent=11 // pred_check
        %p192 = pneg %p92
      $region18: #{resnet_block_forward.3} parent=11 // pred_check_branch
        %194 = sbr.rel (%p192) target = $region20
      $region19: #{resnet_block_forward.3} parent=11 // pred_region
        _
      $region20: #{resnet_block_forward.3} parent=11 // pred_fallthru
        _
    $region12: #{resnet_block_forward.3} parent=5 // pred_fallthru
      _
    %p195 = scmp.lt.s32.totalorder %s12, 4
    // Predicated region
    $region21: #{resnet_block_forward.3} parent=5 // pred_check
      %p196 = pneg %p195
    $region22: #{resnet_block_forward.3} parent=5 // pred_check_branch
      %198 = sbr.rel (%p196) target = $region24
    $region23: #{resnet_block_forward.3} parent=5 // pred_region
      // Predicated region
      $region25: #{resnet_block_forward.3} parent=23 // pred_check
        %p199 = pneg %p44
      $region26: #{resnet_block_forward.3} parent=23 // pred_check_branch
        %201 = sbr.rel (%p199) target = $region28
      $region27: #{resnet_block_forward.3} parent=23 // pred_region
        %p202 = scmp.lt.s32.totalorder %s19, 1
        %s203 = scalar_select %p202, %s19, 1
        %s204 = smul.addr %s203, 2
        %s205 = smul.addr %s204, 4
        %s206 = scalar_lea.vmem %s0, %s205
      $region28: #{resnet_block_forward.3} parent=23 // pred_fallthru
        _
    $region24: #{resnet_block_forward.3} parent=5 // pred_fallthru
      _
    %p207 = scmp.le.s32.totalorder 1, %s12
    %p208 = scmp.lt.s32.totalorder %s12, 5
    %p209 = pnand %p207, %p208
    %p210 = pneg %p209
    // Predicated region
    $region29: #{resnet_block_forward.3} parent=5 // pred_check
      _
    $region30: #{resnet_block_forward.3} parent=5 // pred_check_branch
      %212 = sbr.rel (%p209) target = $region32
    $region31: #{resnet_block_forward.3} parent=5 // pred_region
      %s213 = ssub.s32 %s12, 1
      %p214 = scmp.lt.s32.totalorder %s21, 1
      %s215 = scalar_select %p214, %s21, 1
      %s216 = smul.addr %s215, 2
      %s217 = smul.addr %s216, 4
      %s218 = scalar_lea.vmem %s0, %s217
      %p219 = pneg %p50
      %p220 = pneg %p47
      %p221 = pneg %p71
      %p222 = pneg %p68
      %p223 = pneg %p92
      %p224 = pneg %p89
      %p225 = pneg %p120
      %p226 = pneg %p117
      %p227 = scmp.lt.s32.totalorder %s21, 1
      %s228 = scalar_select %p227, %s21, 1
      %p229 = scmp.lt.s32.totalorder %s22, 1
      %s230 = scalar_select %p229, %s22, 1
      %s231 = smul.addr %s228, 2
      %s232 = sadd.s32 %s230, %s231
      %s233 = smul.addr %s232, 4
      %s234 = scalar_lea.vmem %s3, %s233
      %p235 = pneg %p148
      %p236 = pneg %p145
      %p237 = scmp.lt.s32.totalorder %s21, 1
      %s238 = scalar_select %p237, %s21, 1
      %p239 = scmp.lt.s32.totalorder %s22, 1
      %s240 = scalar_select %p239, %s22, 1
      %s241 = smul.addr %s238, 2
      %s242 = sadd.s32 %s240, %s241
      %s243 = smul.addr %s242, 4
      %s244 = scalar_lea.vmem %s4, %s243
      %p245 = pneg %p174
      %p246 = pneg %p171
      %p247 = scmp.lt.s32.totalorder %s21, 1
      %s248 = scalar_select %p247, %s21, 1
      %s249 = smul.addr %s248, 4
      %s250 = scalar_lea.vmem %s5, %s249
      %p251 = scmp.lt.s32.totalorder %s21, 1
      %s252 = scalar_select %p251, %s21, 1
      %s253 = smul.addr %s252, 2
      %s254 = smul.addr %s253, 4
      %s255 = scalar_lea.vmem %s0, %s254
      %p256 = scmp.lt.s32.totalorder %s21, 1
      %s257 = scalar_select %p256, %s21, 1
      %p258 = scmp.lt.s32.totalorder %s22, 1
      %s259 = scalar_select %p258, %s22, 1
      %s260 = smul.addr %s257, 2
      %s261 = sadd.s32 %s259, %s260
      %s262 = smul.addr %s261, 4
      %s263 = scalar_lea.vmem %s3, %s262
      %p264 = scmp.lt.s32.totalorder %s21, 1
      %s265 = scalar_select %p264, %s21, 1
      %p266 = scmp.lt.s32.totalorder %s22, 1
      %s267 = scalar_select %p266, %s22, 1
      %s268 = smul.addr %s265, 2
      %s269 = sadd.s32 %s267, %s268
      %s270 = smul.addr %s269, 4
      %s271 = scalar_lea.vmem %s4, %s270
      %p272 = scmp.lt.s32.totalorder %s21, 1
      %s273 = scalar_select %p272, %s21, 1
      %s274 = smul.addr %s273, 4
      %s275 = scalar_lea.vmem %s5, %s274
      %p277 = scmp.eq.s32.totalorder %s22, 0
      // Predicated region
      $region33: #{resnet_block_forward.3} parent=31 // pred_check
        %p278 = pneg %p277
      $region34: #{resnet_block_forward.3} parent=31 // pred_check_branch
        %280 = sbr.rel (%p278) target = $region36
      $region35: #{resnet_block_forward.3} parent=31 // pred_region
        %v281 = vld [vmem:[%s255] sm:$0xff]
        %v283 = vcombine.high %v281, %v281
        %285 = vxpose.xlu0.b32.start [1/16] %v281, 128
        %286 = vxpose.xlu0.b32.cont [2/16] 0.0, 128
        %287 = vxpose.xlu0.b32.cont [3/16] 0.0, 128
        %288 = vxpose.xlu0.b32.cont [4/16] 0.0, 128
        %289 = vxpose.xlu0.b32.cont [5/16] 0.0, 128
        %290 = vxpose.xlu0.b32.cont [6/16] 0.0, 128
        %291 = vxpose.xlu0.b32.cont [7/16] 0.0, 128
        %292 = vxpose.xlu0.b32.cont [8/16] 0.0, 128
        %293 = vxpose.xlu0.b32.cont [9/16] 0.0, 128
        %294 = vxpose.xlu0.b32.cont [10/16] 0.0, 128
        %295 = vxpose.xlu0.b32.cont [11/16] 0.0, 128
        %296 = vxpose.xlu0.b32.cont [12/16] 0.0, 128
        %297 = vxpose.xlu0.b32.cont [13/16] 0.0, 128
        %298 = vxpose.xlu0.b32.cont [14/16] 0.0, 128
        %299 = vxpose.xlu0.b32.cont [15/16] 0.0, 128
        %300 = vxpose.xlu0.b32.end [16/16] 0.0, 128
        %v301 = vpop.trf.xlu0
        %v302 = vpop.trf.xlu0
        %v303 = vpop.trf.xlu0
        %v304 = vpop.trf.xlu0
        %v305 = vpop.trf.xlu0
        %v306 = vpop.trf.xlu0
        %v307 = vpop.trf.xlu0
        %v308 = vpop.trf.xlu0
        %v309 = vpop.trf.xlu0
        %v310 = vpop.trf.xlu0
        %v311 = vpop.trf.xlu0
        %v312 = vpop.trf.xlu0
        %v313 = vpop.trf.xlu0
        %v314 = vpop.trf.xlu0
        %v315 = vpop.trf.xlu0
        %v316 = vpop.trf.xlu0
        %317 = vxpose.xlu0.b32.start [1/16] %v283, 128
        %318 = vxpose.xlu0.b32.cont [2/16] 0.0, 128
        %319 = vxpose.xlu0.b32.cont [3/16] 0.0, 128
        %320 = vxpose.xlu0.b32.cont [4/16] 0.0, 128
        %321 = vxpose.xlu0.b32.cont [5/16] 0.0, 128
        %322 = vxpose.xlu0.b32.cont [6/16] 0.0, 128
        %323 = vxpose.xlu0.b32.cont [7/16] 0.0, 128
        %324 = vxpose.xlu0.b32.cont [8/16] 0.0, 128
        %325 = vxpose.xlu0.b32.cont [9/16] 0.0, 128
        %326 = vxpose.xlu0.b32.cont [10/16] 0.0, 128
        %327 = vxpose.xlu0.b32.cont [11/16] 0.0, 128
        %328 = vxpose.xlu0.b32.cont [12/16] 0.0, 128
        %329 = vxpose.xlu0.b32.cont [13/16] 0.0, 128
        %330 = vxpose.xlu0.b32.cont [14/16] 0.0, 128
        %331 = vxpose.xlu0.b32.cont [15/16] 0.0, 128
        %332 = vxpose.xlu0.b32.end [16/16] 0.0, 128
        %v333 = vpop.trf.xlu0
        %v334 = vpop.trf.xlu0
        %v335 = vpop.trf.xlu0
        %v336 = vpop.trf.xlu0
        %v337 = vpop.trf.xlu0
        %v338 = vpop.trf.xlu0
        %v339 = vpop.trf.xlu0
        %v340 = vpop.trf.xlu0
        %v341 = vpop.trf.xlu0
        %v342 = vpop.trf.xlu0
        %v343 = vpop.trf.xlu0
        %v344 = vpop.trf.xlu0
        %v345 = vpop.trf.xlu0
        %v346 = vpop.trf.xlu0
        %v347 = vpop.trf.xlu0
        %v348 = vpop.trf.xlu0
        %s349 = scalar_lea.vmem [#allocation2], 24
        %vm350 = vcmask 31744
        %351 = vst.msk [vmem:[%s349 + $0x1] sm:$0xff] %vm350, %v301
        %352 = vst.msk [vmem:[%s349 + $0x9] sm:$0xff] %vm350, %v302
        %353 = vst.msk [vmem:[%s349 + $0x19] sm:$0xff] %vm350, %v303
        %354 = vst.msk [vmem:[%s349 + $0x21] sm:$0xff] %vm350, %v304
        %355 = vst.msk [vmem:[%s349 + $0x31] sm:$0xff] %vm350, %v305
        %356 = vst.msk [vmem:[%s349 + $0x39] sm:$0xff] %vm350, %v306
        %357 = vst.msk [vmem:[%s349 + $0x49] sm:$0xff] %vm350, %v307
        %358 = vst.msk [vmem:[%s349 + $0x51] sm:$0xff] %vm350, %v308
        %359 = vst.msk [vmem:[%s349 + $0x61] sm:$0xff] %vm350, %v309
        %360 = vst.msk [vmem:[%s349 + $0x69] sm:$0xff] %vm350, %v310
        %361 = vst.msk [vmem:[%s349 + $0x79] sm:$0xff] %vm350, %v311
        %362 = vst.msk [vmem:[%s349 + $0x81] sm:$0xff] %vm350, %v312
        %363 = vst.msk [vmem:[%s349 + $0x91] sm:$0xff] %vm350, %v313
        %364 = vst.msk [vmem:[%s349 + $0x99] sm:$0xff] %vm350, %v314
        %365 = vst.msk [vmem:[%s349 + $0xa9] sm:$0xff] %vm350, %v315
        %366 = vst.msk [vmem:[%s349 + $0xb1] sm:$0xff] %vm350, %v316
        %367 = vst.msk [vmem:[%s349 + $0xc1] sm:$0xff] %vm350, %v333
        %368 = vst.msk [vmem:[%s349 + $0xc9] sm:$0xff] %vm350, %v334
        %369 = vst.msk [vmem:[%s349 + $0xd9] sm:$0xff] %vm350, %v335
        %370 = vst.msk [vmem:[%s349 + $0xe1] sm:$0xff] %vm350, %v336
        %371 = vst.msk [vmem:[%s349 + $0xf1] sm:$0xff] %vm350, %v337
        %372 = vst.msk [vmem:[%s349 + $0xf9] sm:$0xff] %vm350, %v338
        %373 = vst.msk [vmem:[%s349 + $0x109] sm:$0xff] %vm350, %v339
        %374 = vst.msk [vmem:[%s349 + $0x111] sm:$0xff] %vm350, %v340
        %375 = vst.msk [vmem:[%s349 + $0x121] sm:$0xff] %vm350, %v341
        %376 = vst.msk [vmem:[%s349 + $0x129] sm:$0xff] %vm350, %v342
        %377 = vst.msk [vmem:[%s349 + $0x139] sm:$0xff] %vm350, %v343
        %378 = vst.msk [vmem:[%s349 + $0x141] sm:$0xff] %vm350, %v344
        %379 = vst.msk [vmem:[%s349 + $0x151] sm:$0xff] %vm350, %v345
        %380 = vst.msk [vmem:[%s349 + $0x159] sm:$0xff] %vm350, %v346
        %381 = vst.msk [vmem:[%s349 + $0x169] sm:$0xff] %vm350, %v347
        %382 = vst.msk [vmem:[%s349 + $0x171] sm:$0xff] %vm350, %v348
        %383 = vst.msk [vmem:[#allocation2] sm:$0xff] %vm350, 0.0
        %384 = vst.msk [vmem:[#allocation2 + $0x8] sm:$0xff] %vm350, 0.0
        %vm385 = vcmask 25600
        %386 = vst.msk [vmem:[#allocation2 + $0x10] sm:$0x3] %vm385, 0.0
        %s387 = scalar_lea.vmem [#allocation2], 408
        %388 = vst.msk [vmem:[%s387] sm:$0xff] %vm350, 0.0
        %389 = vst.msk [vmem:[%s387 + $0x8] sm:$0xff] %vm350, 0.0
        %390 = vst.msk [vmem:[%s387 + $0x10] sm:$0x3] %vm385, 0.0
        %vm391 = vcmask 24576
        %392 = vst.msk [vmem:[#allocation2] sm:$0x1] %vm391, 0.0
        %393 = vst.msk [vmem:[#allocation2 + $0x18] sm:$0x1] %vm391, 0.0
        %394 = vst.msk [vmem:[#allocation2 + $0x30] sm:$0x1] %vm391, 0.0
        %395 = vst.msk [vmem:[#allocation2 + $0x48] sm:$0x1] %vm391, 0.0
        %396 = vst.msk [vmem:[#allocation2 + $0x60] sm:$0x1] %vm391, 0.0
        %397 = vst.msk [vmem:[#allocation2 + $0x78] sm:$0x1] %vm391, 0.0
        %398 = vst.msk [vmem:[#allocation2 + $0x90] sm:$0x1] %vm391, 0.0
        %399 = vst.msk [vmem:[#allocation2 + $0xa8] sm:$0x1] %vm391, 0.0
        %400 = vst.msk [vmem:[#allocation2 + $0xc0] sm:$0x1] %vm391, 0.0
        %401 = vst.msk [vmem:[#allocation2 + $0xd8] sm:$0x1] %vm391, 0.0
        %402 = vst.msk [vmem:[#allocation2 + $0xf0] sm:$0x1] %vm391, 0.0
        %403 = vst.msk [vmem:[#allocation2 + $0x108] sm:$0x1] %vm391, 0.0
        %404 = vst.msk [vmem:[#allocation2 + $0x120] sm:$0x1] %vm391, 0.0
        %405 = vst.msk [vmem:[#allocation2 + $0x138] sm:$0x1] %vm391, 0.0
        %406 = vst.msk [vmem:[#allocation2 + $0x150] sm:$0x1] %vm391, 0.0
        %407 = vst.msk [vmem:[#allocation2 + $0x168] sm:$0x1] %vm391, 0.0
        %408 = vst.msk [vmem:[#allocation2 + $0x180] sm:$0x1] %vm391, 0.0
        %409 = vst.msk [vmem:[#allocation2 + $0x198] sm:$0x1] %vm391, 0.0
        %410 = vst.msk [vmem:[#allocation2 + $0x11] sm:$0x1] %vm391, 0.0
        %411 = vst.msk [vmem:[#allocation2 + $0x29] sm:$0x1] %vm391, 0.0
        %412 = vst.msk [vmem:[#allocation2 + $0x41] sm:$0x1] %vm391, 0.0
        %413 = vst.msk [vmem:[#allocation2 + $0x59] sm:$0x1] %vm391, 0.0
        %414 = vst.msk [vmem:[#allocation2 + $0x71] sm:$0x1] %vm391, 0.0
        %415 = vst.msk [vmem:[#allocation2 + $0x89] sm:$0x1] %vm391, 0.0
        %416 = vst.msk [vmem:[#allocation2 + $0xa1] sm:$0x1] %vm391, 0.0
        %417 = vst.msk [vmem:[#allocation2 + $0xb9] sm:$0x1] %vm391, 0.0
        %418 = vst.msk [vmem:[#allocation2 + $0xd1] sm:$0x1] %vm391, 0.0
        %419 = vst.msk [vmem:[#allocation2 + $0xe9] sm:$0x1] %vm391, 0.0
        %420 = vst.msk [vmem:[#allocation2 + $0x101] sm:$0x1] %vm391, 0.0
        %421 = vst.msk [vmem:[#allocation2 + $0x119] sm:$0x1] %vm391, 0.0
        %422 = vst.msk [vmem:[#allocation2 + $0x131] sm:$0x1] %vm391, 0.0
        %423 = vst.msk [vmem:[#allocation2 + $0x149] sm:$0x1] %vm391, 0.0
        %424 = vst.msk [vmem:[#allocation2 + $0x161] sm:$0x1] %vm391, 0.0
        %425 = vst.msk [vmem:[#allocation2 + $0x179] sm:$0x1] %vm391, 0.0
        %426 = vst.msk [vmem:[#allocation2 + $0x191] sm:$0x1] %vm391, 0.0
        %427 = vst.msk [vmem:[#allocation2 + $0x1a9] sm:$0x1] %vm391, 0.0
      $region36: #{resnet_block_forward.3} parent=31 // pred_fallthru
        _
      %s428 = smul.u32 %s22, 8
      %s429 = smul.u32 %s428, 24
      %s430 = scalar_lea.vmem [#allocation2], %s429
      %v431 = vld [vmem:[%s430] sm:$0xff]
      %v432 = vld [vmem:[%s430 + $0x8] sm:$0xff]
      %v433 = vld [vmem:[%s430 + $0x10] sm:$0x3]
      %v434 = vld [vmem:[%s430 + $0x18] sm:$0xff]
      %v435 = vld [vmem:[%s430 + $0x20] sm:$0xff]
      %v436 = vld [vmem:[%s430 + $0x28] sm:$0x3]
      %v437 = vld [vmem:[%s430 + $0x30] sm:$0xff]
      %v438 = vld [vmem:[%s430 + $0x38] sm:$0xff]
      %v439 = vld [vmem:[%s430 + $0x40] sm:$0x3]
      %v440 = vld [vmem:[%s430 + $0x48] sm:$0xff]
      %v441 = vld [vmem:[%s430 + $0x50] sm:$0xff]
      %v442 = vld [vmem:[%s430 + $0x58] sm:$0x3]
      %v443 = vld [vmem:[%s430 + $0x60] sm:$0xff]
      %v444 = vld [vmem:[%s430 + $0x68] sm:$0xff]
      %v445 = vld [vmem:[%s430 + $0x70] sm:$0x3]
      %v446 = vld [vmem:[%s430 + $0x78] sm:$0xff]
      %v447 = vld [vmem:[%s430 + $0x80] sm:$0xff]
      %v448 = vld [vmem:[%s430 + $0x88] sm:$0x3]
      %v449 = vld [vmem:[%s430 + $0x90] sm:$0xff]
      %v450 = vld [vmem:[%s430 + $0x98] sm:$0xff]
      %v451 = vld [vmem:[%s430 + $0xa0] sm:$0x3]
      %v452 = vld [vmem:[%s430 + $0xa8] sm:$0xff]
      %v453 = vld [vmem:[%s430 + $0xb0] sm:$0xff]
      %v454 = vld [vmem:[%s430 + $0xb8] sm:$0x3]
      %v455 = vld [vmem:[%s430 + $0xc0] sm:$0xff]
      %v456 = vld [vmem:[%s430 + $0xc8] sm:$0xff]
      %v457 = vld [vmem:[%s430 + $0xd0] sm:$0x3]
      %v458 = vld [vmem:[%s430 + $0xd8] sm:$0xff]
      %v459 = vld [vmem:[%s430 + $0xe0] sm:$0xff]
      %v460 = vld [vmem:[%s430 + $0xe8] sm:$0x3]
      %vm485 = vcmask 1046528
      %v486 = vrot.slane %v431, 1
      %v487 = vrot.slane %v432, 1
      %v488 = vsel %vm485, %v486, %v487
      %v489 = vrot.slane %v433, 1
      %v490 = vsel %vm485, %v487, %v489
      %v491 = vrot.slane %v434, 1
      %v492 = vrot.slane %v435, 1
      %v493 = vsel %vm485, %v491, %v492
      %v494 = vrot.slane %v436, 1
      %v495 = vsel %vm485, %v492, %v494
      %v496 = vrot.slane %v437, 1
      %v497 = vrot.slane %v438, 1
      %v498 = vsel %vm485, %v496, %v497
      %v499 = vrot.slane %v439, 1
      %v500 = vsel %vm485, %v497, %v499
      %v501 = vrot.slane %v440, 1
      %v502 = vrot.slane %v441, 1
      %v503 = vsel %vm485, %v501, %v502
      %v504 = vrot.slane %v442, 1
      %v505 = vsel %vm485, %v502, %v504
      %v506 = vrot.slane %v443, 1
      %v507 = vrot.slane %v444, 1
      %v508 = vsel %vm485, %v506, %v507
      %v509 = vrot.slane %v445, 1
      %v510 = vsel %vm485, %v507, %v509
      %v511 = vrot.slane %v446, 1
      %v512 = vrot.slane %v447, 1
      %v513 = vsel %vm485, %v511, %v512
      %v514 = vrot.slane %v448, 1
      %v515 = vsel %vm485, %v512, %v514
      %v516 = vrot.slane %v449, 1
      %v517 = vrot.slane %v450, 1
      %v518 = vsel %vm485, %v516, %v517
      %v519 = vrot.slane %v451, 1
      %v520 = vsel %vm485, %v517, %v519
      %v521 = vrot.slane %v452, 1
      %v522 = vrot.slane %v453, 1
      %v523 = vsel %vm485, %v521, %v522
      %v524 = vrot.slane %v454, 1
      %v525 = vsel %vm485, %v522, %v524
      %526 = vrot.lane.b32.xlu0 %v488, 4
      %v527 = vpop.permute.xlu0 %526
      %528 = vrot.lane.b32.xlu0 %v490, 4
      %v529 = vpop.permute.xlu0 %528
      %530 = vrot.lane.b32.xlu0 %v493, 4
      %v531 = vpop.permute.xlu0 %530
      %532 = vrot.lane.b32.xlu0 %v495, 4
      %v533 = vpop.permute.xlu0 %532
      %534 = vrot.lane.b32.xlu0 %v498, 4
      %v535 = vpop.permute.xlu0 %534
      %536 = vrot.lane.b32.xlu0 %v500, 4
      %v537 = vpop.permute.xlu0 %536
      %538 = vrot.lane.b32.xlu0 %v503, 4
      %v539 = vpop.permute.xlu0 %538
      %540 = vrot.lane.b32.xlu0 %v505, 4
      %v541 = vpop.permute.xlu0 %540
      %542 = vrot.lane.b32.xlu0 %v508, 4
      %v543 = vpop.permute.xlu0 %542
      %544 = vrot.lane.b32.xlu0 %v510, 4
      %v545 = vpop.permute.xlu0 %544
      %546 = vrot.lane.b32.xlu0 %v513, 4
      %v547 = vpop.permute.xlu0 %546
      %548 = vrot.lane.b32.xlu0 %v515, 4
      %v549 = vpop.permute.xlu0 %548
      %550 = vrot.lane.b32.xlu0 %v518, 4
      %v551 = vpop.permute.xlu0 %550
      %552 = vrot.lane.b32.xlu0 %v520, 4
      %v553 = vpop.permute.xlu0 %552
      %554 = vrot.lane.b32.xlu0 %v523, 4
      %v555 = vpop.permute.xlu0 %554
      %556 = vrot.lane.b32.xlu0 %v525, 4
      %v557 = vpop.permute.xlu0 %556
      %vm574 = vcmask 1045504
      %v575 = vrot.slane %v431, 2
      %v576 = vrot.slane %v432, 2
      %v577 = vsel %vm574, %v575, %v576
      %v578 = vrot.slane %v433, 2
      %v579 = vsel %vm574, %v576, %v578
      %v580 = vrot.slane %v434, 2
      %v581 = vrot.slane %v435, 2
      %v582 = vsel %vm574, %v580, %v581
      %v583 = vrot.slane %v436, 2
      %v584 = vsel %vm574, %v581, %v583
      %v585 = vrot.slane %v437, 2
      %v586 = vrot.slane %v438, 2
      %v587 = vsel %vm574, %v585, %v586
      %v588 = vrot.slane %v439, 2
      %v589 = vsel %vm574, %v586, %v588
      %v590 = vrot.slane %v440, 2
      %v591 = vrot.slane %v441, 2
      %v592 = vsel %vm574, %v590, %v591
      %v593 = vrot.slane %v442, 2
      %v594 = vsel %vm574, %v591, %v593
      %v595 = vrot.slane %v443, 2
      %v596 = vrot.slane %v444, 2
      %v597 = vsel %vm574, %v595, %v596
      %v598 = vrot.slane %v445, 2
      %v599 = vsel %vm574, %v596, %v598
      %v600 = vrot.slane %v446, 2
      %v601 = vrot.slane %v447, 2
      %v602 = vsel %vm574, %v600, %v601
      %v603 = vrot.slane %v448, 2
      %v604 = vsel %vm574, %v601, %v603
      %v605 = vrot.slane %v449, 2
      %v606 = vrot.slane %v450, 2
      %v607 = vsel %vm574, %v605, %v606
      %v608 = vrot.slane %v451, 2
      %v609 = vsel %vm574, %v606, %v608
      %v610 = vrot.slane %v452, 2
      %v611 = vrot.slane %v453, 2
      %v612 = vsel %vm574, %v610, %v611
      %v613 = vrot.slane %v454, 2
      %v614 = vsel %vm574, %v611, %v613
      %615 = vrot.lane.b32.xlu0 %v577, 8
      %v616 = vpop.permute.xlu0 %615
      %617 = vrot.lane.b32.xlu0 %v579, 8
      %v618 = vpop.permute.xlu0 %617
      %619 = vrot.lane.b32.xlu0 %v582, 8
      %v620 = vpop.permute.xlu0 %619
      %621 = vrot.lane.b32.xlu0 %v584, 8
      %v622 = vpop.permute.xlu0 %621
      %623 = vrot.lane.b32.xlu0 %v587, 8
      %v624 = vpop.permute.xlu0 %623
      %625 = vrot.lane.b32.xlu0 %v589, 8
      %v626 = vpop.permute.xlu0 %625
      %627 = vrot.lane.b32.xlu0 %v592, 8
      %v628 = vpop.permute.xlu0 %627
      %629 = vrot.lane.b32.xlu0 %v594, 8
      %v630 = vpop.permute.xlu0 %629
      %631 = vrot.lane.b32.xlu0 %v597, 8
      %v632 = vpop.permute.xlu0 %631
      %633 = vrot.lane.b32.xlu0 %v599, 8
      %v634 = vpop.permute.xlu0 %633
      %635 = vrot.lane.b32.xlu0 %v602, 8
      %v636 = vpop.permute.xlu0 %635
      %637 = vrot.lane.b32.xlu0 %v604, 8
      %v638 = vpop.permute.xlu0 %637
      %639 = vrot.lane.b32.xlu0 %v607, 8
      %v640 = vpop.permute.xlu0 %639
      %641 = vrot.lane.b32.xlu0 %v609, 8
      %v642 = vpop.permute.xlu0 %641
      %643 = vrot.lane.b32.xlu0 %v612, 8
      %v644 = vpop.permute.xlu0 %643
      %645 = vrot.lane.b32.xlu0 %v614, 8
      %v646 = vpop.permute.xlu0 %645
      %665 = vrot.lane.b32.xlu0 %v434, 12
      %v666 = vpop.permute.xlu0 %665
      %667 = vrot.lane.b32.xlu0 %v435, 12
      %v668 = vpop.permute.xlu0 %667
      %669 = vrot.lane.b32.xlu0 %v437, 12
      %v670 = vpop.permute.xlu0 %669
      %671 = vrot.lane.b32.xlu0 %v438, 12
      %v672 = vpop.permute.xlu0 %671
      %673 = vrot.lane.b32.xlu0 %v440, 12
      %v674 = vpop.permute.xlu0 %673
      %675 = vrot.lane.b32.xlu0 %v441, 12
      %v676 = vpop.permute.xlu0 %675
      %677 = vrot.lane.b32.xlu0 %v443, 12
      %v678 = vpop.permute.xlu0 %677
      %679 = vrot.lane.b32.xlu0 %v444, 12
      %v680 = vpop.permute.xlu0 %679
      %681 = vrot.lane.b32.xlu0 %v446, 12
      %v682 = vpop.permute.xlu0 %681
      %683 = vrot.lane.b32.xlu0 %v447, 12
      %v684 = vpop.permute.xlu0 %683
      %685 = vrot.lane.b32.xlu0 %v449, 12
      %v686 = vpop.permute.xlu0 %685
      %687 = vrot.lane.b32.xlu0 %v450, 12
      %v688 = vpop.permute.xlu0 %687
      %689 = vrot.lane.b32.xlu0 %v452, 12
      %v690 = vpop.permute.xlu0 %689
      %691 = vrot.lane.b32.xlu0 %v453, 12
      %v692 = vpop.permute.xlu0 %691
      %693 = vrot.lane.b32.xlu0 %v455, 12
      %v694 = vpop.permute.xlu0 %693
      %695 = vrot.lane.b32.xlu0 %v456, 12
      %v696 = vpop.permute.xlu0 %695
      %v714 = vrot.slane %v455, 1
      %v715 = vrot.slane %v456, 1
      %v716 = vsel %vm485, %v714, %v715
      %v717 = vrot.slane %v457, 1
      %v718 = vsel %vm485, %v715, %v717
      %719 = vrot.lane.b32.xlu0 %v493, 16
      %v720 = vpop.permute.xlu0 %719
      %721 = vrot.lane.b32.xlu0 %v495, 16
      %v722 = vpop.permute.xlu0 %721
      %723 = vrot.lane.b32.xlu0 %v498, 16
      %v724 = vpop.permute.xlu0 %723
      %725 = vrot.lane.b32.xlu0 %v500, 16
      %v726 = vpop.permute.xlu0 %725
      %727 = vrot.lane.b32.xlu0 %v503, 16
      %v728 = vpop.permute.xlu0 %727
      %729 = vrot.lane.b32.xlu0 %v505, 16
      %v730 = vpop.permute.xlu0 %729
      %731 = vrot.lane.b32.xlu0 %v508, 16
      %v732 = vpop.permute.xlu0 %731
      %733 = vrot.lane.b32.xlu0 %v510, 16
      %v734 = vpop.permute.xlu0 %733
      %735 = vrot.lane.b32.xlu0 %v513, 16
      %v736 = vpop.permute.xlu0 %735
      %737 = vrot.lane.b32.xlu0 %v515, 16
      %v738 = vpop.permute.xlu0 %737
      %739 = vrot.lane.b32.xlu0 %v518, 16
      %v740 = vpop.permute.xlu0 %739
      %741 = vrot.lane.b32.xlu0 %v520, 16
      %v742 = vpop.permute.xlu0 %741
      %743 = vrot.lane.b32.xlu0 %v523, 16
      %v744 = vpop.permute.xlu0 %743
      %745 = vrot.lane.b32.xlu0 %v525, 16
      %v746 = vpop.permute.xlu0 %745
      %747 = vrot.lane.b32.xlu0 %v716, 16
      %v748 = vpop.permute.xlu0 %747
      %749 = vrot.lane.b32.xlu0 %v718, 16
      %v750 = vpop.permute.xlu0 %749
      %v767 = vrot.slane %v455, 2
      %v768 = vrot.slane %v456, 2
      %v769 = vsel %vm574, %v767, %v768
      %v770 = vrot.slane %v457, 2
      %v771 = vsel %vm574, %v768, %v770
      %772 = vrot.lane.b32.xlu0 %v582, 20
      %v773 = vpop.permute.xlu0 %772
      %774 = vrot.lane.b32.xlu0 %v584, 20
      %v775 = vpop.permute.xlu0 %774
      %776 = vrot.lane.b32.xlu0 %v587, 20
      %v777 = vpop.permute.xlu0 %776
      %778 = vrot.lane.b32.xlu0 %v589, 20
      %v779 = vpop.permute.xlu0 %778
      %780 = vrot.lane.b32.xlu0 %v592, 20
      %v781 = vpop.permute.xlu0 %780
      %782 = vrot.lane.b32.xlu0 %v594, 20
      %v783 = vpop.permute.xlu0 %782
      %784 = vrot.lane.b32.xlu0 %v597, 20
      %v785 = vpop.permute.xlu0 %784
      %786 = vrot.lane.b32.xlu0 %v599, 20
      %v787 = vpop.permute.xlu0 %786
      %788 = vrot.lane.b32.xlu0 %v602, 20
      %v789 = vpop.permute.xlu0 %788
      %790 = vrot.lane.b32.xlu0 %v604, 20
      %v791 = vpop.permute.xlu0 %790
      %792 = vrot.lane.b32.xlu0 %v607, 20
      %v793 = vpop.permute.xlu0 %792
      %794 = vrot.lane.b32.xlu0 %v609, 20
      %v795 = vpop.permute.xlu0 %794
      %796 = vrot.lane.b32.xlu0 %v612, 20
      %v797 = vpop.permute.xlu0 %796
      %798 = vrot.lane.b32.xlu0 %v614, 20
      %v799 = vpop.permute.xlu0 %798
      %800 = vrot.lane.b32.xlu0 %v769, 20
      %v801 = vpop.permute.xlu0 %800
      %802 = vrot.lane.b32.xlu0 %v771, 20
      %v803 = vpop.permute.xlu0 %802
      %822 = vrot.lane.b32.xlu0 %v437, 24
      %v823 = vpop.permute.xlu0 %822
      %824 = vrot.lane.b32.xlu0 %v438, 24
      %v825 = vpop.permute.xlu0 %824
      %826 = vrot.lane.b32.xlu0 %v440, 24
      %v827 = vpop.permute.xlu0 %826
      %828 = vrot.lane.b32.xlu0 %v441, 24
      %v829 = vpop.permute.xlu0 %828
      %830 = vrot.lane.b32.xlu0 %v443, 24
      %v831 = vpop.permute.xlu0 %830
      %832 = vrot.lane.b32.xlu0 %v444, 24
      %v833 = vpop.permute.xlu0 %832
      %834 = vrot.lane.b32.xlu0 %v446, 24
      %v835 = vpop.permute.xlu0 %834
      %836 = vrot.lane.b32.xlu0 %v447, 24
      %v837 = vpop.permute.xlu0 %836
      %838 = vrot.lane.b32.xlu0 %v449, 24
      %v839 = vpop.permute.xlu0 %838
      %840 = vrot.lane.b32.xlu0 %v450, 24
      %v841 = vpop.permute.xlu0 %840
      %842 = vrot.lane.b32.xlu0 %v452, 24
      %v843 = vpop.permute.xlu0 %842
      %844 = vrot.lane.b32.xlu0 %v453, 24
      %v845 = vpop.permute.xlu0 %844
      %846 = vrot.lane.b32.xlu0 %v455, 24
      %v847 = vpop.permute.xlu0 %846
      %848 = vrot.lane.b32.xlu0 %v456, 24
      %v849 = vpop.permute.xlu0 %848
      %850 = vrot.lane.b32.xlu0 %v458, 24
      %v851 = vpop.permute.xlu0 %850
      %852 = vrot.lane.b32.xlu0 %v459, 24
      %v853 = vpop.permute.xlu0 %852
      %v871 = vrot.slane %v458, 1
      %v872 = vrot.slane %v459, 1
      %v873 = vsel %vm485, %v871, %v872
      %v874 = vrot.slane %v460, 1
      %v875 = vsel %vm485, %v872, %v874
      %876 = vrot.lane.b32.xlu0 %v498, 28
      %v877 = vpop.permute.xlu0 %876
      %878 = vrot.lane.b32.xlu0 %v500, 28
      %v879 = vpop.permute.xlu0 %878
      %880 = vrot.lane.b32.xlu0 %v503, 28
      %v881 = vpop.permute.xlu0 %880
      %882 = vrot.lane.b32.xlu0 %v505, 28
      %v883 = vpop.permute.xlu0 %882
      %884 = vrot.lane.b32.xlu0 %v508, 28
      %v885 = vpop.permute.xlu0 %884
      %886 = vrot.lane.b32.xlu0 %v510, 28
      %v887 = vpop.permute.xlu0 %886
      %888 = vrot.lane.b32.xlu0 %v513, 28
      %v889 = vpop.permute.xlu0 %888
      %890 = vrot.lane.b32.xlu0 %v515, 28
      %v891 = vpop.permute.xlu0 %890
      %892 = vrot.lane.b32.xlu0 %v518, 28
      %v893 = vpop.permute.xlu0 %892
      %894 = vrot.lane.b32.xlu0 %v520, 28
      %v895 = vpop.permute.xlu0 %894
      %896 = vrot.lane.b32.xlu0 %v523, 28
      %v897 = vpop.permute.xlu0 %896
      %898 = vrot.lane.b32.xlu0 %v525, 28
      %v899 = vpop.permute.xlu0 %898
      %900 = vrot.lane.b32.xlu0 %v716, 28
      %v901 = vpop.permute.xlu0 %900
      %902 = vrot.lane.b32.xlu0 %v718, 28
      %v903 = vpop.permute.xlu0 %902
      %904 = vrot.lane.b32.xlu0 %v873, 28
      %v905 = vpop.permute.xlu0 %904
      %906 = vrot.lane.b32.xlu0 %v875, 28
      %v907 = vpop.permute.xlu0 %906
      %v924 = vrot.slane %v458, 2
      %v925 = vrot.slane %v459, 2
      %v926 = vsel %vm574, %v924, %v925
      %v927 = vrot.slane %v460, 2
      %v928 = vsel %vm574, %v925, %v927
      %929 = vrot.lane.b32.xlu0 %v587, 32
      %v930 = vpop.permute.xlu0 %929
      %931 = vrot.lane.b32.xlu0 %v589, 32
      %v932 = vpop.permute.xlu0 %931
      %933 = vrot.lane.b32.xlu0 %v592, 32
      %v934 = vpop.permute.xlu0 %933
      %935 = vrot.lane.b32.xlu0 %v594, 32
      %v936 = vpop.permute.xlu0 %935
      %937 = vrot.lane.b32.xlu0 %v597, 32
      %v938 = vpop.permute.xlu0 %937
      %939 = vrot.lane.b32.xlu0 %v599, 32
      %v940 = vpop.permute.xlu0 %939
      %941 = vrot.lane.b32.xlu0 %v602, 32
      %v942 = vpop.permute.xlu0 %941
      %943 = vrot.lane.b32.xlu0 %v604, 32
      %v944 = vpop.permute.xlu0 %943
      %945 = vrot.lane.b32.xlu0 %v607, 32
      %v946 = vpop.permute.xlu0 %945
      %947 = vrot.lane.b32.xlu0 %v609, 32
      %v948 = vpop.permute.xlu0 %947
      %949 = vrot.lane.b32.xlu0 %v612, 32
      %v950 = vpop.permute.xlu0 %949
      %951 = vrot.lane.b32.xlu0 %v614, 32
      %v952 = vpop.permute.xlu0 %951
      %953 = vrot.lane.b32.xlu0 %v769, 32
      %v954 = vpop.permute.xlu0 %953
      %955 = vrot.lane.b32.xlu0 %v771, 32
      %v956 = vpop.permute.xlu0 %955
      %957 = vrot.lane.b32.xlu0 %v926, 32
      %v958 = vpop.permute.xlu0 %957
      %959 = vrot.lane.b32.xlu0 %v928, 32
      %v960 = vpop.permute.xlu0 %959
      %vm977 = vcmask 31744
      %v978 = vsel %vm977, %v431, %v527
      %v979 = vsel %vm977, %v432, %v529
      %v980 = vsel %vm977, %v434, %v531
      %v981 = vsel %vm977, %v435, %v533
      %v982 = vsel %vm977, %v437, %v535
      %v983 = vsel %vm977, %v438, %v537
      %v984 = vsel %vm977, %v440, %v539
      %v985 = vsel %vm977, %v441, %v541
      %v986 = vsel %vm977, %v443, %v543
      %v987 = vsel %vm977, %v444, %v545
      %v988 = vsel %vm977, %v446, %v547
      %v989 = vsel %vm977, %v447, %v549
      %v990 = vsel %vm977, %v449, %v551
      %v991 = vsel %vm977, %v450, %v553
      %v992 = vsel %vm977, %v452, %v555
      %v993 = vsel %vm977, %v453, %v557
      %vm994 = vcmask 64512
      %v995 = vsel %vm994, %v978, %v616
      %v996 = vsel %vm994, %v979, %v618
      %v997 = vsel %vm994, %v980, %v620
      %v998 = vsel %vm994, %v981, %v622
      %v999 = vsel %vm994, %v982, %v624
      %v1000 = vsel %vm994, %v983, %v626
      %v1001 = vsel %vm994, %v984, %v628
      %v1002 = vsel %vm994, %v985, %v630
      %v1003 = vsel %vm994, %v986, %v632
      %v1004 = vsel %vm994, %v987, %v634
      %v1005 = vsel %vm994, %v988, %v636
      %v1006 = vsel %vm994, %v989, %v638
      %v1007 = vsel %vm994, %v990, %v640
      %v1008 = vsel %vm994, %v991, %v642
      %v1009 = vsel %vm994, %v992, %v644
      %v1010 = vsel %vm994, %v993, %v646
      %vm1011 = vcmask 97280
      %v1012 = vsel %vm1011, %v995, %v666
      %v1013 = vsel %vm1011, %v996, %v668
      %v1014 = vsel %vm1011, %v997, %v670
      %v1015 = vsel %vm1011, %v998, %v672
      %v1016 = vsel %vm1011, %v999, %v674
      %v1017 = vsel %vm1011, %v1000, %v676
      %v1018 = vsel %vm1011, %v1001, %v678
      %v1019 = vsel %vm1011, %v1002, %v680
      %v1020 = vsel %vm1011, %v1003, %v682
      %v1021 = vsel %vm1011, %v1004, %v684
      %v1022 = vsel %vm1011, %v1005, %v686
      %v1023 = vsel %vm1011, %v1006, %v688
      %v1024 = vsel %vm1011, %v1007, %v690
      %v1025 = vsel %vm1011, %v1008, %v692
      %v1026 = vsel %vm1011, %v1009, %v694
      %v1027 = vsel %vm1011, %v1010, %v696
      %vm1028 = vcmask 130048
      %v1029 = vsel %vm1028, %v1012, %v720
      %v1030 = vsel %vm1028, %v1013, %v722
      %v1031 = vsel %vm1028, %v1014, %v724
      %v1032 = vsel %vm1028, %v1015, %v726
      %v1033 = vsel %vm1028, %v1016, %v728
      %v1034 = vsel %vm1028, %v1017, %v730
      %v1035 = vsel %vm1028, %v1018, %v732
      %v1036 = vsel %vm1028, %v1019, %v734
      %v1037 = vsel %vm1028, %v1020, %v736
      %v1038 = vsel %vm1028, %v1021, %v738
      %v1039 = vsel %vm1028, %v1022, %v740
      %v1040 = vsel %vm1028, %v1023, %v742
      %v1041 = vsel %vm1028, %v1024, %v744
      %v1042 = vsel %vm1028, %v1025, %v746
      %v1043 = vsel %vm1028, %v1026, %v748
      %v1044 = vsel %vm1028, %v1027, %v750
      %vm1045 = vcmask 162816
      %v1046 = vsel %vm1045, %v1029, %v773
      %v1047 = vsel %vm1045, %v1030, %v775
      %v1048 = vsel %vm1045, %v1031, %v777
      %v1049 = vsel %vm1045, %v1032, %v779
      %v1050 = vsel %vm1045, %v1033, %v781
      %v1051 = vsel %vm1045, %v1034, %v783
      %v1052 = vsel %vm1045, %v1035, %v785
      %v1053 = vsel %vm1045, %v1036, %v787
      %v1054 = vsel %vm1045, %v1037, %v789
      %v1055 = vsel %vm1045, %v1038, %v791
      %v1056 = vsel %vm1045, %v1039, %v793
      %v1057 = vsel %vm1045, %v1040, %v795
      %v1058 = vsel %vm1045, %v1041, %v797
      %v1059 = vsel %vm1045, %v1042, %v799
      %v1060 = vsel %vm1045, %v1043, %v801
      %v1061 = vsel %vm1045, %v1044, %v803
      %vm1062 = vcmask 195584
      %v1063 = vsel %vm1062, %v1046, %v823
      %v1064 = vsel %vm1062, %v1047, %v825
      %v1065 = vsel %vm1062, %v1048, %v827
      %v1066 = vsel %vm1062, %v1049, %v829
      %v1067 = vsel %vm1062, %v1050, %v831
      %v1068 = vsel %vm1062, %v1051, %v833
      %v1069 = vsel %vm1062, %v1052, %v835
      %v1070 = vsel %vm1062, %v1053, %v837
      %v1071 = vsel %vm1062, %v1054, %v839
      %v1072 = vsel %vm1062, %v1055, %v841
      %v1073 = vsel %vm1062, %v1056, %v843
      %v1074 = vsel %vm1062, %v1057, %v845
      %v1075 = vsel %vm1062, %v1058, %v847
      %v1076 = vsel %vm1062, %v1059, %v849
      %v1077 = vsel %vm1062, %v1060, %v851
      %v1078 = vsel %vm1062, %v1061, %v853
      %vm1079 = vcmask 228352
      %v1080 = vsel %vm1079, %v1063, %v877
      %v1081 = vsel %vm1079, %v1064, %v879
      %v1082 = vsel %vm1079, %v1065, %v881
      %v1083 = vsel %vm1079, %v1066, %v883
      %v1084 = vsel %vm1079, %v1067, %v885
      %v1085 = vsel %vm1079, %v1068, %v887
      %v1086 = vsel %vm1079, %v1069, %v889
      %v1087 = vsel %vm1079, %v1070, %v891
      %v1088 = vsel %vm1079, %v1071, %v893
      %v1089 = vsel %vm1079, %v1072, %v895
      %v1090 = vsel %vm1079, %v1073, %v897
      %v1091 = vsel %vm1079, %v1074, %v899
      %v1092 = vsel %vm1079, %v1075, %v901
      %v1093 = vsel %vm1079, %v1076, %v903
      %v1094 = vsel %vm1079, %v1077, %v905
      %v1095 = vsel %vm1079, %v1078, %v907
      %vm1096 = vcmask 261120
      %v1097 = vsel %vm1096, %v1080, %v930
      %v1098 = vsel %vm1096, %v1081, %v932
      %v1099 = vsel %vm1096, %v1082, %v934
      %v1100 = vsel %vm1096, %v1083, %v936
      %v1101 = vsel %vm1096, %v1084, %v938
      %v1102 = vsel %vm1096, %v1085, %v940
      %v1103 = vsel %vm1096, %v1086, %v942
      %v1104 = vsel %vm1096, %v1087, %v944
      %v1105 = vsel %vm1096, %v1088, %v946
      %v1106 = vsel %vm1096, %v1089, %v948
      %v1107 = vsel %vm1096, %v1090, %v950
      %v1108 = vsel %vm1096, %v1091, %v952
      %v1109 = vsel %vm1096, %v1092, %v954
      %v1110 = vsel %vm1096, %v1093, %v956
      %v1111 = vsel %vm1096, %v1094, %v958
      %v1112 = vsel %vm1096, %v1095, %v960
      %v1113 = vpack.c.bf16 %v1098, %v1097
      %v1114 = vpack.c.bf16 %v1100, %v1099
      %v1115 = vpack.c.bf16 %v1102, %v1101
      %v1116 = vpack.c.bf16 %v1104, %v1103
      %v1117 = vpack.c.bf16 %v1106, %v1105
      %v1118 = vpack.c.bf16 %v1108, %v1107
      %v1119 = vpack.c.bf16 %v1110, %v1109
      %v1120 = vpack.c.bf16 %v1112, %v1111
      %v1121 = vld [vmem:[%s1] sm:$0xf]
      %v1122 = vld [vmem:[%s1 + $0x4] sm:$0xf]
      %v1123 = vld [vmem:[%s1 + $0x8] sm:$0xf]
      %v1124 = vld [vmem:[%s1 + $0xc] sm:$0xf]
      %v1125 = vld [vmem:[%s1 + $0x10] sm:$0x3]
      %v1131 = vunpack.c.l.b16 %v1121
      %v1132 = vunpack.c.l.b16 %v1122
      %v1133 = vunpack.c.l.b16 %v1123
      %v1134 = vunpack.c.l.b16 %v1124
      %v1135 = vunpack.c.l.b16 %v1125
      %v1136 = vpack.c.b16 %v1132, %v1131
      %v1137 = vpack.c.b16 %v1134, %v1133
      %v1138 = vpack.c.b16 %v1135, %v1135
      %vm1141 = vcmask 293888
      %v1143 = vsel %vm1141, %v1113, 0
      %v1146 = vsel %vm1141, %v1114, 0
      %v1149 = vsel %vm1141, %v1115, 0
      %v1152 = vsel %vm1141, %v1116, 0
      %v1155 = vsel %vm1141, %v1117, 0
      %v1158 = vsel %vm1141, %v1118, 0
      %v1161 = vsel %vm1141, %v1119, 0
      %v1164 = vsel %vm1141, %v1120, 0
      %vm1166 = vcmask 1041408
      %v1168 = vsel %vm1166, %v1138, 0
      %1170 = vmatprep.subr.bf16.mxu0 0
      %1171 = vmatpush1.bf16.msra.mxu0 0
      %1172 = vmatprep.subr.bf16.mxu0 0
      %1173 = vmatpush1.bf16.msra.mxu0 0
      %1174 = vmatprep.subr.bf16.mxu0 0
      %1175 = vmatpush1.bf16.msra.mxu0 0
      %1176 = vmatprep.subr.bf16.mxu0 0
      %1177 = vmatpush1.bf16.msra.mxu0 0
      %1178 = vmatprep.subr.bf16.mxu0 0
      %1179 = vmatpush1.bf16.msra.mxu0 0
      %1180 = vmatprep.subr.bf16.mxu0 0
      %1181 = vmatpush1.bf16.msra.mxu0 %v1168
      %1182 = vmatprep.subr.bf16.mxu0 0
      %1183 = vmatpush1.bf16.msra.mxu0 %v1137
      %1184 = vmatprep.subr.bf16.mxu0 0
      %1185 = vmatpush1.bf16.msra.mxu0 %v1136
      %1186 = vmatprep.subr.bf16.mxu0 0
      %1187 = vmatpush2.bf16.msra.mxu0 0
      %1188 = vmatprep.subr.bf16.mxu0 0
      %1189 = vmatpush2.bf16.msra.mxu0 0
      %1190 = vmatprep.subr.bf16.mxu0 0
      %1191 = vmatpush2.bf16.msra.mxu0 0
      %1192 = vmatprep.subr.bf16.mxu0 0
      %1193 = vmatpush2.bf16.msra.mxu0 0
      %1194 = vmatprep.subr.bf16.mxu0 0
      %1195 = vmatpush2.bf16.msra.mxu0 0
      %1196 = vmatprep.subr.bf16.mxu0 0
      %1197 = vmatpush2.bf16.msra.mxu0 0
      %1198 = vmatprep.subr.bf16.mxu0 0
      %1199 = vmatpush2.bf16.msra.mxu0 0
      %1200 = vmatprep.subr.bf16.mxu0 0
      %1201 = vmatpush2.bf16.msra.mxu0 0
      %1202 = vmatprep.mubr.bf16.mxu0 0
      %1203 = vmatmul.mubr.bf16.gmra.mxu0 %v1143
      %v1204 = vpop.f32.mrf.mxu0
      %v1205 = vadd.f32 0.0, %v1204
      %v1206 = vpop.f32.mrf.mxu0
      %v1207 = vpop.f32.mrf.mxu0
      %v1208 = vadd.f32 0.0, %v1207
      %v1209 = vpop.f32.mrf.mxu0
      %1210 = vmatprep.mubr.bf16.mxu0 0
      %1211 = vmatmul.mubr.bf16.gmra.mxu0 %v1146
      %v1212 = vpop.f32.mrf.mxu0
      %v1213 = vadd.f32 0.0, %v1212
      %v1214 = vpop.f32.mrf.mxu0
      %v1215 = vpop.f32.mrf.mxu0
      %v1216 = vadd.f32 0.0, %v1215
      %v1217 = vpop.f32.mrf.mxu0
      %1218 = vmatprep.mubr.bf16.mxu0 0
      %1219 = vmatmul.mubr.bf16.gmra.mxu0 %v1149
      %v1220 = vpop.f32.mrf.mxu0
      %v1221 = vadd.f32 0.0, %v1220
      %v1222 = vpop.f32.mrf.mxu0
      %v1223 = vpop.f32.mrf.mxu0
      %v1224 = vadd.f32 0.0, %v1223
      %v1225 = vpop.f32.mrf.mxu0
      %1226 = vmatprep.mubr.bf16.mxu0 0
      %1227 = vmatmul.mubr.bf16.gmra.mxu0 %v1152
      %v1228 = vpop.f32.mrf.mxu0
      %v1229 = vadd.f32 0.0, %v1228
      %v1230 = vpop.f32.mrf.mxu0
      %v1231 = vpop.f32.mrf.mxu0
      %v1232 = vadd.f32 0.0, %v1231
      %v1233 = vpop.f32.mrf.mxu0
      %1234 = vmatprep.mubr.bf16.mxu0 0
      %1235 = vmatmul.mubr.bf16.gmra.mxu0 %v1155
      %v1236 = vpop.f32.mrf.mxu0
      %v1237 = vadd.f32 0.0, %v1236
      %v1238 = vpop.f32.mrf.mxu0
      %v1239 = vpop.f32.mrf.mxu0
      %v1240 = vadd.f32 0.0, %v1239
      %v1241 = vpop.f32.mrf.mxu0
      %1242 = vmatprep.mubr.bf16.mxu0 0
      %1243 = vmatmul.mubr.bf16.gmra.mxu0 %v1158
      %v1244 = vpop.f32.mrf.mxu0
      %v1245 = vadd.f32 0.0, %v1244
      %v1246 = vpop.f32.mrf.mxu0
      %v1247 = vpop.f32.mrf.mxu0
      %v1248 = vadd.f32 0.0, %v1247
      %v1249 = vpop.f32.mrf.mxu0
      %1250 = vmatprep.mubr.bf16.mxu0 0
      %1251 = vmatmul.mubr.bf16.gmra.mxu0 %v1161
      %v1252 = vpop.f32.mrf.mxu0
      %v1253 = vadd.f32 0.0, %v1252
      %v1254 = vpop.f32.mrf.mxu0
      %v1255 = vpop.f32.mrf.mxu0
      %v1256 = vadd.f32 0.0, %v1255
      %v1257 = vpop.f32.mrf.mxu0
      %1258 = vmatprep.mubr.bf16.mxu0 0
      %1259 = vmatmul.mubr.bf16.gmra.mxu0 %v1164
      %v1260 = vpop.f32.mrf.mxu0
      %v1261 = vadd.f32 0.0, %v1260
      %v1262 = vpop.f32.mrf.mxu0
      %v1263 = vpop.f32.mrf.mxu0
      %v1264 = vadd.f32 0.0, %v1263
      %v1265 = vpop.f32.mrf.mxu0
      %1266 = vdwg.mxu0
      %1267 = vxpose.xlu0.b32.start [1/16] %v1205, 128
      %1268 = vxpose.xlu0.b32.cont [2/16] %v1208, 128
      %1269 = vxpose.xlu0.b32.cont [3/16] %v1213, 128
      %1270 = vxpose.xlu0.b32.cont [4/16] %v1216, 128
      %1271 = vxpose.xlu0.b32.cont [5/16] %v1221, 128
      %1272 = vxpose.xlu0.b32.cont [6/16] %v1224, 128
      %1273 = vxpose.xlu0.b32.cont [7/16] %v1229, 128
      %1274 = vxpose.xlu0.b32.cont [8/16] %v1232, 128
      %1275 = vxpose.xlu0.b32.cont [9/16] %v1237, 128
      %1276 = vxpose.xlu0.b32.cont [10/16] %v1240, 128
      %1277 = vxpose.xlu0.b32.cont [11/16] %v1245, 128
      %1278 = vxpose.xlu0.b32.cont [12/16] %v1248, 128
      %1279 = vxpose.xlu0.b32.cont [13/16] %v1253, 128
      %1280 = vxpose.xlu0.b32.cont [14/16] %v1256, 128
      %1281 = vxpose.xlu0.b32.cont [15/16] %v1261, 128
      %1282 = vxpose.xlu0.b32.end [16/16] %v1264, 128
      %v1283 = vpop.trf.xlu0
      %v1284 = vpop.trf.xlu0
      %v1285 = vpop.trf.xlu0
      %v1286 = vpop.trf.xlu0
      %v1287 = vpop.trf.xlu0
      %v1288 = vpop.trf.xlu0
      %v1289 = vpop.trf.xlu0
      %v1290 = vpop.trf.xlu0
      %v1291 = vpop.trf.xlu0
      %v1292 = vpop.trf.xlu0
      %v1293 = vpop.trf.xlu0
      %v1294 = vpop.trf.xlu0
      %v1295 = vpop.trf.xlu0
      %v1296 = vpop.trf.xlu0
      %v1297 = vpop.trf.xlu0
      %v1298 = vpop.trf.xlu0
      %v1299 = vpack.c.bf16 %v1283, %v1283
      %1300 = vst [vmem:[%s263] sm:$0xf] %v1299
      %v1301 = vsel %vm994, %v1205, 0.0
      %v1302 = vsel %vm994, %v1208, 0.0
      %v1303 = vadd.f32 %v1301, %v1302
      %v1304 = vsel %vm994, %v1213, 0.0
      %v1305 = vadd.f32 %v1303, %v1304
      %v1306 = vsel %vm994, %v1216, 0.0
      %v1307 = vadd.f32 %v1305, %v1306
      %v1308 = vsel %vm994, %v1221, 0.0
      %v1309 = vadd.f32 %v1307, %v1308
      %v1310 = vsel %vm994, %v1224, 0.0
      %v1311 = vadd.f32 %v1309, %v1310
      %v1312 = vsel %vm994, %v1229, 0.0
      %v1313 = vadd.f32 %v1311, %v1312
      %v1314 = vsel %vm994, %v1232, 0.0
      %v1315 = vadd.f32 %v1313, %v1314
      %v1316 = vsel %vm994, %v1237, 0.0
      %v1317 = vadd.f32 %v1315, %v1316
      %v1318 = vsel %vm994, %v1240, 0.0
      %v1319 = vadd.f32 %v1317, %v1318
      %v1320 = vsel %vm994, %v1245, 0.0
      %v1321 = vadd.f32 %v1319, %v1320
      %v1322 = vsel %vm994, %v1248, 0.0
      %v1323 = vadd.f32 %v1321, %v1322
      %v1324 = vsel %vm994, %v1253, 0.0
      %v1325 = vadd.f32 %v1323, %v1324
      %v1326 = vsel %vm994, %v1256, 0.0
      %v1327 = vadd.f32 %v1325, %v1326
      %v1328 = vsel %vm994, %v1261, 0.0
      %v1329 = vadd.f32 %v1327, %v1328
      %v1330 = vsel %vm994, %v1264, 0.0
      %v1331 = vadd.f32 %v1329, %v1330
      %v1332 = vrot.slane %v1331, 4
      %v1333 = vadd.f32 %v1331, %v1332
      %v1334 = vrot.slane %v1333, 2
      %v1335 = vadd.f32 %v1333, %v1334
      %v1336 = vrot.slane %v1335, 1
      %v1337 = vadd.f32 %v1335, %v1336
      %v1338 = vmul.f32 %v1205, %v1205
      %v1339 = vmul.f32 %v1208, %v1208
      %v1340 = vmul.f32 %v1213, %v1213
      %v1341 = vmul.f32 %v1216, %v1216
      %v1342 = vmul.f32 %v1221, %v1221
      %v1343 = vmul.f32 %v1224, %v1224
      %v1344 = vmul.f32 %v1229, %v1229
      %v1345 = vmul.f32 %v1232, %v1232
      %v1346 = vmul.f32 %v1237, %v1237
      %v1347 = vmul.f32 %v1240, %v1240
      %v1348 = vmul.f32 %v1245, %v1245
      %v1349 = vmul.f32 %v1248, %v1248
      %v1350 = vmul.f32 %v1253, %v1253
      %v1351 = vmul.f32 %v1256, %v1256
      %v1352 = vmul.f32 %v1261, %v1261
      %v1353 = vmul.f32 %v1264, %v1264
      %v1354 = vsel %vm994, %v1338, 0.0
      %v1355 = vsel %vm994, %v1339, 0.0
      %v1356 = vadd.f32 %v1354, %v1355
      %v1357 = vsel %vm994, %v1340, 0.0
      %v1358 = vadd.f32 %v1356, %v1357
      %v1359 = vsel %vm994, %v1341, 0.0
      %v1360 = vadd.f32 %v1358, %v1359
      %v1361 = vsel %vm994, %v1342, 0.0
      %v1362 = vadd.f32 %v1360, %v1361
      %v1363 = vsel %vm994, %v1343, 0.0
      %v1364 = vadd.f32 %v1362, %v1363
      %v1365 = vsel %vm994, %v1344, 0.0
      %v1366 = vadd.f32 %v1364, %v1365
      %v1367 = vsel %vm994, %v1345, 0.0
      %v1368 = vadd.f32 %v1366, %v1367
      %v1369 = vsel %vm994, %v1346, 0.0
      %v1370 = vadd.f32 %v1368, %v1369
      %v1371 = vsel %vm994, %v1347, 0.0
      %v1372 = vadd.f32 %v1370, %v1371
      %v1373 = vsel %vm994, %v1348, 0.0
      %v1374 = vadd.f32 %v1372, %v1373
      %v1375 = vsel %vm994, %v1349, 0.0
      %v1376 = vadd.f32 %v1374, %v1375
      %v1377 = vsel %vm994, %v1350, 0.0
      %v1378 = vadd.f32 %v1376, %v1377
      %v1379 = vsel %vm994, %v1351, 0.0
      %v1380 = vadd.f32 %v1378, %v1379
      %v1381 = vsel %vm994, %v1352, 0.0
      %v1382 = vadd.f32 %v1380, %v1381
      %v1383 = vsel %vm994, %v1353, 0.0
      %v1384 = vadd.f32 %v1382, %v1383
      %v1385 = vrot.slane %v1384, 4
      %v1386 = vadd.f32 %v1384, %v1385
      %v1387 = vrot.slane %v1386, 2
      %v1388 = vadd.f32 %v1386, %v1387
      %v1389 = vrot.slane %v1388, 1
      %v1390 = vadd.f32 %v1388, %v1389
      %v1407 = vpack.c.bf16 %v495, %v493
      %v1408 = vpack.c.bf16 %v500, %v498
      %v1409 = vpack.c.bf16 %v505, %v503
      %v1410 = vpack.c.bf16 %v510, %v508
      %v1411 = vpack.c.bf16 %v515, %v513
      %v1412 = vpack.c.bf16 %v520, %v518
      %v1413 = vpack.c.bf16 %v525, %v523
      %v1414 = vpack.c.bf16 %v718, %v716
      %v1415 = vld [vmem:[%s2] sm:$0x3]
      %v1417 = vsel %vm977, %v1407, 0
      %v1420 = vsel %vm977, %v1408, 0
      %v1423 = vsel %vm977, %v1409, 0
      %v1426 = vsel %vm977, %v1410, 0
      %v1429 = vsel %vm977, %v1411, 0
      %v1432 = vsel %vm977, %v1412, 0
      %v1435 = vsel %vm977, %v1413, 0
      %v1438 = vsel %vm977, %v1414, 0
      %v1441 = vsel %vm1166, %v1415, 0
      %1443 = vmatprep.subr.bf16.mxu0 0
      %1444 = vmatpush1.bf16.msra.mxu0 0
      %1445 = vmatprep.subr.bf16.mxu0 0
      %1446 = vmatpush1.bf16.msra.mxu0 0
      %1447 = vmatprep.subr.bf16.mxu0 0
      %1448 = vmatpush1.bf16.msra.mxu0 0
      %1449 = vmatprep.subr.bf16.mxu0 0
      %1450 = vmatpush1.bf16.msra.mxu0 0
      %1451 = vmatprep.subr.bf16.mxu0 0
      %1452 = vmatpush1.bf16.msra.mxu0 0
      %1453 = vmatprep.subr.bf16.mxu0 0
      %1454 = vmatpush1.bf16.msra.mxu0 0
      %1455 = vmatprep.subr.bf16.mxu0 0
      %1456 = vmatpush1.bf16.msra.mxu0 0
      %1457 = vmatprep.subr.bf16.mxu0 0
      %1458 = vmatpush1.bf16.msra.mxu0 %v1441
      %1459 = vmatprep.subr.bf16.mxu0 0
      %1460 = vmatpush2.bf16.msra.mxu0 0
      %1461 = vmatprep.subr.bf16.mxu0 0
      %1462 = vmatpush2.bf16.msra.mxu0 0
      %1463 = vmatprep.subr.bf16.mxu0 0
      %1464 = vmatpush2.bf16.msra.mxu0 0
      %1465 = vmatprep.subr.bf16.mxu0 0
      %1466 = vmatpush2.bf16.msra.mxu0 0
      %1467 = vmatprep.subr.bf16.mxu0 0
      %1468 = vmatpush2.bf16.msra.mxu0 0
      %1469 = vmatprep.subr.bf16.mxu0 0
      %1470 = vmatpush2.bf16.msra.mxu0 0
      %1471 = vmatprep.subr.bf16.mxu0 0
      %1472 = vmatpush2.bf16.msra.mxu0 0
      %1473 = vmatprep.subr.bf16.mxu0 0
      %1474 = vmatpush2.bf16.msra.mxu0 0
      %1475 = vmatprep.mubr.bf16.mxu0 0
      %1476 = vmatmul.mubr.bf16.gmra.mxu0 %v1417
      %v1477 = vpop.f32.mrf.mxu0
      %v1478 = vadd.f32 0.0, %v1477
      %v1479 = vpop.f32.mrf.mxu0
      %v1480 = vpop.f32.mrf.mxu0
      %v1481 = vadd.f32 0.0, %v1480
      %v1482 = vpop.f32.mrf.mxu0
      %1483 = vmatprep.mubr.bf16.mxu0 0
      %1484 = vmatmul.mubr.bf16.gmra.mxu0 %v1420
      %v1485 = vpop.f32.mrf.mxu0
      %v1486 = vadd.f32 0.0, %v1485
      %v1487 = vpop.f32.mrf.mxu0
      %v1488 = vpop.f32.mrf.mxu0
      %v1489 = vadd.f32 0.0, %v1488
      %v1490 = vpop.f32.mrf.mxu0
      %1491 = vmatprep.mubr.bf16.mxu0 0
      %1492 = vmatmul.mubr.bf16.gmra.mxu0 %v1423
      %v1493 = vpop.f32.mrf.mxu0
      %v1494 = vadd.f32 0.0, %v1493
      %v1495 = vpop.f32.mrf.mxu0
      %v1496 = vpop.f32.mrf.mxu0
      %v1497 = vadd.f32 0.0, %v1496
      %v1498 = vpop.f32.mrf.mxu0
      %1499 = vmatprep.mubr.bf16.mxu0 0
      %1500 = vmatmul.mubr.bf16.gmra.mxu0 %v1426
      %v1501 = vpop.f32.mrf.mxu0
      %v1502 = vadd.f32 0.0, %v1501
      %v1503 = vpop.f32.mrf.mxu0
      %v1504 = vpop.f32.mrf.mxu0
      %v1505 = vadd.f32 0.0, %v1504
      %v1506 = vpop.f32.mrf.mxu0
      %1507 = vmatprep.mubr.bf16.mxu0 0
      %1508 = vmatmul.mubr.bf16.gmra.mxu0 %v1429
      %v1509 = vpop.f32.mrf.mxu0
      %v1510 = vadd.f32 0.0, %v1509
      %v1511 = vpop.f32.mrf.mxu0
      %v1512 = vpop.f32.mrf.mxu0
      %v1513 = vadd.f32 0.0, %v1512
      %v1514 = vpop.f32.mrf.mxu0
      %1515 = vmatprep.mubr.bf16.mxu0 0
      %1516 = vmatmul.mubr.bf16.gmra.mxu0 %v1432
      %v1517 = vpop.f32.mrf.mxu0
      %v1518 = vadd.f32 0.0, %v1517
      %v1519 = vpop.f32.mrf.mxu0
      %v1520 = vpop.f32.mrf.mxu0
      %v1521 = vadd.f32 0.0, %v1520
      %v1522 = vpop.f32.mrf.mxu0
      %1523 = vmatprep.mubr.bf16.mxu0 0
      %1524 = vmatmul.mubr.bf16.gmra.mxu0 %v1435
      %v1525 = vpop.f32.mrf.mxu0
      %v1526 = vadd.f32 0.0, %v1525
      %v1527 = vpop.f32.mrf.mxu0
      %v1528 = vpop.f32.mrf.mxu0
      %v1529 = vadd.f32 0.0, %v1528
      %v1530 = vpop.f32.mrf.mxu0
      %1531 = vmatprep.mubr.bf16.mxu0 0
      %1532 = vmatmul.mubr.bf16.gmra.mxu0 %v1438
      %v1533 = vpop.f32.mrf.mxu0
      %v1534 = vadd.f32 0.0, %v1533
      %v1535 = vpop.f32.mrf.mxu0
      %v1536 = vpop.f32.mrf.mxu0
      %v1537 = vadd.f32 0.0, %v1536
      %v1538 = vpop.f32.mrf.mxu0
      %1539 = vdwg.mxu0
      %1540 = vxpose.xlu0.b32.start [1/16] %v1478, 128
      %1541 = vxpose.xlu0.b32.cont [2/16] %v1481, 128
      %1542 = vxpose.xlu0.b32.cont [3/16] %v1486, 128
      %1543 = vxpose.xlu0.b32.cont [4/16] %v1489, 128
      %1544 = vxpose.xlu0.b32.cont [5/16] %v1494, 128
      %1545 = vxpose.xlu0.b32.cont [6/16] %v1497, 128
      %1546 = vxpose.xlu0.b32.cont [7/16] %v1502, 128
      %1547 = vxpose.xlu0.b32.cont [8/16] %v1505, 128
      %1548 = vxpose.xlu0.b32.cont [9/16] %v1510, 128
      %1549 = vxpose.xlu0.b32.cont [10/16] %v1513, 128
      %1550 = vxpose.xlu0.b32.cont [11/16] %v1518, 128
      %1551 = vxpose.xlu0.b32.cont [12/16] %v1521, 128
      %1552 = vxpose.xlu0.b32.cont [13/16] %v1526, 128
      %1553 = vxpose.xlu0.b32.cont [14/16] %v1529, 128
      %1554 = vxpose.xlu0.b32.cont [15/16] %v1534, 128
      %1555 = vxpose.xlu0.b32.end [16/16] %v1537, 128
      %v1556 = vpop.trf.xlu0
      %v1557 = vpop.trf.xlu0
      %v1558 = vpop.trf.xlu0
      %v1559 = vpop.trf.xlu0
      %v1560 = vpop.trf.xlu0
      %v1561 = vpop.trf.xlu0
      %v1562 = vpop.trf.xlu0
      %v1563 = vpop.trf.xlu0
      %v1564 = vpop.trf.xlu0
      %v1565 = vpop.trf.xlu0
      %v1566 = vpop.trf.xlu0
      %v1567 = vpop.trf.xlu0
      %v1568 = vpop.trf.xlu0
      %v1569 = vpop.trf.xlu0
      %v1570 = vpop.trf.xlu0
      %v1571 = vpop.trf.xlu0
      %v1572 = vpack.c.bf16 %v1556, %v1556
      %1573 = vst [vmem:[%s271] sm:$0xf] %v1572
      %v1574 = vsel %vm994, %v1478, 0.0
      %v1575 = vsel %vm994, %v1481, 0.0
      %v1576 = vadd.f32 %v1574, %v1575
      %v1577 = vsel %vm994, %v1486, 0.0
      %v1578 = vadd.f32 %v1576, %v1577
      %v1579 = vsel %vm994, %v1489, 0.0
      %v1580 = vadd.f32 %v1578, %v1579
      %v1581 = vsel %vm994, %v1494, 0.0
      %v1582 = vadd.f32 %v1580, %v1581
      %v1583 = vsel %vm994, %v1497, 0.0
      %v1584 = vadd.f32 %v1582, %v1583
      %v1585 = vsel %vm994, %v1502, 0.0
      %v1586 = vadd.f32 %v1584, %v1585
      %v1587 = vsel %vm994, %v1505, 0.0
      %v1588 = vadd.f32 %v1586, %v1587
      %v1589 = vsel %vm994, %v1510, 0.0
      %v1590 = vadd.f32 %v1588, %v1589
      %v1591 = vsel %vm994, %v1513, 0.0
      %v1592 = vadd.f32 %v1590, %v1591
      %v1593 = vsel %vm994, %v1518, 0.0
      %v1594 = vadd.f32 %v1592, %v1593
      %v1595 = vsel %vm994, %v1521, 0.0
      %v1596 = vadd.f32 %v1594, %v1595
      %v1597 = vsel %vm994, %v1526, 0.0
      %v1598 = vadd.f32 %v1596, %v1597
      %v1599 = vsel %vm994, %v1529, 0.0
      %v1600 = vadd.f32 %v1598, %v1599
      %v1601 = vsel %vm994, %v1534, 0.0
      %v1602 = vadd.f32 %v1600, %v1601
      %v1603 = vsel %vm994, %v1537, 0.0
      %v1604 = vadd.f32 %v1602, %v1603
      %v1605 = vrot.slane %v1604, 4
      %v1606 = vadd.f32 %v1604, %v1605
      %v1607 = vrot.slane %v1606, 2
      %v1608 = vadd.f32 %v1606, %v1607
      %v1609 = vrot.slane %v1608, 1
      %v1610 = vadd.f32 %v1608, %v1609
      %v1611 = vmul.f32 %v1478, %v1478
      %v1612 = vmul.f32 %v1481, %v1481
      %v1613 = vmul.f32 %v1486, %v1486
      %v1614 = vmul.f32 %v1489, %v1489
      %v1615 = vmul.f32 %v1494, %v1494
      %v1616 = vmul.f32 %v1497, %v1497
      %v1617 = vmul.f32 %v1502, %v1502
      %v1618 = vmul.f32 %v1505, %v1505
      %v1619 = vmul.f32 %v1510, %v1510
      %v1620 = vmul.f32 %v1513, %v1513
      %v1621 = vmul.f32 %v1518, %v1518
      %v1622 = vmul.f32 %v1521, %v1521
      %v1623 = vmul.f32 %v1526, %v1526
      %v1624 = vmul.f32 %v1529, %v1529
      %v1625 = vmul.f32 %v1534, %v1534
      %v1626 = vmul.f32 %v1537, %v1537
      %v1627 = vsel %vm994, %v1611, 0.0
      %v1628 = vsel %vm994, %v1612, 0.0
      %v1629 = vadd.f32 %v1627, %v1628
      %v1630 = vsel %vm994, %v1613, 0.0
      %v1631 = vadd.f32 %v1629, %v1630
      %v1632 = vsel %vm994, %v1614, 0.0
      %v1633 = vadd.f32 %v1631, %v1632
      %v1634 = vsel %vm994, %v1615, 0.0
      %v1635 = vadd.f32 %v1633, %v1634
      %v1636 = vsel %vm994, %v1616, 0.0
      %v1637 = vadd.f32 %v1635, %v1636
      %v1638 = vsel %vm994, %v1617, 0.0
      %v1639 = vadd.f32 %v1637, %v1638
      %v1640 = vsel %vm994, %v1618, 0.0
      %v1641 = vadd.f32 %v1639, %v1640
      %v1642 = vsel %vm994, %v1619, 0.0
      %v1643 = vadd.f32 %v1641, %v1642
      %v1644 = vsel %vm994, %v1620, 0.0
      %v1645 = vadd.f32 %v1643, %v1644
      %v1646 = vsel %vm994, %v1621, 0.0
      %v1647 = vadd.f32 %v1645, %v1646
      %v1648 = vsel %vm994, %v1622, 0.0
      %v1649 = vadd.f32 %v1647, %v1648
      %v1650 = vsel %vm994, %v1623, 0.0
      %v1651 = vadd.f32 %v1649, %v1650
      %v1652 = vsel %vm994, %v1624, 0.0
      %v1653 = vadd.f32 %v1651, %v1652
      %v1654 = vsel %vm994, %v1625, 0.0
      %v1655 = vadd.f32 %v1653, %v1654
      %v1656 = vsel %vm994, %v1626, 0.0
      %v1657 = vadd.f32 %v1655, %v1656
      %v1658 = vrot.slane %v1657, 4
      %v1659 = vadd.f32 %v1657, %v1658
      %v1660 = vrot.slane %v1659, 2
      %v1661 = vadd.f32 %v1659, %v1660
      %v1662 = vrot.slane %v1661, 1
      %v1663 = vadd.f32 %v1661, %v1662
      %vm1664 = vcmask 1040384
      %v1665 = vsel %vm1664, %v1337, %v1390
      %v1666 = vsel %vm1166, %v1665, %v1610
      %vm1667 = vcmask 1042432
      %v1668 = vsel %vm1667, %v1666, %v1663
      // Predicated region
      $region37: #{resnet_block_forward.3} parent=31 // pred_check
        %p1669 = pneg %p277
      $region38: #{resnet_block_forward.3} parent=31 // pred_check_branch
        %1671 = sbr.rel (%p1669) target = $region40
      $region39: #{resnet_block_forward.3} parent=31 // pred_region
        %vm1672 = vcmask 60416
        %1673 = vst.msk [vmem:[%s275] sm:$0xf] %vm1672, %v1668
      $region40: #{resnet_block_forward.3} parent=31 // pred_fallthru
        _
      %p1674 = scmp.ne.s32.totalorder %s22, 0
      // Predicated region
      $region41: #{resnet_block_forward.3} parent=31 // pred_check
        %p1675 = pneg %p1674
      $region42: #{resnet_block_forward.3} parent=31 // pred_check_branch
        %1677 = sbr.rel (%p1675) target = $region44
      $region43: #{resnet_block_forward.3} parent=31 // pred_region
        %v1678 = vld [vmem:[%s275] sm:$0xf]
        %v1679 = vadd.f32 %v1678, %v1668
        %vm1680 = vcmask 60416
        %1681 = vst.msk [vmem:[%s275] sm:$0xf] %vm1680, %v1679
      $region44: #{resnet_block_forward.3} parent=31 // pred_fallthru
        _
      %p1682 = scmp.lt.s32.totalorder %s21, 1
      %s1683 = scalar_select %p1682, %s21, 1
      %p1684 = scmp.lt.s32.totalorder %s22, 1
      %s1685 = scalar_select %p1684, %s22, 1
      %s1686 = smul.addr %s1683, 2
      %s1687 = sadd.s32 %s1685, %s1686
      %s1688 = smul.addr %s1687, 4
      %s1689 = scalar_lea.vmem %s3, %s1688
      %p1690 = scmp.lt.s32.totalorder %s21, 1
      %s1691 = scalar_select %p1690, %s21, 1
      %p1692 = scmp.lt.s32.totalorder %s22, 1
      %s1693 = scalar_select %p1692, %s22, 1
      %s1694 = smul.addr %s1691, 2
      %s1695 = sadd.s32 %s1693, %s1694
      %s1696 = smul.addr %s1695, 4
      %s1697 = scalar_lea.vmem %s4, %s1696
      %p1698 = scmp.lt.s32.totalorder %s21, 1
      %s1699 = scalar_select %p1698, %s21, 1
      %s1700 = smul.addr %s1699, 4
      %s1701 = scalar_lea.vmem %s5, %s1700
      // Predicated region
      $region45: #{resnet_block_forward.3} parent=31 // pred_check
        %p1702 = pneg %p117
      $region46: #{resnet_block_forward.3} parent=31 // pred_check_branch
        %1704 = sbr.rel (%p1702) target = $region48
      $region47: #{resnet_block_forward.3} parent=31 // pred_region
        _
      $region48: #{resnet_block_forward.3} parent=31 // pred_fallthru
        _
      // Predicated region
      $region49: #{resnet_block_forward.3} parent=31 // pred_check
        %p1705 = pneg %p145
      $region50: #{resnet_block_forward.3} parent=31 // pred_check_branch
        %1707 = sbr.rel (%p1705) target = $region52
      $region51: #{resnet_block_forward.3} parent=31 // pred_region
        _
      $region52: #{resnet_block_forward.3} parent=31 // pred_fallthru
        _
      // Predicated region
      $region53: #{resnet_block_forward.3} parent=31 // pred_check
        %p1708 = pneg %p171
      $region54: #{resnet_block_forward.3} parent=31 // pred_check_branch
        %1710 = sbr.rel (%p1708) target = $region56
      $region55: #{resnet_block_forward.3} parent=31 // pred_region
        _
      $region56: #{resnet_block_forward.3} parent=31 // pred_fallthru
        _
    $region32: #{resnet_block_forward.3} parent=5 // pred_fallthru
      _
    %p1711 = scmp.le.s32.totalorder 2, %s12
    // Predicated region
    $region57: #{resnet_block_forward.3} parent=5 // pred_check
      %p1712 = pneg %p1711
    $region58: #{resnet_block_forward.3} parent=5 // pred_check_branch
      %1714 = sbr.rel (%p1712) target = $region60
    $region59: #{resnet_block_forward.3} parent=5 // pred_region
      %s1715 = ssub.s32 %s12, 2
      // Predicated region
      $region61: #{resnet_block_forward.3} parent=59 // pred_check
        %p1716 = pneg %p123
      $region62: #{resnet_block_forward.3} parent=59 // pred_check_branch
        %1718 = sbr.rel (%p1716) target = $region64
      $region63: #{resnet_block_forward.3} parent=59 // pred_region
        %p1719 = scmp.lt.s32.totalorder %s23, 1
        %s1720 = scalar_select %p1719, %s23, 1
        %p1721 = scmp.lt.s32.totalorder %s24, 1
        %s1722 = scalar_select %p1721, %s24, 1
        %s1723 = smul.addr %s1720, 2
        %s1724 = sadd.s32 %s1722, %s1723
        %s1725 = smul.addr %s1724, 4
        %s1726 = scalar_lea.vmem %s3, %s1725
      $region64: #{resnet_block_forward.3} parent=59 // pred_fallthru
        _
      // Predicated region
      $region65: #{resnet_block_forward.3} parent=59 // pred_check
        %p1727 = pneg %p151
      $region66: #{resnet_block_forward.3} parent=59 // pred_check_branch
        %1729 = sbr.rel (%p1727) target = $region68
      $region67: #{resnet_block_forward.3} parent=59 // pred_region
        %p1730 = scmp.lt.s32.totalorder %s23, 1
        %s1731 = scalar_select %p1730, %s23, 1
        %p1732 = scmp.lt.s32.totalorder %s24, 1
        %s1733 = scalar_select %p1732, %s24, 1
        %s1734 = smul.addr %s1731, 2
        %s1735 = sadd.s32 %s1733, %s1734
        %s1736 = smul.addr %s1735, 4
        %s1737 = scalar_lea.vmem %s4, %s1736
      $region68: #{resnet_block_forward.3} parent=59 // pred_fallthru
        _
      // Predicated region
      $region69: #{resnet_block_forward.3} parent=59 // pred_check
        %p1738 = pneg %p177
      $region70: #{resnet_block_forward.3} parent=59 // pred_check_branch
        %1740 = sbr.rel (%p1738) target = $region72
      $region71: #{resnet_block_forward.3} parent=59 // pred_region
        %p1741 = scmp.lt.s32.totalorder %s23, 1
        %s1742 = scalar_select %p1741, %s23, 1
        %s1743 = smul.addr %s1742, 4
        %s1744 = scalar_lea.vmem %s5, %s1743
      $region72: #{resnet_block_forward.3} parent=59 // pred_fallthru
        _
    $region60: #{resnet_block_forward.3} parent=5 // pred_fallthru
      _
  $region6: #{resnet_block_forward.3} parent=0 // loop_footer
    %s16 = sadd.s32 1, %s12
  $region7: #{resnet_block_forward.3} parent=0 // loop_footer_branch
    %11 = sbr.rel target = $region3
  $region8: #{resnet_block_forward.3} parent=0 // loop_exit
    _

// kernel: resnet_block_forward.4
$region0: #{resnet_block_forward.4}
  #allocation0 [shape = 'u32[]', space=smem, size = 0x4, offset = 0x4, fixed_abs, tag = 'smem constant byte address 0x4 - core index']
  #allocation1 [shape = 'u32[144,128]{1,0:T(1,128)}', space=vmem, size = 0x12000, scoped, tag = 'internal scratch']
  #allocation2 [shape = 'f32[18,18,8]{2,1,0:T(8,128)}', space=vmem, size = 0x36000, scoped, tag = 'scratch operand']
  %s0 = inlined_call_operand.vmem [shape: bf16[2,8,256], index: 0, kind: input, shape index: {}]
  %s1 = inlined_call_operand.vmem [shape: f32[1,8], index: 1, kind: input, shape index: {}]
  %s2 = inlined_call_operand.vmem [shape: f32[1,8], index: 2, kind: input, shape index: {}]
  %s3 = inlined_call_operand.vmem [shape: bf16[72,8], index: 3, kind: input, shape index: {}]
  %s4 = inlined_call_operand.vmem [shape: bf16[2,8,256], index: 4, kind: output, shape index: {0}]
  %s5 = inlined_call_operand.vmem [shape: f32[2,2,8], index: 5, kind: output, shape index: {1}]
  %6 = xla_tuple %s4, %s5
  %s7 = sld [smem:[#allocation0]]
  $region69: #{resnet_block_forward.4} parent=0
    _
  %s9 = ssub.s32 1, %s7
  %s10 = scalar_select 0, %s9, %s7
  loop: start=0, step=1, limit=6
  $region2: #{resnet_block_forward.4} parent=0 // loop_pre_header
    _
  $region3: #{resnet_block_forward.4} parent=0 // loop_header
    %s12 = sphi 0, %s16
    %p13 = scmp.ge.s32.totalorder %s12, 6
    %s19 = sphi 0, %s31
    %s20 = sphi 0, %s27
    %s21 = sphi 0, %s19
    %s22 = sphi 0, %s20
    %s23 = sphi 0, %s21
    %s24 = sphi 0, %s22
    %s34 = sphi 0, %s36
    %s37 = sphi 0, %s34
    %s38 = sphi 0, %s37
    %s54 = sphi 0, %s38
    %s58 = sphi 0, %s58
    %s60 = sphi 0, %s58
    %s61 = sphi 0, %s60
    %s75 = sphi 0, %s61
    %s79 = sphi 0, %s79
    %s81 = sphi 0, %s79
    %s82 = sphi 0, %s81
    %s96 = sphi 0, %s82
    %s100 = sphi 0, %s100
    %s102 = sphi 0, %s100
    %s103 = sphi 0, %s102
    %s117 = sphi 0, %s103
    %s125 = sphi 0, %s127
    %s128 = sphi 0, %s125
    %s129 = sphi 0, %s128
    %s145 = sphi 0, %s129
    %s151 = sphi 0, %s153
    %s154 = sphi 0, %s151
    %s155 = sphi 0, %s154
    %s171 = sphi 0, %s155
  $region4: #{resnet_block_forward.4} parent=0 // loop_header_branch
    %15 = sbr.rel (%p13) target = $region8
  $region5: #{resnet_block_forward.4} parent=0 // loop_body
    %s17 = ssub.s32 %s12, 1
    %s18 = ssub.s32 %s12, 2
    %s25 = sadd.s32 1, %s20
    %p26 = scmp.ge.s32.totalorder %s25, 2
    %s27 = scalar_select %p26, 0, %s25
    %s28 = sadd.s32 1, %s19
    %s29 = scalar_select %p26, %s28, %s19
    %p30 = scmp.ge.s32.totalorder %s29, 2
    %s31 = scalar_select %p30, 0, %s29
    %s32 = ssub.s32 %s19, %s31
    %p33 = scmp.eq.s32.totalorder %s32, 0
    %s35 = sadd.s32 %s34, 1
    %s36 = scalar_select %p33, %s34, %s35
    %p39 = pneg %p33
    %p40 = scmp.eq.s32.totalorder %s12, 3
    %p41 = por %p39, %p40
    %p42 = scmp.ne.s32.totalorder %s34, %s37
    %p43 = scmp.eq.s32.totalorder %s12, 0
    %p44 = por %p42, %p43
    %p45 = scmp.ne.s32.totalorder %s34, %s37
    %p46 = scmp.eq.s32.totalorder %s17, 3
    %p47 = por %p45, %p46
    %p48 = scmp.ne.s32.totalorder %s37, %s38
    %p49 = scmp.eq.s32.totalorder %s17, 0
    %p50 = por %p48, %p49
    %p51 = scmp.ne.s32.totalorder %s37, %s38
    %p52 = scmp.eq.s32.totalorder %s18, 3
    %p53 = por %p51, %p52
    %p55 = scmp.ne.s32.totalorder %s38, %s54
    %p56 = scmp.eq.s32.totalorder %s18, 0
    %p57 = por %p55, %p56
    %s59 = sadd.s32 %s58, 1
    %p62 = scmp.eq.s32.totalorder %s12, 3
    %p63 = scmp.ne.s32.totalorder %s58, %s60
    %p64 = scmp.eq.s32.totalorder %s12, 0
    %p65 = por %p63, %p64
    %p66 = scmp.ne.s32.totalorder %s58, %s60
    %p67 = scmp.eq.s32.totalorder %s17, 3
    %p68 = por %p66, %p67
    %p69 = scmp.ne.s32.totalorder %s60, %s61
    %p70 = scmp.eq.s32.totalorder %s17, 0
    %p71 = por %p69, %p70
    %p72 = scmp.ne.s32.totalorder %s60, %s61
    %p73 = scmp.eq.s32.totalorder %s18, 3
    %p74 = por %p72, %p73
    %p76 = scmp.ne.s32.totalorder %s61, %s75
    %p77 = scmp.eq.s32.totalorder %s18, 0
    %p78 = por %p76, %p77
    %s80 = sadd.s32 %s79, 1
    %p83 = scmp.eq.s32.totalorder %s12, 3
    %p84 = scmp.ne.s32.totalorder %s79, %s81
    %p85 = scmp.eq.s32.totalorder %s12, 0
    %p86 = por %p84, %p85
    %p87 = scmp.ne.s32.totalorder %s79, %s81
    %p88 = scmp.eq.s32.totalorder %s17, 3
    %p89 = por %p87, %p88
    %p90 = scmp.ne.s32.totalorder %s81, %s82
    %p91 = scmp.eq.s32.totalorder %s17, 0
    %p92 = por %p90, %p91
    %p93 = scmp.ne.s32.totalorder %s81, %s82
    %p94 = scmp.eq.s32.totalorder %s18, 3
    %p95 = por %p93, %p94
    %p97 = scmp.ne.s32.totalorder %s82, %s96
    %p98 = scmp.eq.s32.totalorder %s18, 0
    %p99 = por %p97, %p98
    %s101 = sadd.s32 %s100, 1
    %p104 = scmp.eq.s32.totalorder %s12, 3
    %p105 = scmp.ne.s32.totalorder %s100, %s102
    %p106 = scmp.eq.s32.totalorder %s12, 0
    %p107 = por %p105, %p106
    %p108 = scmp.ne.s32.totalorder %s100, %s102
    %p109 = scmp.eq.s32.totalorder %s17, 3
    %p110 = por %p108, %p109
    %p111 = scmp.ne.s32.totalorder %s102, %s103
    %p112 = scmp.eq.s32.totalorder %s17, 0
    %p113 = por %p111, %p112
    %p114 = scmp.ne.s32.totalorder %s102, %s103
    %p115 = scmp.eq.s32.totalorder %s18, 3
    %p116 = por %p114, %p115
    %p118 = scmp.ne.s32.totalorder %s103, %s117
    %p119 = scmp.eq.s32.totalorder %s18, 0
    %p120 = por %p118, %p119
    %s121 = ssub.s32 %s19, %s31
    %s122 = ssub.s32 %s20, %s27
    %s123 = sor.u32 %s121, %s122
    %p124 = scmp.eq.s32.totalorder %s123, 0
    %s126 = sadd.s32 %s125, 1
    %s127 = scalar_select %p124, %s125, %s126
    %p130 = pneg %p124
    %p131 = scmp.eq.s32.totalorder %s12, 3
    %p132 = por %p130, %p131
    %p133 = scmp.ne.s32.totalorder %s125, %s128
    %p134 = scmp.eq.s32.totalorder %s12, 0
    %p135 = por %p133, %p134
    %p136 = scmp.ne.s32.totalorder %s125, %s128
    %p137 = scmp.eq.s32.totalorder %s17, 3
    %p138 = por %p136, %p137
    %p139 = scmp.ne.s32.totalorder %s128, %s129
    %p140 = scmp.eq.s32.totalorder %s17, 0
    %p141 = por %p139, %p140
    %p142 = scmp.ne.s32.totalorder %s128, %s129
    %p143 = scmp.eq.s32.totalorder %s18, 3
    %p144 = por %p142, %p143
    %p146 = scmp.ne.s32.totalorder %s129, %s145
    %p147 = scmp.eq.s32.totalorder %s18, 0
    %p148 = por %p146, %p147
    %s149 = ssub.s32 %s19, %s31
    %p150 = scmp.eq.s32.totalorder %s149, 0
    %s152 = sadd.s32 %s151, 1
    %s153 = scalar_select %p150, %s151, %s152
    %p156 = pneg %p150
    %p157 = scmp.eq.s32.totalorder %s12, 3
    %p158 = por %p156, %p157
    %p159 = scmp.ne.s32.totalorder %s151, %s154
    %p160 = scmp.eq.s32.totalorder %s12, 0
    %p161 = por %p159, %p160
    %p162 = scmp.ne.s32.totalorder %s151, %s154
    %p163 = scmp.eq.s32.totalorder %s17, 3
    %p164 = por %p162, %p163
    %p165 = scmp.ne.s32.totalorder %s154, %s155
    %p166 = scmp.eq.s32.totalorder %s17, 0
    %p167 = por %p165, %p166
    %p168 = scmp.ne.s32.totalorder %s154, %s155
    %p169 = scmp.eq.s32.totalorder %s18, 3
    %p170 = por %p168, %p169
    %p172 = scmp.ne.s32.totalorder %s155, %s171
    %p173 = scmp.eq.s32.totalorder %s18, 0
    %p174 = por %p172, %p173
    %p175 = scmp.le.s32.totalorder 1, %s12
    %p176 = scmp.lt.s32.totalorder %s12, 5
    %p177 = pnand %p175, %p176
    %p178 = pneg %p177
    // Predicated region
    $region9: #{resnet_block_forward.4} parent=5 // pred_check
      _
    $region10: #{resnet_block_forward.4} parent=5 // pred_check_branch
      %180 = sbr.rel (%p177) target = $region12
    $region11: #{resnet_block_forward.4} parent=5 // pred_region
      %s181 = ssub.s32 %s12, 1
      // Predicated region
      $region13: #{resnet_block_forward.4} parent=11 // pred_check
        %p182 = pneg %p71
      $region14: #{resnet_block_forward.4} parent=11 // pred_check_branch
        %184 = sbr.rel (%p182) target = $region16
      $region15: #{resnet_block_forward.4} parent=11 // pred_region
        _
      $region16: #{resnet_block_forward.4} parent=11 // pred_fallthru
        _
      // Predicated region
      $region17: #{resnet_block_forward.4} parent=11 // pred_check
        %p185 = pneg %p92
      $region18: #{resnet_block_forward.4} parent=11 // pred_check_branch
        %187 = sbr.rel (%p185) target = $region20
      $region19: #{resnet_block_forward.4} parent=11 // pred_region
        _
      $region20: #{resnet_block_forward.4} parent=11 // pred_fallthru
        _
      // Predicated region
      $region21: #{resnet_block_forward.4} parent=11 // pred_check
        %p188 = pneg %p113
      $region22: #{resnet_block_forward.4} parent=11 // pred_check_branch
        %190 = sbr.rel (%p188) target = $region24
      $region23: #{resnet_block_forward.4} parent=11 // pred_region
        _
      $region24: #{resnet_block_forward.4} parent=11 // pred_fallthru
        _
    $region12: #{resnet_block_forward.4} parent=5 // pred_fallthru
      _
    %p191 = scmp.lt.s32.totalorder %s12, 4
    // Predicated region
    $region25: #{resnet_block_forward.4} parent=5 // pred_check
      %p192 = pneg %p191
    $region26: #{resnet_block_forward.4} parent=5 // pred_check_branch
      %194 = sbr.rel (%p192) target = $region28
    $region27: #{resnet_block_forward.4} parent=5 // pred_region
      // Predicated region
      $region29: #{resnet_block_forward.4} parent=27 // pred_check
        %p195 = pneg %p44
      $region30: #{resnet_block_forward.4} parent=27 // pred_check_branch
        %197 = sbr.rel (%p195) target = $region32
      $region31: #{resnet_block_forward.4} parent=27 // pred_region
        %p198 = scmp.lt.s32.totalorder %s19, 1
        %s199 = scalar_select %p198, %s19, 1
        %s200 = smul.addr %s199, 2
        %s201 = smul.addr %s200, 4
        %s202 = scalar_lea.vmem %s0, %s201
      $region32: #{resnet_block_forward.4} parent=27 // pred_fallthru
        _
    $region28: #{resnet_block_forward.4} parent=5 // pred_fallthru
      _
    %p203 = scmp.le.s32.totalorder 1, %s12
    %p204 = scmp.lt.s32.totalorder %s12, 5
    %p205 = pnand %p203, %p204
    %p206 = pneg %p205
    // Predicated region
    $region33: #{resnet_block_forward.4} parent=5 // pred_check
      _
    $region34: #{resnet_block_forward.4} parent=5 // pred_check_branch
      %208 = sbr.rel (%p205) target = $region36
    $region35: #{resnet_block_forward.4} parent=5 // pred_region
      %s209 = ssub.s32 %s12, 1
      %p210 = scmp.lt.s32.totalorder %s21, 1
      %s211 = scalar_select %p210, %s21, 1
      %s212 = smul.addr %s211, 2
      %s213 = smul.addr %s212, 4
      %s214 = scalar_lea.vmem %s0, %s213
      %p215 = pneg %p50
      %p216 = pneg %p47
      %p217 = pneg %p71
      %p218 = pneg %p68
      %p219 = pneg %p92
      %p220 = pneg %p89
      %p221 = pneg %p113
      %p222 = pneg %p110
      %p223 = pneg %p141
      %p224 = pneg %p138
      %p225 = scmp.lt.s32.totalorder %s21, 1
      %s226 = scalar_select %p225, %s21, 1
      %p227 = scmp.lt.s32.totalorder %s22, 1
      %s228 = scalar_select %p227, %s22, 1
      %s229 = smul.addr %s226, 2
      %s230 = sadd.s32 %s228, %s229
      %s231 = smul.addr %s230, 4
      %s232 = scalar_lea.vmem %s4, %s231
      %p233 = pneg %p167
      %p234 = pneg %p164
      %p235 = scmp.lt.s32.totalorder %s21, 1
      %s236 = scalar_select %p235, %s21, 1
      %s237 = smul.addr %s236, 2
      %s238 = scalar_lea.vmem %s5, %s237
      %p239 = scmp.lt.s32.totalorder %s21, 1
      %s240 = scalar_select %p239, %s21, 1
      %s241 = smul.addr %s240, 2
      %s242 = smul.addr %s241, 4
      %s243 = scalar_lea.vmem %s0, %s242
      %p244 = scmp.lt.s32.totalorder %s21, 1
      %s245 = scalar_select %p244, %s21, 1
      %p246 = scmp.lt.s32.totalorder %s22, 1
      %s247 = scalar_select %p246, %s22, 1
      %s248 = smul.addr %s245, 2
      %s249 = sadd.s32 %s247, %s248
      %s250 = smul.addr %s249, 4
      %s251 = scalar_lea.vmem %s4, %s250
      %p252 = scmp.lt.s32.totalorder %s21, 1
      %s253 = scalar_select %p252, %s21, 1
      %s254 = smul.addr %s253, 2
      %s255 = scalar_lea.vmem %s5, %s254
      %p257 = scmp.eq.s32.totalorder %s22, 0
      // Predicated region
      $region37: #{resnet_block_forward.4} parent=35 // pred_check
        %p258 = pneg %p257
      $region38: #{resnet_block_forward.4} parent=35 // pred_check_branch
        %260 = sbr.rel (%p258) target = $region40
      $region39: #{resnet_block_forward.4} parent=35 // pred_region
        %v261 = vld [vmem:[%s243] sm:$0xff]
        %v262 = vunpack.c.l.bf16 %v261
        %v263 = vunpack.c.h.bf16 %v261
        %264 = vxpose.xlu0.b32.start [1/16] %v262, 128
        %265 = vxpose.xlu0.b32.cont [2/16] 0.0, 128
        %266 = vxpose.xlu0.b32.cont [3/16] 0.0, 128
        %267 = vxpose.xlu0.b32.cont [4/16] 0.0, 128
        %268 = vxpose.xlu0.b32.cont [5/16] 0.0, 128
        %269 = vxpose.xlu0.b32.cont [6/16] 0.0, 128
        %270 = vxpose.xlu0.b32.cont [7/16] 0.0, 128
        %271 = vxpose.xlu0.b32.cont [8/16] 0.0, 128
        %272 = vxpose.xlu0.b32.cont [9/16] 0.0, 128
        %273 = vxpose.xlu0.b32.cont [10/16] 0.0, 128
        %274 = vxpose.xlu0.b32.cont [11/16] 0.0, 128
        %275 = vxpose.xlu0.b32.cont [12/16] 0.0, 128
        %276 = vxpose.xlu0.b32.cont [13/16] 0.0, 128
        %277 = vxpose.xlu0.b32.cont [14/16] 0.0, 128
        %278 = vxpose.xlu0.b32.cont [15/16] 0.0, 128
        %279 = vxpose.xlu0.b32.end [16/16] 0.0, 128
        %v280 = vpop.trf.xlu0
        %v281 = vpop.trf.xlu0
        %v282 = vpop.trf.xlu0
        %v283 = vpop.trf.xlu0
        %v284 = vpop.trf.xlu0
        %v285 = vpop.trf.xlu0
        %v286 = vpop.trf.xlu0
        %v287 = vpop.trf.xlu0
        %v288 = vpop.trf.xlu0
        %v289 = vpop.trf.xlu0
        %v290 = vpop.trf.xlu0
        %v291 = vpop.trf.xlu0
        %v292 = vpop.trf.xlu0
        %v293 = vpop.trf.xlu0
        %v294 = vpop.trf.xlu0
        %v295 = vpop.trf.xlu0
        %296 = vxpose.xlu0.b32.start [1/16] %v263, 128
        %297 = vxpose.xlu0.b32.cont [2/16] 0.0, 128
        %298 = vxpose.xlu0.b32.cont [3/16] 0.0, 128
        %299 = vxpose.xlu0.b32.cont [4/16] 0.0, 128
        %300 = vxpose.xlu0.b32.cont [5/16] 0.0, 128
        %301 = vxpose.xlu0.b32.cont [6/16] 0.0, 128
        %302 = vxpose.xlu0.b32.cont [7/16] 0.0, 128
        %303 = vxpose.xlu0.b32.cont [8/16] 0.0, 128
        %304 = vxpose.xlu0.b32.cont [9/16] 0.0, 128
        %305 = vxpose.xlu0.b32.cont [10/16] 0.0, 128
        %306 = vxpose.xlu0.b32.cont [11/16] 0.0, 128
        %307 = vxpose.xlu0.b32.cont [12/16] 0.0, 128
        %308 = vxpose.xlu0.b32.cont [13/16] 0.0, 128
        %309 = vxpose.xlu0.b32.cont [14/16] 0.0, 128
        %310 = vxpose.xlu0.b32.cont [15/16] 0.0, 128
        %311 = vxpose.xlu0.b32.end [16/16] 0.0, 128
        %v312 = vpop.trf.xlu0
        %v313 = vpop.trf.xlu0
        %v314 = vpop.trf.xlu0
        %v315 = vpop.trf.xlu0
        %v316 = vpop.trf.xlu0
        %v317 = vpop.trf.xlu0
        %v318 = vpop.trf.xlu0
        %v319 = vpop.trf.xlu0
        %v320 = vpop.trf.xlu0
        %v321 = vpop.trf.xlu0
        %v322 = vpop.trf.xlu0
        %v323 = vpop.trf.xlu0
        %v324 = vpop.trf.xlu0
        %v325 = vpop.trf.xlu0
        %v326 = vpop.trf.xlu0
        %v327 = vpop.trf.xlu0
        %v328 = vld [vmem:[%s1] sm:$0x1]
        %v330 = vlaneseq
        %v331 = vshrl.u32 %v330, 7
        %v332 = vsub.s32 0, %v331
        %v333 = vrot.slane %v328, %v332
        %v335 = vmul.f32 %v280, %v333
        %v336 = vmul.f32 %v281, %v333
        %v337 = vmul.f32 %v282, %v333
        %v338 = vmul.f32 %v283, %v333
        %v339 = vmul.f32 %v284, %v333
        %v340 = vmul.f32 %v285, %v333
        %v341 = vmul.f32 %v286, %v333
        %v342 = vmul.f32 %v287, %v333
        %v343 = vmul.f32 %v288, %v333
        %v344 = vmul.f32 %v289, %v333
        %v345 = vmul.f32 %v290, %v333
        %v346 = vmul.f32 %v291, %v333
        %v347 = vmul.f32 %v292, %v333
        %v348 = vmul.f32 %v293, %v333
        %v349 = vmul.f32 %v294, %v333
        %v350 = vmul.f32 %v295, %v333
        %v351 = vmul.f32 %v312, %v333
        %v352 = vmul.f32 %v313, %v333
        %v353 = vmul.f32 %v314, %v333
        %v354 = vmul.f32 %v315, %v333
        %v355 = vmul.f32 %v316, %v333
        %v356 = vmul.f32 %v317, %v333
        %v357 = vmul.f32 %v318, %v333
        %v358 = vmul.f32 %v319, %v333
        %v359 = vmul.f32 %v320, %v333
        %v360 = vmul.f32 %v321, %v333
        %v361 = vmul.f32 %v322, %v333
        %v362 = vmul.f32 %v323, %v333
        %v363 = vmul.f32 %v324, %v333
        %v364 = vmul.f32 %v325, %v333
        %v365 = vmul.f32 %v326, %v333
        %v366 = vmul.f32 %v327, %v333
        %v367 = vld [vmem:[%s2] sm:$0x1]
        %v369 = vlaneseq
        %v370 = vshrl.u32 %v369, 7
        %v371 = vsub.s32 0, %v370
        %v372 = vrot.slane %v367, %v371
        %v374 = vadd.f32 %v335, %v372
        %v375 = vadd.f32 %v336, %v372
        %v376 = vadd.f32 %v337, %v372
        %v377 = vadd.f32 %v338, %v372
        %v378 = vadd.f32 %v339, %v372
        %v379 = vadd.f32 %v340, %v372
        %v380 = vadd.f32 %v341, %v372
        %v381 = vadd.f32 %v342, %v372
        %v382 = vadd.f32 %v343, %v372
        %v383 = vadd.f32 %v344, %v372
        %v384 = vadd.f32 %v345, %v372
        %v385 = vadd.f32 %v346, %v372
        %v386 = vadd.f32 %v347, %v372
        %v387 = vadd.f32 %v348, %v372
        %v388 = vadd.f32 %v349, %v372
        %v389 = vadd.f32 %v350, %v372
        %v390 = vadd.f32 %v351, %v372
        %v391 = vadd.f32 %v352, %v372
        %v392 = vadd.f32 %v353, %v372
        %v393 = vadd.f32 %v354, %v372
        %v394 = vadd.f32 %v355, %v372
        %v395 = vadd.f32 %v356, %v372
        %v396 = vadd.f32 %v357, %v372
        %v397 = vadd.f32 %v358, %v372
        %v398 = vadd.f32 %v359, %v372
        %v399 = vadd.f32 %v360, %v372
        %v400 = vadd.f32 %v361, %v372
        %v401 = vadd.f32 %v362, %v372
        %v402 = vadd.f32 %v363, %v372
        %v403 = vadd.f32 %v364, %v372
        %v404 = vadd.f32 %v365, %v372
        %v405 = vadd.f32 %v366, %v372
        %v406 = vmax.f32 %v374, 0.0
        %v407 = vmax.f32 %v375, 0.0
        %v408 = vmax.f32 %v376, 0.0
        %v409 = vmax.f32 %v377, 0.0
        %v410 = vmax.f32 %v378, 0.0
        %v411 = vmax.f32 %v379, 0.0
        %v412 = vmax.f32 %v380, 0.0
        %v413 = vmax.f32 %v381, 0.0
        %v414 = vmax.f32 %v382, 0.0
        %v415 = vmax.f32 %v383, 0.0
        %v416 = vmax.f32 %v384, 0.0
        %v417 = vmax.f32 %v385, 0.0
        %v418 = vmax.f32 %v386, 0.0
        %v419 = vmax.f32 %v387, 0.0
        %v420 = vmax.f32 %v388, 0.0
        %v421 = vmax.f32 %v389, 0.0
        %v422 = vmax.f32 %v390, 0.0
        %v423 = vmax.f32 %v391, 0.0
        %v424 = vmax.f32 %v392, 0.0
        %v425 = vmax.f32 %v393, 0.0
        %v426 = vmax.f32 %v394, 0.0
        %v427 = vmax.f32 %v395, 0.0
        %v428 = vmax.f32 %v396, 0.0
        %v429 = vmax.f32 %v397, 0.0
        %v430 = vmax.f32 %v398, 0.0
        %v431 = vmax.f32 %v399, 0.0
        %v432 = vmax.f32 %v400, 0.0
        %v433 = vmax.f32 %v401, 0.0
        %v434 = vmax.f32 %v402, 0.0
        %v435 = vmax.f32 %v403, 0.0
        %v436 = vmax.f32 %v404, 0.0
        %v437 = vmax.f32 %v405, 0.0
        %s438 = scalar_lea.vmem [#allocation2], 24
        %vm439 = vcmask 64512
        %440 = vst.msk [vmem:[%s438 + $0x1] sm:$0xff] %vm439, %v406
        %441 = vst.msk [vmem:[%s438 + $0x9] sm:$0xff] %vm439, %v407
        %442 = vst.msk [vmem:[%s438 + $0x19] sm:$0xff] %vm439, %v408
        %443 = vst.msk [vmem:[%s438 + $0x21] sm:$0xff] %vm439, %v409
        %444 = vst.msk [vmem:[%s438 + $0x31] sm:$0xff] %vm439, %v410
        %445 = vst.msk [vmem:[%s438 + $0x39] sm:$0xff] %vm439, %v411
        %446 = vst.msk [vmem:[%s438 + $0x49] sm:$0xff] %vm439, %v412
        %447 = vst.msk [vmem:[%s438 + $0x51] sm:$0xff] %vm439, %v413
        %448 = vst.msk [vmem:[%s438 + $0x61] sm:$0xff] %vm439, %v414
        %449 = vst.msk [vmem:[%s438 + $0x69] sm:$0xff] %vm439, %v415
        %450 = vst.msk [vmem:[%s438 + $0x79] sm:$0xff] %vm439, %v416
        %451 = vst.msk [vmem:[%s438 + $0x81] sm:$0xff] %vm439, %v417
        %452 = vst.msk [vmem:[%s438 + $0x91] sm:$0xff] %vm439, %v418
        %453 = vst.msk [vmem:[%s438 + $0x99] sm:$0xff] %vm439, %v419
        %454 = vst.msk [vmem:[%s438 + $0xa9] sm:$0xff] %vm439, %v420
        %455 = vst.msk [vmem:[%s438 + $0xb1] sm:$0xff] %vm439, %v421
        %456 = vst.msk [vmem:[%s438 + $0xc1] sm:$0xff] %vm439, %v422
        %457 = vst.msk [vmem:[%s438 + $0xc9] sm:$0xff] %vm439, %v423
        %458 = vst.msk [vmem:[%s438 + $0xd9] sm:$0xff] %vm439, %v424
        %459 = vst.msk [vmem:[%s438 + $0xe1] sm:$0xff] %vm439, %v425
        %460 = vst.msk [vmem:[%s438 + $0xf1] sm:$0xff] %vm439, %v426
        %461 = vst.msk [vmem:[%s438 + $0xf9] sm:$0xff] %vm439, %v427
        %462 = vst.msk [vmem:[%s438 + $0x109] sm:$0xff] %vm439, %v428
        %463 = vst.msk [vmem:[%s438 + $0x111] sm:$0xff] %vm439, %v429
        %464 = vst.msk [vmem:[%s438 + $0x121] sm:$0xff] %vm439, %v430
        %465 = vst.msk [vmem:[%s438 + $0x129] sm:$0xff] %vm439, %v431
        %466 = vst.msk [vmem:[%s438 + $0x139] sm:$0xff] %vm439, %v432
        %467 = vst.msk [vmem:[%s438 + $0x141] sm:$0xff] %vm439, %v433
        %468 = vst.msk [vmem:[%s438 + $0x151] sm:$0xff] %vm439, %v434
        %469 = vst.msk [vmem:[%s438 + $0x159] sm:$0xff] %vm439, %v435
        %470 = vst.msk [vmem:[%s438 + $0x169] sm:$0xff] %vm439, %v436
        %471 = vst.msk [vmem:[%s438 + $0x171] sm:$0xff] %vm439, %v437
        %472 = vst.msk [vmem:[#allocation2] sm:$0xff] %vm439, 0.0
        %473 = vst.msk [vmem:[#allocation2 + $0x8] sm:$0xff] %vm439, 0.0
        %vm474 = vcmask 58368
        %475 = vst.msk [vmem:[#allocation2 + $0x10] sm:$0x3] %vm474, 0.0
        %s476 = scalar_lea.vmem [#allocation2], 408
        %477 = vst.msk [vmem:[%s476] sm:$0xff] %vm439, 0.0
        %478 = vst.msk [vmem:[%s476 + $0x8] sm:$0xff] %vm439, 0.0
        %479 = vst.msk [vmem:[%s476 + $0x10] sm:$0x3] %vm474, 0.0
        %vm480 = vcmask 57344
        %481 = vst.msk [vmem:[#allocation2] sm:$0x1] %vm480, 0.0
        %482 = vst.msk [vmem:[#allocation2 + $0x18] sm:$0x1] %vm480, 0.0
        %483 = vst.msk [vmem:[#allocation2 + $0x30] sm:$0x1] %vm480, 0.0
        %484 = vst.msk [vmem:[#allocation2 + $0x48] sm:$0x1] %vm480, 0.0
        %485 = vst.msk [vmem:[#allocation2 + $0x60] sm:$0x1] %vm480, 0.0
        %486 = vst.msk [vmem:[#allocation2 + $0x78] sm:$0x1] %vm480, 0.0
        %487 = vst.msk [vmem:[#allocation2 + $0x90] sm:$0x1] %vm480, 0.0
        %488 = vst.msk [vmem:[#allocation2 + $0xa8] sm:$0x1] %vm480, 0.0
        %489 = vst.msk [vmem:[#allocation2 + $0xc0] sm:$0x1] %vm480, 0.0
        %490 = vst.msk [vmem:[#allocation2 + $0xd8] sm:$0x1] %vm480, 0.0
        %491 = vst.msk [vmem:[#allocation2 + $0xf0] sm:$0x1] %vm480, 0.0
        %492 = vst.msk [vmem:[#allocation2 + $0x108] sm:$0x1] %vm480, 0.0
        %493 = vst.msk [vmem:[#allocation2 + $0x120] sm:$0x1] %vm480, 0.0
        %494 = vst.msk [vmem:[#allocation2 + $0x138] sm:$0x1] %vm480, 0.0
        %495 = vst.msk [vmem:[#allocation2 + $0x150] sm:$0x1] %vm480, 0.0
        %496 = vst.msk [vmem:[#allocation2 + $0x168] sm:$0x1] %vm480, 0.0
        %497 = vst.msk [vmem:[#allocation2 + $0x180] sm:$0x1] %vm480, 0.0
        %498 = vst.msk [vmem:[#allocation2 + $0x198] sm:$0x1] %vm480, 0.0
        %499 = vst.msk [vmem:[#allocation2 + $0x11] sm:$0x1] %vm480, 0.0
        %500 = vst.msk [vmem:[#allocation2 + $0x29] sm:$0x1] %vm480, 0.0
        %501 = vst.msk [vmem:[#allocation2 + $0x41] sm:$0x1] %vm480, 0.0
        %502 = vst.msk [vmem:[#allocation2 + $0x59] sm:$0x1] %vm480, 0.0
        %503 = vst.msk [vmem:[#allocation2 + $0x71] sm:$0x1] %vm480, 0.0
        %504 = vst.msk [vmem:[#allocation2 + $0x89] sm:$0x1] %vm480, 0.0
        %505 = vst.msk [vmem:[#allocation2 + $0xa1] sm:$0x1] %vm480, 0.0
        %506 = vst.msk [vmem:[#allocation2 + $0xb9] sm:$0x1] %vm480, 0.0
        %507 = vst.msk [vmem:[#allocation2 + $0xd1] sm:$0x1] %vm480, 0.0
        %508 = vst.msk [vmem:[#allocation2 + $0xe9] sm:$0x1] %vm480, 0.0
        %509 = vst.msk [vmem:[#allocation2 + $0x101] sm:$0x1] %vm480, 0.0
        %510 = vst.msk [vmem:[#allocation2 + $0x119] sm:$0x1] %vm480, 0.0
        %511 = vst.msk [vmem:[#allocation2 + $0x131] sm:$0x1] %vm480, 0.0
        %512 = vst.msk [vmem:[#allocation2 + $0x149] sm:$0x1] %vm480, 0.0
        %513 = vst.msk [vmem:[#allocation2 + $0x161] sm:$0x1] %vm480, 0.0
        %514 = vst.msk [vmem:[#allocation2 + $0x179] sm:$0x1] %vm480, 0.0
        %515 = vst.msk [vmem:[#allocation2 + $0x191] sm:$0x1] %vm480, 0.0
        %516 = vst.msk [vmem:[#allocation2 + $0x1a9] sm:$0x1] %vm480, 0.0
      $region40: #{resnet_block_forward.4} parent=35 // pred_fallthru
        _
      %s517 = smul.u32 %s22, 8
      %s518 = smul.u32 %s517, 24
      %s519 = scalar_lea.vmem [#allocation2], %s518
      %v520 = vld [vmem:[%s519] sm:$0xff]
      %v521 = vld [vmem:[%s519 + $0x8] sm:$0xff]
      %v522 = vld [vmem:[%s519 + $0x10] sm:$0x3]
      %v523 = vld [vmem:[%s519 + $0x18] sm:$0xff]
      %v524 = vld [vmem:[%s519 + $0x20] sm:$0xff]
      %v525 = vld [vmem:[%s519 + $0x28] sm:$0x3]
      %v526 = vld [vmem:[%s519 + $0x30] sm:$0xff]
      %v527 = vld [vmem:[%s519 + $0x38] sm:$0xff]
      %v528 = vld [vmem:[%s519 + $0x40] sm:$0x3]
      %v529 = vld [vmem:[%s519 + $0x48] sm:$0xff]
      %v530 = vld [vmem:[%s519 + $0x50] sm:$0xff]
      %v531 = vld [vmem:[%s519 + $0x58] sm:$0x3]
      %v532 = vld [vmem:[%s519 + $0x60] sm:$0xff]
      %v533 = vld [vmem:[%s519 + $0x68] sm:$0xff]
      %v534 = vld [vmem:[%s519 + $0x70] sm:$0x3]
      %v535 = vld [vmem:[%s519 + $0x78] sm:$0xff]
      %v536 = vld [vmem:[%s519 + $0x80] sm:$0xff]
      %v537 = vld [vmem:[%s519 + $0x88] sm:$0x3]
      %v538 = vld [vmem:[%s519 + $0x90] sm:$0xff]
      %v539 = vld [vmem:[%s519 + $0x98] sm:$0xff]
      %v540 = vld [vmem:[%s519 + $0xa0] sm:$0x3]
      %v541 = vld [vmem:[%s519 + $0xa8] sm:$0xff]
      %v542 = vld [vmem:[%s519 + $0xb0] sm:$0xff]
      %v543 = vld [vmem:[%s519 + $0xb8] sm:$0x3]
      %v544 = vld [vmem:[%s519 + $0xc0] sm:$0xff]
      %v545 = vld [vmem:[%s519 + $0xc8] sm:$0xff]
      %v546 = vld [vmem:[%s519 + $0xd0] sm:$0x3]
      %v547 = vld [vmem:[%s519 + $0xd8] sm:$0xff]
      %v548 = vld [vmem:[%s519 + $0xe0] sm:$0xff]
      %v549 = vld [vmem:[%s519 + $0xe8] sm:$0x3]
      %vm574 = vcmask 1046528
      %v575 = vrot.slane %v520, 1
      %v576 = vrot.slane %v521, 1
      %v577 = vsel %vm574, %v575, %v576
      %v578 = vrot.slane %v522, 1
      %v579 = vsel %vm574, %v576, %v578
      %v580 = vrot.slane %v523, 1
      %v581 = vrot.slane %v524, 1
      %v582 = vsel %vm574, %v580, %v581
      %v583 = vrot.slane %v525, 1
      %v584 = vsel %vm574, %v581, %v583
      %v585 = vrot.slane %v526, 1
      %v586 = vrot.slane %v527, 1
      %v587 = vsel %vm574, %v585, %v586
      %v588 = vrot.slane %v528, 1
      %v589 = vsel %vm574, %v586, %v588
      %v590 = vrot.slane %v529, 1
      %v591 = vrot.slane %v530, 1
      %v592 = vsel %vm574, %v590, %v591
      %v593 = vrot.slane %v531, 1
      %v594 = vsel %vm574, %v591, %v593
      %v595 = vrot.slane %v532, 1
      %v596 = vrot.slane %v533, 1
      %v597 = vsel %vm574, %v595, %v596
      %v598 = vrot.slane %v534, 1
      %v599 = vsel %vm574, %v596, %v598
      %v600 = vrot.slane %v535, 1
      %v601 = vrot.slane %v536, 1
      %v602 = vsel %vm574, %v600, %v601
      %v603 = vrot.slane %v537, 1
      %v604 = vsel %vm574, %v601, %v603
      %v605 = vrot.slane %v538, 1
      %v606 = vrot.slane %v539, 1
      %v607 = vsel %vm574, %v605, %v606
      %v608 = vrot.slane %v540, 1
      %v609 = vsel %vm574, %v606, %v608
      %v610 = vrot.slane %v541, 1
      %v611 = vrot.slane %v542, 1
      %v612 = vsel %vm574, %v610, %v611
      %v613 = vrot.slane %v543, 1
      %v614 = vsel %vm574, %v611, %v613
      %615 = vrot.lane.b32.xlu0 %v577, 8
      %v616 = vpop.permute.xlu0 %615
      %617 = vrot.lane.b32.xlu0 %v579, 8
      %v618 = vpop.permute.xlu0 %617
      %619 = vrot.lane.b32.xlu0 %v582, 8
      %v620 = vpop.permute.xlu0 %619
      %621 = vrot.lane.b32.xlu0 %v584, 8
      %v622 = vpop.permute.xlu0 %621
      %623 = vrot.lane.b32.xlu0 %v587, 8
      %v624 = vpop.permute.xlu0 %623
      %625 = vrot.lane.b32.xlu0 %v589, 8
      %v626 = vpop.permute.xlu0 %625
      %627 = vrot.lane.b32.xlu0 %v592, 8
      %v628 = vpop.permute.xlu0 %627
      %629 = vrot.lane.b32.xlu0 %v594, 8
      %v630 = vpop.permute.xlu0 %629
      %631 = vrot.lane.b32.xlu0 %v597, 8
      %v632 = vpop.permute.xlu0 %631
      %633 = vrot.lane.b32.xlu0 %v599, 8
      %v634 = vpop.permute.xlu0 %633
      %635 = vrot.lane.b32.xlu0 %v602, 8
      %v636 = vpop.permute.xlu0 %635
      %637 = vrot.lane.b32.xlu0 %v604, 8
      %v638 = vpop.permute.xlu0 %637
      %639 = vrot.lane.b32.xlu0 %v607, 8
      %v640 = vpop.permute.xlu0 %639
      %641 = vrot.lane.b32.xlu0 %v609, 8
      %v642 = vpop.permute.xlu0 %641
      %643 = vrot.lane.b32.xlu0 %v612, 8
      %v644 = vpop.permute.xlu0 %643
      %645 = vrot.lane.b32.xlu0 %v614, 8
      %v646 = vpop.permute.xlu0 %645
      %vm663 = vcmask 1045504
      %v664 = vrot.slane %v520, 2
      %v665 = vrot.slane %v521, 2
      %v666 = vsel %vm663, %v664, %v665
      %v667 = vrot.slane %v522, 2
      %v668 = vsel %vm663, %v665, %v667
      %v669 = vrot.slane %v523, 2
      %v670 = vrot.slane %v524, 2
      %v671 = vsel %vm663, %v669, %v670
      %v672 = vrot.slane %v525, 2
      %v673 = vsel %vm663, %v670, %v672
      %v674 = vrot.slane %v526, 2
      %v675 = vrot.slane %v527, 2
      %v676 = vsel %vm663, %v674, %v675
      %v677 = vrot.slane %v528, 2
      %v678 = vsel %vm663, %v675, %v677
      %v679 = vrot.slane %v529, 2
      %v680 = vrot.slane %v530, 2
      %v681 = vsel %vm663, %v679, %v680
      %v682 = vrot.slane %v531, 2
      %v683 = vsel %vm663, %v680, %v682
      %v684 = vrot.slane %v532, 2
      %v685 = vrot.slane %v533, 2
      %v686 = vsel %vm663, %v684, %v685
      %v687 = vrot.slane %v534, 2
      %v688 = vsel %vm663, %v685, %v687
      %v689 = vrot.slane %v535, 2
      %v690 = vrot.slane %v536, 2
      %v691 = vsel %vm663, %v689, %v690
      %v692 = vrot.slane %v537, 2
      %v693 = vsel %vm663, %v690, %v692
      %v694 = vrot.slane %v538, 2
      %v695 = vrot.slane %v539, 2
      %v696 = vsel %vm663, %v694, %v695
      %v697 = vrot.slane %v540, 2
      %v698 = vsel %vm663, %v695, %v697
      %v699 = vrot.slane %v541, 2
      %v700 = vrot.slane %v542, 2
      %v701 = vsel %vm663, %v699, %v700
      %v702 = vrot.slane %v543, 2
      %v703 = vsel %vm663, %v700, %v702
      %704 = vrot.lane.b32.xlu0 %v666, 16
      %v705 = vpop.permute.xlu0 %704
      %706 = vrot.lane.b32.xlu0 %v668, 16
      %v707 = vpop.permute.xlu0 %706
      %708 = vrot.lane.b32.xlu0 %v671, 16
      %v709 = vpop.permute.xlu0 %708
      %710 = vrot.lane.b32.xlu0 %v673, 16
      %v711 = vpop.permute.xlu0 %710
      %712 = vrot.lane.b32.xlu0 %v676, 16
      %v713 = vpop.permute.xlu0 %712
      %714 = vrot.lane.b32.xlu0 %v678, 16
      %v715 = vpop.permute.xlu0 %714
      %716 = vrot.lane.b32.xlu0 %v681, 16
      %v717 = vpop.permute.xlu0 %716
      %718 = vrot.lane.b32.xlu0 %v683, 16
      %v719 = vpop.permute.xlu0 %718
      %720 = vrot.lane.b32.xlu0 %v686, 16
      %v721 = vpop.permute.xlu0 %720
      %722 = vrot.lane.b32.xlu0 %v688, 16
      %v723 = vpop.permute.xlu0 %722
      %724 = vrot.lane.b32.xlu0 %v691, 16
      %v725 = vpop.permute.xlu0 %724
      %726 = vrot.lane.b32.xlu0 %v693, 16
      %v727 = vpop.permute.xlu0 %726
      %728 = vrot.lane.b32.xlu0 %v696, 16
      %v729 = vpop.permute.xlu0 %728
      %730 = vrot.lane.b32.xlu0 %v698, 16
      %v731 = vpop.permute.xlu0 %730
      %732 = vrot.lane.b32.xlu0 %v701, 16
      %v733 = vpop.permute.xlu0 %732
      %734 = vrot.lane.b32.xlu0 %v703, 16
      %v735 = vpop.permute.xlu0 %734
      %754 = vrot.lane.b32.xlu0 %v523, 24
      %v755 = vpop.permute.xlu0 %754
      %756 = vrot.lane.b32.xlu0 %v524, 24
      %v757 = vpop.permute.xlu0 %756
      %758 = vrot.lane.b32.xlu0 %v526, 24
      %v759 = vpop.permute.xlu0 %758
      %760 = vrot.lane.b32.xlu0 %v527, 24
      %v761 = vpop.permute.xlu0 %760
      %762 = vrot.lane.b32.xlu0 %v529, 24
      %v763 = vpop.permute.xlu0 %762
      %764 = vrot.lane.b32.xlu0 %v530, 24
      %v765 = vpop.permute.xlu0 %764
      %766 = vrot.lane.b32.xlu0 %v532, 24
      %v767 = vpop.permute.xlu0 %766
      %768 = vrot.lane.b32.xlu0 %v533, 24
      %v769 = vpop.permute.xlu0 %768
      %770 = vrot.lane.b32.xlu0 %v535, 24
      %v771 = vpop.permute.xlu0 %770
      %772 = vrot.lane.b32.xlu0 %v536, 24
      %v773 = vpop.permute.xlu0 %772
      %774 = vrot.lane.b32.xlu0 %v538, 24
      %v775 = vpop.permute.xlu0 %774
      %776 = vrot.lane.b32.xlu0 %v539, 24
      %v777 = vpop.permute.xlu0 %776
      %778 = vrot.lane.b32.xlu0 %v541, 24
      %v779 = vpop.permute.xlu0 %778
      %780 = vrot.lane.b32.xlu0 %v542, 24
      %v781 = vpop.permute.xlu0 %780
      %782 = vrot.lane.b32.xlu0 %v544, 24
      %v783 = vpop.permute.xlu0 %782
      %784 = vrot.lane.b32.xlu0 %v545, 24
      %v785 = vpop.permute.xlu0 %784
      %v803 = vrot.slane %v544, 1
      %v804 = vrot.slane %v545, 1
      %v805 = vsel %vm574, %v803, %v804
      %v806 = vrot.slane %v546, 1
      %v807 = vsel %vm574, %v804, %v806
      %808 = vrot.lane.b32.xlu0 %v582, 32
      %v809 = vpop.permute.xlu0 %808
      %810 = vrot.lane.b32.xlu0 %v584, 32
      %v811 = vpop.permute.xlu0 %810
      %812 = vrot.lane.b32.xlu0 %v587, 32
      %v813 = vpop.permute.xlu0 %812
      %814 = vrot.lane.b32.xlu0 %v589, 32
      %v815 = vpop.permute.xlu0 %814
      %816 = vrot.lane.b32.xlu0 %v592, 32
      %v817 = vpop.permute.xlu0 %816
      %818 = vrot.lane.b32.xlu0 %v594, 32
      %v819 = vpop.permute.xlu0 %818
      %820 = vrot.lane.b32.xlu0 %v597, 32
      %v821 = vpop.permute.xlu0 %820
      %822 = vrot.lane.b32.xlu0 %v599, 32
      %v823 = vpop.permute.xlu0 %822
      %824 = vrot.lane.b32.xlu0 %v602, 32
      %v825 = vpop.permute.xlu0 %824
      %826 = vrot.lane.b32.xlu0 %v604, 32
      %v827 = vpop.permute.xlu0 %826
      %828 = vrot.lane.b32.xlu0 %v607, 32
      %v829 = vpop.permute.xlu0 %828
      %830 = vrot.lane.b32.xlu0 %v609, 32
      %v831 = vpop.permute.xlu0 %830
      %832 = vrot.lane.b32.xlu0 %v612, 32
      %v833 = vpop.permute.xlu0 %832
      %834 = vrot.lane.b32.xlu0 %v614, 32
      %v835 = vpop.permute.xlu0 %834
      %836 = vrot.lane.b32.xlu0 %v805, 32
      %v837 = vpop.permute.xlu0 %836
      %838 = vrot.lane.b32.xlu0 %v807, 32
      %v839 = vpop.permute.xlu0 %838
      %v856 = vrot.slane %v544, 2
      %v857 = vrot.slane %v545, 2
      %v858 = vsel %vm663, %v856, %v857
      %v859 = vrot.slane %v546, 2
      %v860 = vsel %vm663, %v857, %v859
      %861 = vrot.lane.b32.xlu0 %v671, 40
      %v862 = vpop.permute.xlu0 %861
      %863 = vrot.lane.b32.xlu0 %v673, 40
      %v864 = vpop.permute.xlu0 %863
      %865 = vrot.lane.b32.xlu0 %v676, 40
      %v866 = vpop.permute.xlu0 %865
      %867 = vrot.lane.b32.xlu0 %v678, 40
      %v868 = vpop.permute.xlu0 %867
      %869 = vrot.lane.b32.xlu0 %v681, 40
      %v870 = vpop.permute.xlu0 %869
      %871 = vrot.lane.b32.xlu0 %v683, 40
      %v872 = vpop.permute.xlu0 %871
      %873 = vrot.lane.b32.xlu0 %v686, 40
      %v874 = vpop.permute.xlu0 %873
      %875 = vrot.lane.b32.xlu0 %v688, 40
      %v876 = vpop.permute.xlu0 %875
      %877 = vrot.lane.b32.xlu0 %v691, 40
      %v878 = vpop.permute.xlu0 %877
      %879 = vrot.lane.b32.xlu0 %v693, 40
      %v880 = vpop.permute.xlu0 %879
      %881 = vrot.lane.b32.xlu0 %v696, 40
      %v882 = vpop.permute.xlu0 %881
      %883 = vrot.lane.b32.xlu0 %v698, 40
      %v884 = vpop.permute.xlu0 %883
      %885 = vrot.lane.b32.xlu0 %v701, 40
      %v886 = vpop.permute.xlu0 %885
      %887 = vrot.lane.b32.xlu0 %v703, 40
      %v888 = vpop.permute.xlu0 %887
      %889 = vrot.lane.b32.xlu0 %v858, 40
      %v890 = vpop.permute.xlu0 %889
      %891 = vrot.lane.b32.xlu0 %v860, 40
      %v892 = vpop.permute.xlu0 %891
      %911 = vrot.lane.b32.xlu0 %v526, 48
      %v912 = vpop.permute.xlu0 %911
      %913 = vrot.lane.b32.xlu0 %v527, 48
      %v914 = vpop.permute.xlu0 %913
      %915 = vrot.lane.b32.xlu0 %v529, 48
      %v916 = vpop.permute.xlu0 %915
      %917 = vrot.lane.b32.xlu0 %v530, 48
      %v918 = vpop.permute.xlu0 %917
      %919 = vrot.lane.b32.xlu0 %v532, 48
      %v920 = vpop.permute.xlu0 %919
      %921 = vrot.lane.b32.xlu0 %v533, 48
      %v922 = vpop.permute.xlu0 %921
      %923 = vrot.lane.b32.xlu0 %v535, 48
      %v924 = vpop.permute.xlu0 %923
      %925 = vrot.lane.b32.xlu0 %v536, 48
      %v926 = vpop.permute.xlu0 %925
      %927 = vrot.lane.b32.xlu0 %v538, 48
      %v928 = vpop.permute.xlu0 %927
      %929 = vrot.lane.b32.xlu0 %v539, 48
      %v930 = vpop.permute.xlu0 %929
      %931 = vrot.lane.b32.xlu0 %v541, 48
      %v932 = vpop.permute.xlu0 %931
      %933 = vrot.lane.b32.xlu0 %v542, 48
      %v934 = vpop.permute.xlu0 %933
      %935 = vrot.lane.b32.xlu0 %v544, 48
      %v936 = vpop.permute.xlu0 %935
      %937 = vrot.lane.b32.xlu0 %v545, 48
      %v938 = vpop.permute.xlu0 %937
      %939 = vrot.lane.b32.xlu0 %v547, 48
      %v940 = vpop.permute.xlu0 %939
      %941 = vrot.lane.b32.xlu0 %v548, 48
      %v942 = vpop.permute.xlu0 %941
      %v960 = vrot.slane %v547, 1
      %v961 = vrot.slane %v548, 1
      %v962 = vsel %vm574, %v960, %v961
      %v963 = vrot.slane %v549, 1
      %v964 = vsel %vm574, %v961, %v963
      %965 = vrot.lane.b32.xlu0 %v587, 56
      %v966 = vpop.permute.xlu0 %965
      %967 = vrot.lane.b32.xlu0 %v589, 56
      %v968 = vpop.permute.xlu0 %967
      %969 = vrot.lane.b32.xlu0 %v592, 56
      %v970 = vpop.permute.xlu0 %969
      %971 = vrot.lane.b32.xlu0 %v594, 56
      %v972 = vpop.permute.xlu0 %971
      %973 = vrot.lane.b32.xlu0 %v597, 56
      %v974 = vpop.permute.xlu0 %973
      %975 = vrot.lane.b32.xlu0 %v599, 56
      %v976 = vpop.permute.xlu0 %975
      %977 = vrot.lane.b32.xlu0 %v602, 56
      %v978 = vpop.permute.xlu0 %977
      %979 = vrot.lane.b32.xlu0 %v604, 56
      %v980 = vpop.permute.xlu0 %979
      %981 = vrot.lane.b32.xlu0 %v607, 56
      %v982 = vpop.permute.xlu0 %981
      %983 = vrot.lane.b32.xlu0 %v609, 56
      %v984 = vpop.permute.xlu0 %983
      %985 = vrot.lane.b32.xlu0 %v612, 56
      %v986 = vpop.permute.xlu0 %985
      %987 = vrot.lane.b32.xlu0 %v614, 56
      %v988 = vpop.permute.xlu0 %987
      %989 = vrot.lane.b32.xlu0 %v805, 56
      %v990 = vpop.permute.xlu0 %989
      %991 = vrot.lane.b32.xlu0 %v807, 56
      %v992 = vpop.permute.xlu0 %991
      %993 = vrot.lane.b32.xlu0 %v962, 56
      %v994 = vpop.permute.xlu0 %993
      %995 = vrot.lane.b32.xlu0 %v964, 56
      %v996 = vpop.permute.xlu0 %995
      %v1013 = vrot.slane %v547, 2
      %v1014 = vrot.slane %v548, 2
      %v1015 = vsel %vm663, %v1013, %v1014
      %v1016 = vrot.slane %v549, 2
      %v1017 = vsel %vm663, %v1014, %v1016
      %1018 = vrot.lane.b32.xlu0 %v676, 64
      %v1019 = vpop.permute.xlu0 %1018
      %1020 = vrot.lane.b32.xlu0 %v678, 64
      %v1021 = vpop.permute.xlu0 %1020
      %1022 = vrot.lane.b32.xlu0 %v681, 64
      %v1023 = vpop.permute.xlu0 %1022
      %1024 = vrot.lane.b32.xlu0 %v683, 64
      %v1025 = vpop.permute.xlu0 %1024
      %1026 = vrot.lane.b32.xlu0 %v686, 64
      %v1027 = vpop.permute.xlu0 %1026
      %1028 = vrot.lane.b32.xlu0 %v688, 64
      %v1029 = vpop.permute.xlu0 %1028
      %1030 = vrot.lane.b32.xlu0 %v691, 64
      %v1031 = vpop.permute.xlu0 %1030
      %1032 = vrot.lane.b32.xlu0 %v693, 64
      %v1033 = vpop.permute.xlu0 %1032
      %1034 = vrot.lane.b32.xlu0 %v696, 64
      %v1035 = vpop.permute.xlu0 %1034
      %1036 = vrot.lane.b32.xlu0 %v698, 64
      %v1037 = vpop.permute.xlu0 %1036
      %1038 = vrot.lane.b32.xlu0 %v701, 64
      %v1039 = vpop.permute.xlu0 %1038
      %1040 = vrot.lane.b32.xlu0 %v703, 64
      %v1041 = vpop.permute.xlu0 %1040
      %1042 = vrot.lane.b32.xlu0 %v858, 64
      %v1043 = vpop.permute.xlu0 %1042
      %1044 = vrot.lane.b32.xlu0 %v860, 64
      %v1045 = vpop.permute.xlu0 %1044
      %1046 = vrot.lane.b32.xlu0 %v1015, 64
      %v1047 = vpop.permute.xlu0 %1046
      %1048 = vrot.lane.b32.xlu0 %v1017, 64
      %v1049 = vpop.permute.xlu0 %1048
      %vm1066 = vcmask 64512
      %v1067 = vsel %vm1066, %v520, %v616
      %v1068 = vsel %vm1066, %v521, %v618
      %v1069 = vsel %vm1066, %v523, %v620
      %v1070 = vsel %vm1066, %v524, %v622
      %v1071 = vsel %vm1066, %v526, %v624
      %v1072 = vsel %vm1066, %v527, %v626
      %v1073 = vsel %vm1066, %v529, %v628
      %v1074 = vsel %vm1066, %v530, %v630
      %v1075 = vsel %vm1066, %v532, %v632
      %v1076 = vsel %vm1066, %v533, %v634
      %v1077 = vsel %vm1066, %v535, %v636
      %v1078 = vsel %vm1066, %v536, %v638
      %v1079 = vsel %vm1066, %v538, %v640
      %v1080 = vsel %vm1066, %v539, %v642
      %v1081 = vsel %vm1066, %v541, %v644
      %v1082 = vsel %vm1066, %v542, %v646
      %vm1083 = vcmask 130048
      %v1084 = vsel %vm1083, %v1067, %v705
      %v1085 = vsel %vm1083, %v1068, %v707
      %v1086 = vsel %vm1083, %v1069, %v709
      %v1087 = vsel %vm1083, %v1070, %v711
      %v1088 = vsel %vm1083, %v1071, %v713
      %v1089 = vsel %vm1083, %v1072, %v715
      %v1090 = vsel %vm1083, %v1073, %v717
      %v1091 = vsel %vm1083, %v1074, %v719
      %v1092 = vsel %vm1083, %v1075, %v721
      %v1093 = vsel %vm1083, %v1076, %v723
      %v1094 = vsel %vm1083, %v1077, %v725
      %v1095 = vsel %vm1083, %v1078, %v727
      %v1096 = vsel %vm1083, %v1079, %v729
      %v1097 = vsel %vm1083, %v1080, %v731
      %v1098 = vsel %vm1083, %v1081, %v733
      %v1099 = vsel %vm1083, %v1082, %v735
      %vm1100 = vcmask 195584
      %v1101 = vsel %vm1100, %v1084, %v755
      %v1102 = vsel %vm1100, %v1085, %v757
      %v1103 = vsel %vm1100, %v1086, %v759
      %v1104 = vsel %vm1100, %v1087, %v761
      %v1105 = vsel %vm1100, %v1088, %v763
      %v1106 = vsel %vm1100, %v1089, %v765
      %v1107 = vsel %vm1100, %v1090, %v767
      %v1108 = vsel %vm1100, %v1091, %v769
      %v1109 = vsel %vm1100, %v1092, %v771
      %v1110 = vsel %vm1100, %v1093, %v773
      %v1111 = vsel %vm1100, %v1094, %v775
      %v1112 = vsel %vm1100, %v1095, %v777
      %v1113 = vsel %vm1100, %v1096, %v779
      %v1114 = vsel %vm1100, %v1097, %v781
      %v1115 = vsel %vm1100, %v1098, %v783
      %v1116 = vsel %vm1100, %v1099, %v785
      %vm1117 = vcmask 261120
      %v1118 = vsel %vm1117, %v1101, %v809
      %v1119 = vsel %vm1117, %v1102, %v811
      %v1120 = vsel %vm1117, %v1103, %v813
      %v1121 = vsel %vm1117, %v1104, %v815
      %v1122 = vsel %vm1117, %v1105, %v817
      %v1123 = vsel %vm1117, %v1106, %v819
      %v1124 = vsel %vm1117, %v1107, %v821
      %v1125 = vsel %vm1117, %v1108, %v823
      %v1126 = vsel %vm1117, %v1109, %v825
      %v1127 = vsel %vm1117, %v1110, %v827
      %v1128 = vsel %vm1117, %v1111, %v829
      %v1129 = vsel %vm1117, %v1112, %v831
      %v1130 = vsel %vm1117, %v1113, %v833
      %v1131 = vsel %vm1117, %v1114, %v835
      %v1132 = vsel %vm1117, %v1115, %v837
      %v1133 = vsel %vm1117, %v1116, %v839
      %vm1134 = vcmask 326656
      %v1135 = vsel %vm1134, %v1118, %v862
      %v1136 = vsel %vm1134, %v1119, %v864
      %v1137 = vsel %vm1134, %v1120, %v866
      %v1138 = vsel %vm1134, %v1121, %v868
      %v1139 = vsel %vm1134, %v1122, %v870
      %v1140 = vsel %vm1134, %v1123, %v872
      %v1141 = vsel %vm1134, %v1124, %v874
      %v1142 = vsel %vm1134, %v1125, %v876
      %v1143 = vsel %vm1134, %v1126, %v878
      %v1144 = vsel %vm1134, %v1127, %v880
      %v1145 = vsel %vm1134, %v1128, %v882
      %v1146 = vsel %vm1134, %v1129, %v884
      %v1147 = vsel %vm1134, %v1130, %v886
      %v1148 = vsel %vm1134, %v1131, %v888
      %v1149 = vsel %vm1134, %v1132, %v890
      %v1150 = vsel %vm1134, %v1133, %v892
      %vm1151 = vcmask 392192
      %v1152 = vsel %vm1151, %v1135, %v912
      %v1153 = vsel %vm1151, %v1136, %v914
      %v1154 = vsel %vm1151, %v1137, %v916
      %v1155 = vsel %vm1151, %v1138, %v918
      %v1156 = vsel %vm1151, %v1139, %v920
      %v1157 = vsel %vm1151, %v1140, %v922
      %v1158 = vsel %vm1151, %v1141, %v924
      %v1159 = vsel %vm1151, %v1142, %v926
      %v1160 = vsel %vm1151, %v1143, %v928
      %v1161 = vsel %vm1151, %v1144, %v930
      %v1162 = vsel %vm1151, %v1145, %v932
      %v1163 = vsel %vm1151, %v1146, %v934
      %v1164 = vsel %vm1151, %v1147, %v936
      %v1165 = vsel %vm1151, %v1148, %v938
      %v1166 = vsel %vm1151, %v1149, %v940
      %v1167 = vsel %vm1151, %v1150, %v942
      %vm1168 = vcmask 457728
      %v1169 = vsel %vm1168, %v1152, %v966
      %v1170 = vsel %vm1168, %v1153, %v968
      %v1171 = vsel %vm1168, %v1154, %v970
      %v1172 = vsel %vm1168, %v1155, %v972
      %v1173 = vsel %vm1168, %v1156, %v974
      %v1174 = vsel %vm1168, %v1157, %v976
      %v1175 = vsel %vm1168, %v1158, %v978
      %v1176 = vsel %vm1168, %v1159, %v980
      %v1177 = vsel %vm1168, %v1160, %v982
      %v1178 = vsel %vm1168, %v1161, %v984
      %v1179 = vsel %vm1168, %v1162, %v986
      %v1180 = vsel %vm1168, %v1163, %v988
      %v1181 = vsel %vm1168, %v1164, %v990
      %v1182 = vsel %vm1168, %v1165, %v992
      %v1183 = vsel %vm1168, %v1166, %v994
      %v1184 = vsel %vm1168, %v1167, %v996
      %vm1185 = vcmask 523264
      %v1186 = vsel %vm1185, %v1169, %v1019
      %v1187 = vsel %vm1185, %v1170, %v1021
      %v1188 = vsel %vm1185, %v1171, %v1023
      %v1189 = vsel %vm1185, %v1172, %v1025
      %v1190 = vsel %vm1185, %v1173, %v1027
      %v1191 = vsel %vm1185, %v1174, %v1029
      %v1192 = vsel %vm1185, %v1175, %v1031
      %v1193 = vsel %vm1185, %v1176, %v1033
      %v1194 = vsel %vm1185, %v1177, %v1035
      %v1195 = vsel %vm1185, %v1178, %v1037
      %v1196 = vsel %vm1185, %v1179, %v1039
      %v1197 = vsel %vm1185, %v1180, %v1041
      %v1198 = vsel %vm1185, %v1181, %v1043
      %v1199 = vsel %vm1185, %v1182, %v1045
      %v1200 = vsel %vm1185, %v1183, %v1047
      %v1201 = vsel %vm1185, %v1184, %v1049
      %v1202 = vpack.c.bf16 %v1187, %v1186
      %v1203 = vpack.c.bf16 %v1189, %v1188
      %v1204 = vpack.c.bf16 %v1191, %v1190
      %v1205 = vpack.c.bf16 %v1193, %v1192
      %v1206 = vpack.c.bf16 %v1195, %v1194
      %v1207 = vpack.c.bf16 %v1197, %v1196
      %v1208 = vpack.c.bf16 %v1199, %v1198
      %v1209 = vpack.c.bf16 %v1201, %v1200
      %v1210 = vld [vmem:[%s3] sm:$0xf]
      %v1211 = vld [vmem:[%s3 + $0x4] sm:$0xf]
      %v1212 = vld [vmem:[%s3 + $0x8] sm:$0xf]
      %v1213 = vld [vmem:[%s3 + $0xc] sm:$0xf]
      %v1214 = vld [vmem:[%s3 + $0x10] sm:$0xf]
      %v1215 = vld [vmem:[%s3 + $0x14] sm:$0xf]
      %v1216 = vld [vmem:[%s3 + $0x18] sm:$0xf]
      %v1217 = vld [vmem:[%s3 + $0x1c] sm:$0xf]
      %v1218 = vld [vmem:[%s3 + $0x20] sm:$0xf]
      %v1228 = vunpack.c.l.b16 %v1210
      %v1229 = vunpack.c.l.b16 %v1211
      %v1230 = vunpack.c.l.b16 %v1212
      %v1231 = vunpack.c.l.b16 %v1213
      %v1232 = vunpack.c.l.b16 %v1214
      %v1233 = vunpack.c.l.b16 %v1215
      %v1234 = vunpack.c.l.b16 %v1216
      %v1235 = vunpack.c.l.b16 %v1217
      %v1236 = vunpack.c.l.b16 %v1218
      %v1237 = vpack.c.b16 %v1229, %v1228
      %v1238 = vpack.c.b16 %v1231, %v1230
      %v1239 = vpack.c.b16 %v1233, %v1232
      %v1240 = vpack.c.b16 %v1235, %v1234
      %v1241 = vpack.c.b16 %v1236, %v1236
      %vm1246 = vcmask 588800
      %v1248 = vsel %vm1246, %v1202, 0
      %v1251 = vsel %vm1246, %v1203, 0
      %v1254 = vsel %vm1246, %v1204, 0
      %v1257 = vsel %vm1246, %v1205, 0
      %v1260 = vsel %vm1246, %v1206, 0
      %v1263 = vsel %vm1246, %v1207, 0
      %v1266 = vsel %vm1246, %v1208, 0
      %v1269 = vsel %vm1246, %v1209, 0
      %vm1271 = vcmask 1043456
      %v1273 = vsel %vm1271, %v1241, 0
      %1275 = vmatprep.subr.bf16.mxu0 0
      %1276 = vmatpush1.bf16.msra.mxu0 0
      %1277 = vmatprep.subr.bf16.mxu0 0
      %1278 = vmatpush1.bf16.msra.mxu0 0
      %1279 = vmatprep.subr.bf16.mxu0 0
      %1280 = vmatpush1.bf16.msra.mxu0 0
      %1281 = vmatprep.subr.bf16.mxu0 0
      %1282 = vmatpush1.bf16.msra.mxu0 %v1273
      %1283 = vmatprep.subr.bf16.mxu0 0
      %1284 = vmatpush1.bf16.msra.mxu0 %v1240
      %1285 = vmatprep.subr.bf16.mxu0 0
      %1286 = vmatpush1.bf16.msra.mxu0 %v1239
      %1287 = vmatprep.subr.bf16.mxu0 0
      %1288 = vmatpush1.bf16.msra.mxu0 %v1238
      %1289 = vmatprep.subr.bf16.mxu0 0
      %1290 = vmatpush1.bf16.msra.mxu0 %v1237
      %1291 = vmatprep.subr.bf16.mxu0 0
      %1292 = vmatpush2.bf16.msra.mxu0 0
      %1293 = vmatprep.subr.bf16.mxu0 0
      %1294 = vmatpush2.bf16.msra.mxu0 0
      %1295 = vmatprep.subr.bf16.mxu0 0
      %1296 = vmatpush2.bf16.msra.mxu0 0
      %1297 = vmatprep.subr.bf16.mxu0 0
      %1298 = vmatpush2.bf16.msra.mxu0 0
      %1299 = vmatprep.subr.bf16.mxu0 0
      %1300 = vmatpush2.bf16.msra.mxu0 0
      %1301 = vmatprep.subr.bf16.mxu0 0
      %1302 = vmatpush2.bf16.msra.mxu0 0
      %1303 = vmatprep.subr.bf16.mxu0 0
      %1304 = vmatpush2.bf16.msra.mxu0 0
      %1305 = vmatprep.subr.bf16.mxu0 0
      %1306 = vmatpush2.bf16.msra.mxu0 0
      %1307 = vmatprep.mubr.bf16.mxu0 0
      %1308 = vmatmul.mubr.bf16.gmra.mxu0 %v1248
      %v1309 = vpop.f32.mrf.mxu0
      %v1310 = vadd.f32 0.0, %v1309
      %v1311 = vpop.f32.mrf.mxu0
      %v1312 = vpop.f32.mrf.mxu0
      %v1313 = vadd.f32 0.0, %v1312
      %v1314 = vpop.f32.mrf.mxu0
      %1315 = vmatprep.mubr.bf16.mxu0 0
      %1316 = vmatmul.mubr.bf16.gmra.mxu0 %v1251
      %v1317 = vpop.f32.mrf.mxu0
      %v1318 = vadd.f32 0.0, %v1317
      %v1319 = vpop.f32.mrf.mxu0
      %v1320 = vpop.f32.mrf.mxu0
      %v1321 = vadd.f32 0.0, %v1320
      %v1322 = vpop.f32.mrf.mxu0
      %1323 = vmatprep.mubr.bf16.mxu0 0
      %1324 = vmatmul.mubr.bf16.gmra.mxu0 %v1254
      %v1325 = vpop.f32.mrf.mxu0
      %v1326 = vadd.f32 0.0, %v1325
      %v1327 = vpop.f32.mrf.mxu0
      %v1328 = vpop.f32.mrf.mxu0
      %v1329 = vadd.f32 0.0, %v1328
      %v1330 = vpop.f32.mrf.mxu0
      %1331 = vmatprep.mubr.bf16.mxu0 0
      %1332 = vmatmul.mubr.bf16.gmra.mxu0 %v1257
      %v1333 = vpop.f32.mrf.mxu0
      %v1334 = vadd.f32 0.0, %v1333
      %v1335 = vpop.f32.mrf.mxu0
      %v1336 = vpop.f32.mrf.mxu0
      %v1337 = vadd.f32 0.0, %v1336
      %v1338 = vpop.f32.mrf.mxu0
      %1339 = vmatprep.mubr.bf16.mxu0 0
      %1340 = vmatmul.mubr.bf16.gmra.mxu0 %v1260
      %v1341 = vpop.f32.mrf.mxu0
      %v1342 = vadd.f32 0.0, %v1341
      %v1343 = vpop.f32.mrf.mxu0
      %v1344 = vpop.f32.mrf.mxu0
      %v1345 = vadd.f32 0.0, %v1344
      %v1346 = vpop.f32.mrf.mxu0
      %1347 = vmatprep.mubr.bf16.mxu0 0
      %1348 = vmatmul.mubr.bf16.gmra.mxu0 %v1263
      %v1349 = vpop.f32.mrf.mxu0
      %v1350 = vadd.f32 0.0, %v1349
      %v1351 = vpop.f32.mrf.mxu0
      %v1352 = vpop.f32.mrf.mxu0
      %v1353 = vadd.f32 0.0, %v1352
      %v1354 = vpop.f32.mrf.mxu0
      %1355 = vmatprep.mubr.bf16.mxu0 0
      %1356 = vmatmul.mubr.bf16.gmra.mxu0 %v1266
      %v1357 = vpop.f32.mrf.mxu0
      %v1358 = vadd.f32 0.0, %v1357
      %v1359 = vpop.f32.mrf.mxu0
      %v1360 = vpop.f32.mrf.mxu0
      %v1361 = vadd.f32 0.0, %v1360
      %v1362 = vpop.f32.mrf.mxu0
      %1363 = vmatprep.mubr.bf16.mxu0 0
      %1364 = vmatmul.mubr.bf16.gmra.mxu0 %v1269
      %v1365 = vpop.f32.mrf.mxu0
      %v1366 = vadd.f32 0.0, %v1365
      %v1367 = vpop.f32.mrf.mxu0
      %v1368 = vpop.f32.mrf.mxu0
      %v1369 = vadd.f32 0.0, %v1368
      %v1370 = vpop.f32.mrf.mxu0
      %1371 = vdwg.mxu0
      %1372 = vxpose.xlu0.b32.start [1/16] %v1310, 128
      %1373 = vxpose.xlu0.b32.cont [2/16] %v1313, 128
      %1374 = vxpose.xlu0.b32.cont [3/16] %v1318, 128
      %1375 = vxpose.xlu0.b32.cont [4/16] %v1321, 128
      %1376 = vxpose.xlu0.b32.cont [5/16] %v1326, 128
      %1377 = vxpose.xlu0.b32.cont [6/16] %v1329, 128
      %1378 = vxpose.xlu0.b32.cont [7/16] %v1334, 128
      %1379 = vxpose.xlu0.b32.cont [8/16] %v1337, 128
      %1380 = vxpose.xlu0.b32.cont [9/16] %v1342, 128
      %1381 = vxpose.xlu0.b32.cont [10/16] %v1345, 128
      %1382 = vxpose.xlu0.b32.cont [11/16] %v1350, 128
      %1383 = vxpose.xlu0.b32.cont [12/16] %v1353, 128
      %1384 = vxpose.xlu0.b32.cont [13/16] %v1358, 128
      %1385 = vxpose.xlu0.b32.cont [14/16] %v1361, 128
      %1386 = vxpose.xlu0.b32.cont [15/16] %v1366, 128
      %1387 = vxpose.xlu0.b32.end [16/16] %v1369, 128
      %v1388 = vpop.trf.xlu0
      %v1389 = vpop.trf.xlu0
      %v1390 = vpop.trf.xlu0
      %v1391 = vpop.trf.xlu0
      %v1392 = vpop.trf.xlu0
      %v1393 = vpop.trf.xlu0
      %v1394 = vpop.trf.xlu0
      %v1395 = vpop.trf.xlu0
      %v1396 = vpop.trf.xlu0
      %v1397 = vpop.trf.xlu0
      %v1398 = vpop.trf.xlu0
      %v1399 = vpop.trf.xlu0
      %v1400 = vpop.trf.xlu0
      %v1401 = vpop.trf.xlu0
      %v1402 = vpop.trf.xlu0
      %v1403 = vpop.trf.xlu0
      %v1404 = vpack.c.bf16 %v1388, %v1388
      %1405 = vst [vmem:[%s251] sm:$0xf] %v1404
      %v1406 = vsel %vm1066, %v1310, 0.0
      %v1407 = vsel %vm1066, %v1313, 0.0
      %v1408 = vadd.f32 %v1406, %v1407
      %v1409 = vsel %vm1066, %v1318, 0.0
      %v1410 = vadd.f32 %v1408, %v1409
      %v1411 = vsel %vm1066, %v1321, 0.0
      %v1412 = vadd.f32 %v1410, %v1411
      %v1413 = vsel %vm1066, %v1326, 0.0
      %v1414 = vadd.f32 %v1412, %v1413
      %v1415 = vsel %vm1066, %v1329, 0.0
      %v1416 = vadd.f32 %v1414, %v1415
      %v1417 = vsel %vm1066, %v1334, 0.0
      %v1418 = vadd.f32 %v1416, %v1417
      %v1419 = vsel %vm1066, %v1337, 0.0
      %v1420 = vadd.f32 %v1418, %v1419
      %v1421 = vsel %vm1066, %v1342, 0.0
      %v1422 = vadd.f32 %v1420, %v1421
      %v1423 = vsel %vm1066, %v1345, 0.0
      %v1424 = vadd.f32 %v1422, %v1423
      %v1425 = vsel %vm1066, %v1350, 0.0
      %v1426 = vadd.f32 %v1424, %v1425
      %v1427 = vsel %vm1066, %v1353, 0.0
      %v1428 = vadd.f32 %v1426, %v1427
      %v1429 = vsel %vm1066, %v1358, 0.0
      %v1430 = vadd.f32 %v1428, %v1429
      %v1431 = vsel %vm1066, %v1361, 0.0
      %v1432 = vadd.f32 %v1430, %v1431
      %v1433 = vsel %vm1066, %v1366, 0.0
      %v1434 = vadd.f32 %v1432, %v1433
      %v1435 = vsel %vm1066, %v1369, 0.0
      %v1436 = vadd.f32 %v1434, %v1435
      %v1437 = vrot.slane %v1436, 4
      %v1438 = vadd.f32 %v1436, %v1437
      %v1439 = vrot.slane %v1438, 2
      %v1440 = vadd.f32 %v1438, %v1439
      %v1441 = vrot.slane %v1440, 1
      %v1442 = vadd.f32 %v1440, %v1441
      %v1443 = vmul.f32 %v1310, %v1310
      %v1444 = vmul.f32 %v1313, %v1313
      %v1445 = vmul.f32 %v1318, %v1318
      %v1446 = vmul.f32 %v1321, %v1321
      %v1447 = vmul.f32 %v1326, %v1326
      %v1448 = vmul.f32 %v1329, %v1329
      %v1449 = vmul.f32 %v1334, %v1334
      %v1450 = vmul.f32 %v1337, %v1337
      %v1451 = vmul.f32 %v1342, %v1342
      %v1452 = vmul.f32 %v1345, %v1345
      %v1453 = vmul.f32 %v1350, %v1350
      %v1454 = vmul.f32 %v1353, %v1353
      %v1455 = vmul.f32 %v1358, %v1358
      %v1456 = vmul.f32 %v1361, %v1361
      %v1457 = vmul.f32 %v1366, %v1366
      %v1458 = vmul.f32 %v1369, %v1369
      %v1459 = vsel %vm1066, %v1443, 0.0
      %v1460 = vsel %vm1066, %v1444, 0.0
      %v1461 = vadd.f32 %v1459, %v1460
      %v1462 = vsel %vm1066, %v1445, 0.0
      %v1463 = vadd.f32 %v1461, %v1462
      %v1464 = vsel %vm1066, %v1446, 0.0
      %v1465 = vadd.f32 %v1463, %v1464
      %v1466 = vsel %vm1066, %v1447, 0.0
      %v1467 = vadd.f32 %v1465, %v1466
      %v1468 = vsel %vm1066, %v1448, 0.0
      %v1469 = vadd.f32 %v1467, %v1468
      %v1470 = vsel %vm1066, %v1449, 0.0
      %v1471 = vadd.f32 %v1469, %v1470
      %v1472 = vsel %vm1066, %v1450, 0.0
      %v1473 = vadd.f32 %v1471, %v1472
      %v1474 = vsel %vm1066, %v1451, 0.0
      %v1475 = vadd.f32 %v1473, %v1474
      %v1476 = vsel %vm1066, %v1452, 0.0
      %v1477 = vadd.f32 %v1475, %v1476
      %v1478 = vsel %vm1066, %v1453, 0.0
      %v1479 = vadd.f32 %v1477, %v1478
      %v1480 = vsel %vm1066, %v1454, 0.0
      %v1481 = vadd.f32 %v1479, %v1480
      %v1482 = vsel %vm1066, %v1455, 0.0
      %v1483 = vadd.f32 %v1481, %v1482
      %v1484 = vsel %vm1066, %v1456, 0.0
      %v1485 = vadd.f32 %v1483, %v1484
      %v1486 = vsel %vm1066, %v1457, 0.0
      %v1487 = vadd.f32 %v1485, %v1486
      %v1488 = vsel %vm1066, %v1458, 0.0
      %v1489 = vadd.f32 %v1487, %v1488
      %v1490 = vrot.slane %v1489, 4
      %v1491 = vadd.f32 %v1489, %v1490
      %v1492 = vrot.slane %v1491, 2
      %v1493 = vadd.f32 %v1491, %v1492
      %v1494 = vrot.slane %v1493, 1
      %v1495 = vadd.f32 %v1493, %v1494
      %vm1496 = vcmask 1040384
      %v1497 = vsel %vm1496, %v1442, %v1495
      // Predicated region
      $region41: #{resnet_block_forward.4} parent=35 // pred_check
        %p1498 = pneg %p257
      $region42: #{resnet_block_forward.4} parent=35 // pred_check_branch
        %1500 = sbr.rel (%p1498) target = $region44
      $region43: #{resnet_block_forward.4} parent=35 // pred_region
        %vm1501 = vcmask 58368
        %1502 = vst.msk [vmem:[%s255] sm:$0x3] %vm1501, %v1497
      $region44: #{resnet_block_forward.4} parent=35 // pred_fallthru
        _
      %p1503 = scmp.ne.s32.totalorder %s22, 0
      // Predicated region
      $region45: #{resnet_block_forward.4} parent=35 // pred_check
        %p1504 = pneg %p1503
      $region46: #{resnet_block_forward.4} parent=35 // pred_check_branch
        %1506 = sbr.rel (%p1504) target = $region48
      $region47: #{resnet_block_forward.4} parent=35 // pred_region
        %v1507 = vld [vmem:[%s255] sm:$0x3]
        %v1508 = vadd.f32 %v1507, %v1497
        %vm1509 = vcmask 58368
        %1510 = vst.msk [vmem:[%s255] sm:$0x3] %vm1509, %v1508
      $region48: #{resnet_block_forward.4} parent=35 // pred_fallthru
        _
      %p1511 = scmp.lt.s32.totalorder %s21, 1
      %s1512 = scalar_select %p1511, %s21, 1
      %p1513 = scmp.lt.s32.totalorder %s22, 1
      %s1514 = scalar_select %p1513, %s22, 1
      %s1515 = smul.addr %s1512, 2
      %s1516 = sadd.s32 %s1514, %s1515
      %s1517 = smul.addr %s1516, 4
      %s1518 = scalar_lea.vmem %s4, %s1517
      %p1519 = scmp.lt.s32.totalorder %s21, 1
      %s1520 = scalar_select %p1519, %s21, 1
      %s1521 = smul.addr %s1520, 2
      %s1522 = scalar_lea.vmem %s5, %s1521
      // Predicated region
      $region49: #{resnet_block_forward.4} parent=35 // pred_check
        %p1523 = pneg %p138
      $region50: #{resnet_block_forward.4} parent=35 // pred_check_branch
        %1525 = sbr.rel (%p1523) target = $region52
      $region51: #{resnet_block_forward.4} parent=35 // pred_region
        _
      $region52: #{resnet_block_forward.4} parent=35 // pred_fallthru
        _
      // Predicated region
      $region53: #{resnet_block_forward.4} parent=35 // pred_check
        %p1526 = pneg %p164
      $region54: #{resnet_block_forward.4} parent=35 // pred_check_branch
        %1528 = sbr.rel (%p1526) target = $region56
      $region55: #{resnet_block_forward.4} parent=35 // pred_region
        _
      $region56: #{resnet_block_forward.4} parent=35 // pred_fallthru
        _
    $region36: #{resnet_block_forward.4} parent=5 // pred_fallthru
      _
    %p1529 = scmp.le.s32.totalorder 2, %s12
    // Predicated region
    $region57: #{resnet_block_forward.4} parent=5 // pred_check
      %p1530 = pneg %p1529
    $region58: #{resnet_block_forward.4} parent=5 // pred_check_branch
      %1532 = sbr.rel (%p1530) target = $region60
    $region59: #{resnet_block_forward.4} parent=5 // pred_region
      %s1533 = ssub.s32 %s12, 2
      // Predicated region
      $region61: #{resnet_block_forward.4} parent=59 // pred_check
        %p1534 = pneg %p144
      $region62: #{resnet_block_forward.4} parent=59 // pred_check_branch
        %1536 = sbr.rel (%p1534) target = $region64
      $region63: #{resnet_block_forward.4} parent=59 // pred_region
        %p1537 = scmp.lt.s32.totalorder %s23, 1
        %s1538 = scalar_select %p1537, %s23, 1
        %p1539 = scmp.lt.s32.totalorder %s24, 1
        %s1540 = scalar_select %p1539, %s24, 1
        %s1541 = smul.addr %s1538, 2
        %s1542 = sadd.s32 %s1540, %s1541
        %s1543 = smul.addr %s1542, 4
        %s1544 = scalar_lea.vmem %s4, %s1543
      $region64: #{resnet_block_forward.4} parent=59 // pred_fallthru
        _
      // Predicated region
      $region65: #{resnet_block_forward.4} parent=59 // pred_check
        %p1545 = pneg %p170
      $region66: #{resnet_block_forward.4} parent=59 // pred_check_branch
        %1547 = sbr.rel (%p1545) target = $region68
      $region67: #{resnet_block_forward.4} parent=59 // pred_region
        %p1548 = scmp.lt.s32.totalorder %s23, 1
        %s1549 = scalar_select %p1548, %s23, 1
        %s1550 = smul.addr %s1549, 2
        %s1551 = scalar_lea.vmem %s5, %s1550
      $region68: #{resnet_block_forward.4} parent=59 // pred_fallthru
        _
    $region60: #{resnet_block_forward.4} parent=5 // pred_fallthru
      _
  $region6: #{resnet_block_forward.4} parent=0 // loop_footer
    %s16 = sadd.s32 1, %s12
  $region7: #{resnet_block_forward.4} parent=0 // loop_footer_branch
    %11 = sbr.rel target = $region3
  $region8: #{resnet_block_forward.4} parent=0 // loop_exit
    _

</llo_original>
